<compile_context>
chip_gen: v7x
topology: tpu7x:2x2x1
jax: 0.10.0
libtpu: 0.0.40
codegen_flags: <defaults>
</compile_context>

<pallas_src>
import functools

import numpy as np
import jax
import jax.numpy as jnp
from jax.experimental import pallas as pl
from jax.experimental.pallas import tpu as pltpu


def gmm_logprob_kernel(x_ref, w_ref, b_ref, nred_ref, logc_ref, out_ref):
    # x_ref:    (tile_n, d)  batch tile, untransposed (samples on sublanes, d on lanes)
    # w_ref:    (k*d, d)     stacked L_j^{-1}
    # b_ref:    (k, d)       rows off_j^T L_j^{-1}   (linear term of expanded quad form)
    # nred_ref: (k, k*d)     -0.5 * block-diagonal ones (sums the d coords per component)
    # logc_ref: (k, 1)       log w_j - sum(l_diag_j) - d/2*log(2pi) - 0.5*||off_j||^2
    # out_ref:  (1, tile_n)  log p(x) for this tile (lane-dense row, batch on lanes)
    nt = (((1,), (1,)), ((), ()))        # contract trailing d of both operands (MXU NT)
    x = x_ref[...]
    wx = jax.lax.dot_general(w_ref[...], x, nt,
                             preferred_element_type=jnp.float32)      # (k*d, tn)
    q = jnp.dot(nred_ref[...], wx * wx,
                preferred_element_type=jnp.float32)                   # (k, tn) = -0.5||W_j x||^2
    lin = jax.lax.dot_general(b_ref[...], x, nt,
                              preferred_element_type=jnp.float32)     # (k, tn) = off_j^T W_j x
    lp = logc_ref[...] + q + lin                                      # (k, tn) log(w_j N_j(x))
    m = jnp.max(lp, axis=0, keepdims=True)                            # (1, tn)
    out_ref[...] = m + jnp.log(jnp.sum(jnp.exp(lp - m), axis=0, keepdims=True))


def _round_up(x, m):
    return ((x + m - 1) // m) * m


@functools.partial(jax.jit, static_argnames=("tile_n",))
def sgd_gmm_forward(x, soft_weights, means, l_diag, l_lower, *, tile_n=None):
    """log p(x) under the GMM, matching SGDGMMModule.forward semantics."""
    N, d = x.shape
    k = means.shape[0]
    f32 = jnp.float32

    # ---- tile sizing (shapes are trace-time Python ints) ----------------------------
    if tile_n is None:
        # ~16K lanes/step (~0.6 MB of x) amortizes the ~0.35us fixed per-step pipeline
        # overhead while the lane-padded x blocks still fit the scoped-VMEM budget on
        # all of v5e/v6e/v7x.  Shrink so the grid keeps >= 2 steps (v7x has 2 TCs).
        tile_n = 16384
        if N <= 2 * tile_n:
            tile_n = max(128, _round_up(pl.cdiv(N, 2), 128))
    num_tiles = pl.cdiv(N, tile_n)
    # Ragged N: the last block's tail rows are undefined, but every op is per-sample
    # (per-lane) independent and out[0, :N] slices them off -- do not add cross-lane
    # reductions over the batch axis inside the kernel.

    # ---- plain-JAX parameter glue: L, L^{-1}, expanded-quadratic constants ----------
    rows, cols = jnp.tril_indices(d, -1)            # row-major, same as torch.tril_indices
    L = jnp.zeros((k, d, d), f32)
    L = L.at[:, jnp.arange(d), jnp.arange(d)].set(jnp.exp(l_diag))
    L = L.at[:, rows, cols].set(l_lower)
    eye_d = jnp.eye(d, dtype=f32)
    L_inv = jax.vmap(
        lambda Lk: jax.scipy.linalg.solve_triangular(Lk, eye_d, lower=True)
    )(L)                                                                     # (k, d, d)

    w_stack = L_inv.reshape(k * d, d).astype(f32)                            # (k*d, d)
    off = jnp.einsum("kij,kj->ki", L_inv, means)                             # (k, d) = W_j mu_j
    b_mat = jnp.einsum("ki,kid->kd", off, L_inv).astype(f32)                 # (k, d) = off_j^T W_j
    nred = (-0.5 * (jnp.arange(k)[:, None]
                    == (jnp.arange(k * d)[None, :] // d))).astype(f32)       # (k, k*d)
    log_w = jax.nn.log_softmax(soft_weights)
    logc = (log_w - jnp.sum(l_diag, axis=-1)
            - 0.5 * d * jnp.log(2.0 * jnp.pi)
            - 0.5 * jnp.sum(off * off, axis=-1)).reshape(k, 1).astype(f32)   # (k, 1)

    out = pl.pallas_call(
        gmm_logprob_kernel,
        out_shape=jax.ShapeDtypeStruct((1, num_tiles * tile_n), f32),
        grid_spec=pltpu.PrefetchScalarGridSpec(
            num_scalar_prefetch=0,
            grid=(num_tiles,),
            in_specs=[
                pl.BlockSpec((tile_n, d), lambda i: (i, 0)),
                # Grid-invariant parameter blocks (constant index maps, a few hundred
                # bytes each); default double-buffering is fine.
                pl.BlockSpec((k * d, d), lambda i: (0, 0)),
                pl.BlockSpec((k, d), lambda i: (0, 0)),
                pl.BlockSpec((k, k * d), lambda i: (0, 0)),
                pl.BlockSpec((k, 1), lambda i: (0, 0)),
            ],
            out_specs=pl.BlockSpec((1, tile_n), lambda i: (0, i)),
        ),
        compiler_params=pltpu.CompilerParams(
            dimension_semantics=("parallel",),
            # x blocks are lane-padded (d=8 -> 128) in VMEM: 2 x 8 MiB at tile_n=16K,
            # plus ~10 MiB of (k*d, tile_n) f32 temporaries.  48 MiB covers that with
            # headroom on every generation (v5e default scoped is only 16 MiB; v7x
            # physical is 64 MiB, so stay below it).
            vmem_limit_bytes=48 * 1024 * 1024,
        ),
    )(x.astype(f32), w_stack, b_mat, nred, logc)
    return out[0, :N]


if __name__ == "__main__":
    # Small shapes consistent with the module: k components, d dims, N samples.
    k, d, N = 4, 8, 4096      # auto tile_n -> 2048, grid = 2 (both v7x TCs get a tile)
    w_reg = 1e-3              # self.w = w * eye(d): regularizer only, unused in forward()

    key = jax.random.PRNGKey(0)
    k1, k2, k3, k4, k5 = jax.random.split(key, 5)
    # Parameter shapes match the module __init__; values perturbed off the all-zeros
    # init so the kernel is exercised non-trivially.
    soft_weights = 0.1 * jax.random.normal(k1, (k,), dtype=jnp.float32)
    means = jax.random.uniform(k2, (k, d), dtype=jnp.float32)             # torch.rand(k, d)
    l_diag = 0.1 * jax.random.normal(k3, (k, d), dtype=jnp.float32)
    l_lower = 0.1 * jax.random.normal(k4, (k, d * (d - 1) // 2), dtype=jnp.float32)
    x = jax.random.normal(k5, (N, d), dtype=jnp.float32)

    # ---- Pallas kernel ----
    out = jax.block_until_ready(
        sgd_gmm_forward(x, soft_weights, means, l_diag, l_lower))

    # ---- pure-JAX reference (stable whitened-residual form; also validates the
    #      expanded quadratic form used inside the kernel at the 1e-5 tolerance) ----
    rows, cols = jnp.tril_indices(d, -1)
    L = jnp.zeros((k, d, d), jnp.float32)
    L = L.at[:, jnp.arange(d), jnp.arange(d)].set(jnp.exp(l_diag))
    L = L.at[:, rows, cols].set(l_lower)
    L_inv = jax.vmap(
        lambda Lk: jax.scipy.linalg.solve_triangular(Lk, jnp.eye(d, dtype=jnp.float32),
                                                     lower=True))(L)
    diff = x[:, None, :] - means[None, :, :]                      # (N, k, d)
    y = jnp.einsum("ked,nkd->nke", L_inv, diff)                   # whitened residuals
    quad = jnp.sum(y * y, axis=-1)                                # (N, k)
    log_w = jax.nn.log_softmax(soft_weights)
    log_resp = (-0.5 * quad - jnp.sum(l_diag, axis=-1)[None, :]
                - 0.5 * d * jnp.log(2.0 * jnp.pi) + log_w[None, :])
    ref = jax.scipy.special.logsumexp(log_resp, axis=1)

    np.testing.assert_allclose(np.asarray(out), np.asarray(ref), rtol=1e-5, atol=1e-5)
    print("KERNEL_OK")
</pallas_src>

<mosaic_0001>
module attributes {stable_mosaic.version = 11 : i64} {
  func.func private @main(%arg0: i32) attributes {dimension_semantics = [#tpu.dimension_semantics<core_parallel>], iteration_bounds = array<i64: 2>, tpu.core_type = #tpu.core_type<sc_scalar_subcore>, window_params = []} {
    return
  }
}

module attributes {stable_mosaic.version = 11 : i64} {
  func.func private @main(%arg0: i32) attributes {dimension_semantics = [#tpu.dimension_semantics<core_parallel>], iteration_bounds = array<i64: 2>, tpu.core_type = #tpu.core_type<sc_scalar_subcore>, window_params = []} {
    return
  }
}

module attributes {stable_mosaic.version = 11 : i64} {
  func.func @gmm_logprob_kernel(%arg0: i32, %arg1: memref<2048x8xf32, #tpu.memory_space<vmem>>, %arg2: memref<32x8xf32, #tpu.memory_space<vmem>>, %arg3: memref<4x8xf32, #tpu.memory_space<vmem>>, %arg4: memref<4x32xf32, #tpu.memory_space<vmem>>, %arg5: memref<4x1xf32, #tpu.memory_space<vmem>>, %arg6: memref<1x2048xf32, #tpu.memory_space<vmem>>) attributes {dimension_semantics = [#tpu.dimension_semantics<parallel>], iteration_bounds = array<i64: 2>, scalar_prefetch = 0 : i64, scratch_operands = 0 : i64, tpu.core_type = #tpu.core_type<tc>, window_params = [{transform_indices = @transform_0, window_bounds = array<i64: 2048, 8>}, {pipeline_mode = #tpu.pipeline_mode<synchronous>, transform_indices = @transform_1, window_bounds = array<i64: 32, 8>}, {pipeline_mode = #tpu.pipeline_mode<synchronous>, transform_indices = @transform_2, window_bounds = array<i64: 4, 8>}, {pipeline_mode = #tpu.pipeline_mode<synchronous>, transform_indices = @transform_3, window_bounds = array<i64: 4, 32>}, {pipeline_mode = #tpu.pipeline_mode<synchronous>, transform_indices = @transform_4, window_bounds = array<i64: 4, 1>}, {transform_indices = @transform_5, window_bounds = array<i64: 1, 2048>}]} {
    %c0 = arith.constant 0 : index
    %c0_0 = arith.constant 0 : index
    %0 = vector.load %arg1[%c0, %c0_0] : memref<2048x8xf32, #tpu.memory_space<vmem>>, vector<2048x8xf32>
    %c0_1 = arith.constant 0 : index
    %c0_2 = arith.constant 0 : index
    %1 = vector.load %arg2[%c0_1, %c0_2] : memref<32x8xf32, #tpu.memory_space<vmem>>, vector<32x8xf32>
    %cst = arith.constant dense<0.000000e+00> : vector<32x2048xf32>
    %2 = tpu.matmul %1, %0, %cst {dimension_numbers = #tpu.dot_dimension_numbers<[1], [1], [0], [0], [0, 0, 1, 0], [], []>} : vector<32x8xf32>, vector<2048x8xf32>, vector<32x2048xf32> -> vector<32x2048xf32>
    %c0_3 = arith.constant 0 : index
    %c0_4 = arith.constant 0 : index
    %3 = vector.load %arg4[%c0_3, %c0_4] : memref<4x32xf32, #tpu.memory_space<vmem>>, vector<4x32xf32>
    %4 = arith.mulf %2, %2 : vector<32x2048xf32>
    %cst_5 = arith.constant dense<0.000000e+00> : vector<4x2048xf32>
    %5 = tpu.matmul %3, %4, %cst_5 {dimension_numbers = #tpu.dot_dimension_numbers<[1], [0], [0], [1], [0, 0, 1, 1], [], []>} : vector<4x32xf32>, vector<32x2048xf32>, vector<4x2048xf32> -> vector<4x2048xf32>
    %c0_6 = arith.constant 0 : index
    %c0_7 = arith.constant 0 : index
    %6 = vector.load %arg3[%c0_6, %c0_7] : memref<4x8xf32, #tpu.memory_space<vmem>>, vector<4x8xf32>
    %cst_8 = arith.constant dense<0.000000e+00> : vector<4x2048xf32>
    %7 = tpu.matmul %6, %0, %cst_8 {dimension_numbers = #tpu.dot_dimension_numbers<[1], [1], [0], [0], [0, 0, 1, 0], [], []>} : vector<4x8xf32>, vector<2048x8xf32>, vector<4x2048xf32> -> vector<4x2048xf32>
    %c0_9 = arith.constant 0 : index
    %c0_10 = arith.constant 0 : index
    %8 = vector.load %arg5[%c0_9, %c0_10] : memref<4x1xf32, #tpu.memory_space<vmem>>, vector<4x1xf32>
    %9 = vector.broadcast %8 : vector<4x1xf32> to vector<4x2048xf32>
    %10 = arith.addf %9, %5 : vector<4x2048xf32>
    %11 = arith.addf %10, %7 : vector<4x2048xf32>
    %cst_11 = arith.constant dense<0xFF800000> : vector<2048xf32>
    %12 = vector.multi_reduction <maximumf>, %11, %cst_11 [0] : vector<4x2048xf32> to vector<2048xf32>
    %13 = vector.shape_cast %12 : vector<2048xf32> to vector<1x2048xf32>
    %14 = vector.broadcast %13 : vector<1x2048xf32> to vector<4x2048xf32>
    %15 = arith.subf %11, %14 : vector<4x2048xf32>
    %16 = math.exp %15 : vector<4x2048xf32>
    %cst_12 = arith.constant dense<0.000000e+00> : vector<2048xf32>
    %17 = vector.multi_reduction <add>, %16, %cst_12 [0] : vector<4x2048xf32> to vector<2048xf32>
    %18 = vector.shape_cast %17 : vector<2048xf32> to vector<1x2048xf32>
    %19 = math.log %18 : vector<1x2048xf32>
    %20 = arith.addf %13, %19 : vector<1x2048xf32>
    %c0_13 = arith.constant 0 : index
    %c0_14 = arith.constant 0 : index
    %21 = vector.load %arg6[%c0_13, %c0_14] : memref<1x2048xf32, #tpu.memory_space<vmem>>, vector<1x2048xf32>
    tpu.vector_store %arg6[%c0_13, %c0_14], %20 {strides = array<i32>} : memref<1x2048xf32, #tpu.memory_space<vmem>>, vector<1x2048xf32>,
    return
  }
  func.func @transform_0(%arg0: i32) -> (i32, i32) {
    %c0_i32 = arith.constant 0 : i32
    %c0_i32_0 = arith.constant 0 : i32
    return %arg0, %c0_i32 : i32, i32
  }
  func.func @transform_1(%arg0: i32) -> (i32, i32) {
    %c0_i32 = arith.constant 0 : i32
    %c0_i32_0 = arith.constant 0 : i32
    %c0_i32_1 = arith.constant 0 : i32
    return %c0_i32, %c0_i32_0 : i32, i32
  }
  func.func @transform_2(%arg0: i32) -> (i32, i32) {
    %c0_i32 = arith.constant 0 : i32
    %c0_i32_0 = arith.constant 0 : i32
    %c0_i32_1 = arith.constant 0 : i32
    return %c0_i32, %c0_i32_0 : i32, i32
  }
  func.func @transform_3(%arg0: i32) -> (i32, i32) {
    %c0_i32 = arith.constant 0 : i32
    %c0_i32_0 = arith.constant 0 : i32
    %c0_i32_1 = arith.constant 0 : i32
    return %c0_i32, %c0_i32_0 : i32, i32
  }
  func.func @transform_4(%arg0: i32) -> (i32, i32) {
    %c0_i32 = arith.constant 0 : i32
    %c0_i32_0 = arith.constant 0 : i32
    %c0_i32_1 = arith.constant 0 : i32
    return %c0_i32, %c0_i32_0 : i32, i32
  }
  func.func @transform_5(%arg0: i32) -> (i32, i32) {
    %c0_i32 = arith.constant 0 : i32
    %c0_i32_0 = arith.constant 0 : i32
    return %c0_i32, %arg0 : i32, i32
  }
}

</mosaic_0001>

<llo_original>
// kernel: custom-call.2
$region0: #{custom-call.2}
  %s0 = inlined_call_operand.vmem [shape: f32[4,1,8,8], index: 0, kind: input, shape index: {}]
  %s1 = inlined_call_operand.vmem [shape: f32[4,1,8,8], index: 1, kind: output, shape index: {}]
  $region1: #{custom-call.2} parent=0
    #allocation0 [shape = 'u8[8192]{0}', space=vmem, size = 0x2000, scoped, tag = 'operand span for operand 0']
    #allocation1 [shape = 'u8[8192]{0}', space=vmem, size = 0x2000, scoped, tag = 'operand span for operand 1']
    loop: start=0, step=1, limit=6
    $region2: #{custom-call.2} parent=1 // loop_pre_header
      _
    $region3: #{custom-call.2} parent=1 // loop_header
      %s3 = sphi 0, %s7
      %p4 = scmp.ge.s32.totalorder %s3, 6
      %s10 = sphi 0, %s36
      %s11 = sphi 0, %s32
      %s12 = sphi 0, %s28
      %s13 = sphi 0, %s24
      %s14 = sphi 0, %s10
      %s15 = sphi 0, %s11
      %s16 = sphi 0, %s12
      %s17 = sphi 0, %s13
      %s18 = sphi 0, %s14
      %s19 = sphi 0, %s15
      %s20 = sphi 0, %s16
      %s21 = sphi 0, %s17
    $region4: #{custom-call.2} parent=1 // loop_header_branch
      %6 = sbr.rel (%p4) target = $region8
    $region5: #{custom-call.2} parent=1 // loop_body
      %s8 = ssub.s32 %s3, 1
      %s9 = ssub.s32 %s3, 2
      %s22 = sadd.s32 1, %s13
      %p23 = scmp.ge.s32.totalorder %s22, 1
      %s24 = scalar_select %p23, 0, %s22
      %s25 = sadd.s32 1, %s12
      %s26 = scalar_select %p23, %s25, %s12
      %p27 = scmp.ge.s32.totalorder %s26, 1
      %s28 = scalar_select %p27, 0, %s26
      %s29 = sadd.s32 1, %s11
      %s30 = scalar_select %p27, %s29, %s11
      %p31 = scmp.ge.s32.totalorder %s30, 1
      %s32 = scalar_select %p31, 0, %s30
      %s33 = sadd.s32 1, %s10
      %s34 = scalar_select %p31, %s33, %s10
      %p35 = scmp.ge.s32.totalorder %s34, 4
      %s36 = scalar_select %p35, 0, %s34
      %p37 = scmp.le.s32.totalorder 1, %s3
      %p38 = scmp.lt.s32.totalorder %s3, 5
      %p39 = pnand %p37, %p38
      %p40 = pneg %p39
      // Predicated region
      $region9: #{custom-call.2} parent=5 // pred_check
        _
      $region10: #{custom-call.2} parent=5 // pred_check_branch
        %42 = sbr.rel (%p39) target = $region12
      $region11: #{custom-call.2} parent=5 // pred_region
        %s43 = ssub.s32 %s3, 1
      $region12: #{custom-call.2} parent=5 // pred_fallthru
        _
      %p44 = scmp.lt.s32.totalorder %s3, 4
      // Predicated region
      $region13: #{custom-call.2} parent=5 // pred_check
        %p45 = pneg %p44
      $region14: #{custom-call.2} parent=5 // pred_check_branch
        %47 = sbr.rel (%p45) target = $region16
      $region15: #{custom-call.2} parent=5 // pred_region
        %s48 = sand.u32 %s3, 1
        %s49 = sand.u32 %s3, 1
        %s50 = smul.addr %s49, 8
        %s51 = scalar_lea.vmem [#allocation0], %s50
        %s52 = sadd.s32 %s13, %s12
        %s53 = sadd.s32 %s52, %s11
        %s54 = sadd.s32 %s53, %s10
        %s55 = smul.addr %s54, 8
        %s56 = scalar_lea.vmem %s0, %s55
        // Predicated region
        $region17: #{custom-call.2} parent=15 // pred_check
          _
        $region18: #{custom-call.2} parent=15 // pred_check_branch
          %58 = sbr.rel (0) target = $region20
        $region19: #{custom-call.2} parent=15 // pred_region
          // Predicated region
          $region21: #{custom-call.2} parent=19 // pred_check
            _
          $region22: #{custom-call.2} parent=19 // pred_check_branch
            %60 = sbr.rel (0) target = $region24
          $region23: #{custom-call.2} parent=19 // pred_region
            // Predicated region
            $region36: #{custom-call.2} parent=23 // pred_check
              _
            $region37: #{custom-call.2} parent=23 // pred_check_branch
              %75 = sbr.rel (0) target = $region39
            $region38: #{custom-call.2} parent=23 // pred_region
              loop: start=0, step=1, limit=1
              $region40: #{custom-call.2} parent=38 // loop_pre_header
                _
              $region41: #{custom-call.2} parent=38 // loop_header
                %s77 = sphi 0, %s81
                %p78 = scmp.ge.s32.totalorder %s77, 1
                %s82 = sphi %s56, %s56
                %s83 = sphi %s51, %s51
              $region42: #{custom-call.2} parent=38 // loop_header_branch
                %80 = sbr.rel (%p78) target = $region46
              $region43: #{custom-call.2} parent=38 // loop_body
                %v84 = vld [vmem:[%s82] sm:$0xff]
                %85 = vst [vmem:[%s83] sm:$0xff] %v84
              $region44: #{custom-call.2} parent=38 // loop_footer
                %s81 = sadd.s32 1, %s77
              $region45: #{custom-call.2} parent=38 // loop_footer_branch
                %76 = sbr.rel target = $region41
              $region46: #{custom-call.2} parent=38 // loop_exit
                _
            $region39: #{custom-call.2} parent=23 // pred_fallthru
              _
            // Predicated region
            $region47: #{custom-call.2} parent=23 // pred_check
              _
            $region48: #{custom-call.2} parent=23 // pred_check_branch
              %87 = sbr.rel target = $region50
            $region49: #{custom-call.2} parent=23 // pred_region
              _
            $region50: #{custom-call.2} parent=23 // pred_fallthru
              _
          $region24: #{custom-call.2} parent=19 // pred_fallthru
            _
          // Predicated region
          $region25: #{custom-call.2} parent=19 // pred_check
            _
          $region26: #{custom-call.2} parent=19 // pred_check_branch
            %62 = sbr.rel target = $region28
          $region27: #{custom-call.2} parent=19 // pred_region
            loop: start=0, step=1, limit=1
            $region29: #{custom-call.2} parent=27 // loop_pre_header
              _
            $region30: #{custom-call.2} parent=27 // loop_header
              %s65 = sphi 0, %s69
              %p66 = scmp.ge.s32.totalorder %s65, 1
              %s70 = sphi %s56, %s56
              %s71 = sphi %s51, %s51
            $region31: #{custom-call.2} parent=27 // loop_header_branch
              %68 = sbr.rel (%p66) target = $region35
            $region32: #{custom-call.2} parent=27 // loop_body
              %v72 = vld [vmem:[%s70] sm:$0xff]
              %73 = vst [vmem:[%s71] sm:$0xff] %v72
            $region33: #{custom-call.2} parent=27 // loop_footer
              %s69 = sadd.s32 1, %s65
            $region34: #{custom-call.2} parent=27 // loop_footer_branch
              %64 = sbr.rel target = $region30
            $region35: #{custom-call.2} parent=27 // loop_exit
              _
          $region28: #{custom-call.2} parent=19 // pred_fallthru
            _
        $region20: #{custom-call.2} parent=15 // pred_fallthru
          _
        %88 = vnop
      $region16: #{custom-call.2} parent=5 // pred_fallthru
        _
      %p89 = scmp.le.s32.totalorder 1, %s3
      %p90 = scmp.lt.s32.totalorder %s3, 5
      %p91 = pnand %p89, %p90
      %p92 = pneg %p91
      // Predicated region
      $region51: #{custom-call.2} parent=5 // pred_check
        _
      $region52: #{custom-call.2} parent=5 // pred_check_branch
        %94 = sbr.rel (%p91) target = $region54
      $region53: #{custom-call.2} parent=5 // pred_region
        #allocation2 [shape = 'f32[8,8]{1,0}', space=vmem, size = 0x1000, scoped, tag = 'rescaled input a']
        %s95 = ssub.s32 %s3, 1
        %s96 = sand.u32 %s8, 1
        %s97 = sand.u32 %s8, 1
        %s98 = smul.addr %s97, 8
        %s99 = scalar_lea.vmem [#allocation0], %s98
        %s100 = sand.u32 %s8, 1
        %s101 = sand.u32 %s8, 1
        %s102 = smul.addr %s101, 8
        %s103 = scalar_lea.vmem [#allocation0], %s102
        %s104 = sand.u32 %s8, 1
        %s105 = sand.u32 %s8, 1
        %s106 = smul.addr %s105, 8
        %s107 = scalar_lea.vmem [#allocation1], %s106
        %v108 = vlaneseq
        %v109 = vand.u32 %v108, 127
        %vm110 = vcmp.lt.s32.totalorder %v109, 8
        %v111 = vlaneseq
        %v112 = vshrl.u32 %v111, 7
        %vm114 = vcmp.eq.s32.totalorder %v112, %v109
        %v115 = vld [vmem:[%s99] sm:$0xff]
        %v116 = vsel %vm114, %v115, 0.0
        %117 = vadd.xlane.f32.xlu0 %v116
        %v118 = vpop.xlane.xlu0 %117
        %vm119 = vcmp.ge.s32.totalorder %v112, %v109
        %vm120 = vmand %vm119, %vm110
        %v121 = vsel %vm120, %v115, 0.0
        %v122 = vrcp.pop %v118
        %v123 = vmul.f32 %v121, %v122
        %124 = vst [vmem:[#allocation2] sm:$0xff] %v123
        %v125 = vlaneseq
        %v126 = vand.u32 %v125, 127
        %v127 = vlaneseq
        %v128 = vshrl.u32 %v127, 7
        %vm130 = vcmp.eq.s32.totalorder %v126, %v128
        %v131 = vlaneseq
        %v132 = vand.u32 %v131, 127
        %vm133 = vcmp.eq.s32.totalorder %v132, 0
        %v134 = vsel %vm133, 1.0, -1.0
        %v135 = vsel %vm130, %v134, 0.0
        %s136 = scalar_lea.vmem [#allocation2], 1
        %v137 = vld [vmem:[%s136] ss:$0 sm:$0xff]
        %v138 = vxor.u32 %v137, 2147483648
        %v139 = vlaneseq
        %v140 = vand.u32 %v139, 127
        %vm141 = vcmp.eq.s32.totalorder %v140, 1
        %v142 = vmul.f32 %v138, %v135
        %143 = vadd.xlane.f32.xlu0 %v142
        %v144 = vpop.xlane.xlu0 %143
        %v145 = vsel %vm141, %v144, %v135
        %s146 = scalar_lea.vmem [#allocation2], 2
        %v147 = vld [vmem:[%s146] ss:$0 sm:$0xff]
        %v148 = vxor.u32 %v147, 2147483648
        %v149 = vlaneseq
        %v150 = vand.u32 %v149, 127
        %vm151 = vcmp.eq.s32.totalorder %v150, 2
        %v152 = vmul.f32 %v148, %v145
        %153 = vadd.xlane.f32.xlu0 %v152
        %v154 = vpop.xlane.xlu0 %153
        %v155 = vsel %vm151, %v154, %v145
        %s156 = scalar_lea.vmem [#allocation2], 3
        %v157 = vld [vmem:[%s156] ss:$0 sm:$0xff]
        %v158 = vxor.u32 %v157, 2147483648
        %v159 = vlaneseq
        %v160 = vand.u32 %v159, 127
        %vm161 = vcmp.eq.s32.totalorder %v160, 3
        %v162 = vmul.f32 %v158, %v155
        %163 = vadd.xlane.f32.xlu0 %v162
        %v164 = vpop.xlane.xlu0 %163
        %v165 = vsel %vm161, %v164, %v155
        %s166 = scalar_lea.vmem [#allocation2], 4
        %v167 = vld [vmem:[%s166] ss:$0 sm:$0xff]
        %v168 = vxor.u32 %v167, 2147483648
        %v169 = vlaneseq
        %v170 = vand.u32 %v169, 127
        %vm171 = vcmp.eq.s32.totalorder %v170, 4
        %v172 = vmul.f32 %v168, %v165
        %173 = vadd.xlane.f32.xlu0 %v172
        %v174 = vpop.xlane.xlu0 %173
        %v175 = vsel %vm171, %v174, %v165
        %s176 = scalar_lea.vmem [#allocation2], 5
        %v177 = vld [vmem:[%s176] ss:$0 sm:$0xff]
        %v178 = vxor.u32 %v177, 2147483648
        %v179 = vlaneseq
        %v180 = vand.u32 %v179, 127
        %vm181 = vcmp.eq.s32.totalorder %v180, 5
        %v182 = vmul.f32 %v178, %v175
        %183 = vadd.xlane.f32.xlu0 %v182
        %v184 = vpop.xlane.xlu0 %183
        %v185 = vsel %vm181, %v184, %v175
        %s186 = scalar_lea.vmem [#allocation2], 6
        %v187 = vld [vmem:[%s186] ss:$0 sm:$0xff]
        %v188 = vxor.u32 %v187, 2147483648
        %v189 = vlaneseq
        %v190 = vand.u32 %v189, 127
        %vm191 = vcmp.eq.s32.totalorder %v190, 6
        %v192 = vmul.f32 %v188, %v185
        %193 = vadd.xlane.f32.xlu0 %v192
        %v194 = vpop.xlane.xlu0 %193
        %v195 = vsel %vm191, %v194, %v185
        %s196 = scalar_lea.vmem [#allocation2], 7
        %v197 = vld [vmem:[%s196] ss:$0 sm:$0xff]
        %v198 = vxor.u32 %v197, 2147483648
        %v199 = vlaneseq
        %v200 = vand.u32 %v199, 127
        %vm201 = vcmp.eq.s32.totalorder %v200, 7
        %v202 = vmul.f32 %v198, %v195
        %203 = vadd.xlane.f32.xlu0 %v202
        %v204 = vpop.xlane.xlu0 %203
        %v205 = vsel %vm201, %v204, %v195
        %v206 = vrcp.pop %v118
        %v207 = vmul.f32 %v205, %v206
        %vm208 = vweird.f32 %v118
        %v209 = vsel %vm208, %v205, %v207
        %210 = vst [vmem:[%s107] sm:$0xff] %v209
        %s211 = sand.u32 %s8, 1
        %s212 = sand.u32 %s8, 1
        %s213 = smul.addr %s212, 8
        %s214 = scalar_lea.vmem [#allocation1], %s213
        %s215 = sadd.s32 %s17, %s16
        %s216 = sadd.s32 %s215, %s15
        %s217 = sadd.s32 %s216, %s14
        %s218 = smul.addr %s217, 8
        %s219 = scalar_lea.vmem %s1, %s218
        // Predicated region
        $region55: #{custom-call.2} parent=53 // pred_check
          _
        $region56: #{custom-call.2} parent=53 // pred_check_branch
          %221 = sbr.rel (0) target = $region58
        $region57: #{custom-call.2} parent=53 // pred_region
          // Predicated region
          $region59: #{custom-call.2} parent=57 // pred_check
            _
          $region60: #{custom-call.2} parent=57 // pred_check_branch
            %223 = sbr.rel (0) target = $region62
          $region61: #{custom-call.2} parent=57 // pred_region
            // Predicated region
            $region74: #{custom-call.2} parent=61 // pred_check
              _
            $region75: #{custom-call.2} parent=61 // pred_check_branch
              %238 = sbr.rel (0) target = $region77
            $region76: #{custom-call.2} parent=61 // pred_region
              loop: start=0, step=1, limit=1
              $region78: #{custom-call.2} parent=76 // loop_pre_header
                _
              $region79: #{custom-call.2} parent=76 // loop_header
                %s240 = sphi 0, %s244
                %p241 = scmp.ge.s32.totalorder %s240, 1
                %s245 = sphi %s214, %s214
                %s246 = sphi %s219, %s219
              $region80: #{custom-call.2} parent=76 // loop_header_branch
                %243 = sbr.rel (%p241) target = $region84
              $region81: #{custom-call.2} parent=76 // loop_body
                %v247 = vld [vmem:[%s245] sm:$0xff]
                %248 = vst [vmem:[%s246] sm:$0xff] %v247
              $region82: #{custom-call.2} parent=76 // loop_footer
                %s244 = sadd.s32 1, %s240
              $region83: #{custom-call.2} parent=76 // loop_footer_branch
                %239 = sbr.rel target = $region79
              $region84: #{custom-call.2} parent=76 // loop_exit
                _
            $region77: #{custom-call.2} parent=61 // pred_fallthru
              _
            // Predicated region
            $region85: #{custom-call.2} parent=61 // pred_check
              _
            $region86: #{custom-call.2} parent=61 // pred_check_branch
              %250 = sbr.rel target = $region88
            $region87: #{custom-call.2} parent=61 // pred_region
              _
            $region88: #{custom-call.2} parent=61 // pred_fallthru
              _
          $region62: #{custom-call.2} parent=57 // pred_fallthru
            _
          // Predicated region
          $region63: #{custom-call.2} parent=57 // pred_check
            _
          $region64: #{custom-call.2} parent=57 // pred_check_branch
            %225 = sbr.rel target = $region66
          $region65: #{custom-call.2} parent=57 // pred_region
            loop: start=0, step=1, limit=1
            $region67: #{custom-call.2} parent=65 // loop_pre_header
              _
            $region68: #{custom-call.2} parent=65 // loop_header
              %s228 = sphi 0, %s232
              %p229 = scmp.ge.s32.totalorder %s228, 1
              %s233 = sphi %s214, %s214
              %s234 = sphi %s219, %s219
            $region69: #{custom-call.2} parent=65 // loop_header_branch
              %231 = sbr.rel (%p229) target = $region73
            $region70: #{custom-call.2} parent=65 // loop_body
              %v235 = vld [vmem:[%s233] sm:$0xff]
              %236 = vst [vmem:[%s234] sm:$0xff] %v235
            $region71: #{custom-call.2} parent=65 // loop_footer
              %s232 = sadd.s32 1, %s228
            $region72: #{custom-call.2} parent=65 // loop_footer_branch
              %227 = sbr.rel target = $region68
            $region73: #{custom-call.2} parent=65 // loop_exit
              _
          $region66: #{custom-call.2} parent=57 // pred_fallthru
            _
        $region58: #{custom-call.2} parent=53 // pred_fallthru
          _
        %251 = vnop
      $region54: #{custom-call.2} parent=5 // pred_fallthru
        _
      %p252 = scmp.le.s32.totalorder 2, %s3
      // Predicated region
      $region89: #{custom-call.2} parent=5 // pred_check
        %p253 = pneg %p252
      $region90: #{custom-call.2} parent=5 // pred_check_branch
        %255 = sbr.rel (%p253) target = $region92
      $region91: #{custom-call.2} parent=5 // pred_region
        %s256 = ssub.s32 %s3, 2
        %s257 = sand.u32 %s9, 1
        %s258 = sand.u32 %s9, 1
        %s259 = smul.addr %s258, 8
        %s260 = scalar_lea.vmem [#allocation1], %s259
      $region92: #{custom-call.2} parent=5 // pred_fallthru
        _
    $region6: #{custom-call.2} parent=1 // loop_footer
      %s7 = sadd.s32 1, %s3
    $region7: #{custom-call.2} parent=1 // loop_footer_branch
      %2 = sbr.rel target = $region3
    $region8: #{custom-call.2} parent=1 // loop_exit
      _

// kernel: sgd_gmm_forward.1
$region0: #{sgd_gmm_forward.1}
  #allocation0 [shape = 'u32[]', space=smem, size = 0x4, offset = 0x4, fixed_abs, tag = 'smem constant byte address 0x4 - core index']
  #allocation1 [shape = 'u32[144,128]{1,0:T(1,128)}', space=vmem, size = 0x12000, scoped, tag = 'internal scratch']
  %s0 = inlined_call_operand.vmem [shape: f32[4096,8], index: 0, kind: input, shape index: {}]
  %s1 = inlined_call_operand.vmem [shape: f32[32,8], index: 1, kind: input, shape index: {}]
  %s2 = inlined_call_operand.vmem [shape: f32[4,8], index: 2, kind: input, shape index: {}]
  %s3 = inlined_call_operand.vmem [shape: f32[4,32], index: 3, kind: input, shape index: {}]
  %s4 = inlined_call_operand.vmem [shape: f32[4,1], index: 4, kind: input, shape index: {}]
  %s5 = inlined_call_operand.hbm [shape: f32[1,4096], index: 5, kind: output, shape index: {}]
  %s6 = sld [smem:[#allocation0]]
  $region53: #{sgd_gmm_forward.1} parent=0
    _
  %s8 = ssub.s32 1, %s6
  %s9 = scalar_select 0, %s8, %s6
  $region1: #{sgd_gmm_forward.1} parent=0
    #allocation2 [shape = 'u8[16384]{0}', space=vmem, size = 0x4000, scoped, tag = 'output window, operand 0']
    #allocation3 [shape = 's32[2]{0}', space=sflag, size = 0x8, scoped, tag = 'scoped memory for sgd_gmm_forward.1']
    %10 = vsyncpa [#allocation3], 0
    %s11 = scalar_lea.sflag [#allocation3], 1
    %12 = vsyncpa %s11, 0
    loop: start=0, step=1, limit=4
    $region2: #{sgd_gmm_forward.1} parent=1 // loop_pre_header
      _
    $region3: #{sgd_gmm_forward.1} parent=1 // loop_header
      %s14 = sphi 0, %s18
      %p15 = scmp.ge.s32.totalorder %s14, 4
      %s24 = sphi 0, %s26
      %s27 = sphi 0, %s24
      %s28 = sphi 0, %s27
      %s44 = sphi 0, %s28
      %s48 = sphi 0, %s48
      %s50 = sphi 0, %s48
      %s51 = sphi 0, %s50
      %s65 = sphi 0, %s51
      %s69 = sphi 0, %s69
      %s71 = sphi 0, %s69
      %s72 = sphi 0, %s71
      %s86 = sphi 0, %s72
      %s90 = sphi 0, %s90
      %s92 = sphi 0, %s90
      %s93 = sphi 0, %s92
      %s107 = sphi 0, %s93
      %s111 = sphi 0, %s111
      %s113 = sphi 0, %s111
      %s114 = sphi 0, %s113
      %s128 = sphi 0, %s114
      %s134 = sphi 0, %s136
      %s137 = sphi 0, %s134
      %s138 = sphi 0, %s137
      %s154 = sphi 0, %s138
    $region4: #{sgd_gmm_forward.1} parent=1 // loop_header_branch
      %17 = sbr.rel (%p15) target = $region8
    $region5: #{sgd_gmm_forward.1} parent=1 // loop_body
      %s19 = ssub.s32 %s14, 1
      %s20 = ssub.s32 %s14, 2
      %s21 = sadd.s32 %s14, 1
      %s22 = ssub.s32 %s14, %s21
      %p23 = scmp.eq.s32.totalorder %s22, 0
      %s25 = sadd.s32 %s24, 1
      %s26 = scalar_select %p23, %s24, %s25
      %p29 = pneg %p23
      %p30 = scmp.eq.s32.totalorder %s14, 1
      %p31 = por %p29, %p30
      %p32 = scmp.ne.s32.totalorder %s24, %s27
      %p33 = scmp.eq.s32.totalorder %s14, 0
      %p34 = por %p32, %p33
      %p35 = scmp.ne.s32.totalorder %s24, %s27
      %p36 = scmp.eq.s32.totalorder %s19, 1
      %p37 = por %p35, %p36
      %p38 = scmp.ne.s32.totalorder %s27, %s28
      %p39 = scmp.eq.s32.totalorder %s19, 0
      %p40 = por %p38, %p39
      %p41 = scmp.ne.s32.totalorder %s27, %s28
      %p42 = scmp.eq.s32.totalorder %s20, 1
      %p43 = por %p41, %p42
      %p45 = scmp.ne.s32.totalorder %s28, %s44
      %p46 = scmp.eq.s32.totalorder %s20, 0
      %p47 = por %p45, %p46
      %s49 = sadd.s32 %s48, 1
      %p52 = scmp.eq.s32.totalorder %s14, 1
      %p53 = scmp.ne.s32.totalorder %s48, %s50
      %p54 = scmp.eq.s32.totalorder %s14, 0
      %p55 = por %p53, %p54
      %p56 = scmp.ne.s32.totalorder %s48, %s50
      %p57 = scmp.eq.s32.totalorder %s19, 1
      %p58 = por %p56, %p57
      %p59 = scmp.ne.s32.totalorder %s50, %s51
      %p60 = scmp.eq.s32.totalorder %s19, 0
      %p61 = por %p59, %p60
      %p62 = scmp.ne.s32.totalorder %s50, %s51
      %p63 = scmp.eq.s32.totalorder %s20, 1
      %p64 = por %p62, %p63
      %p66 = scmp.ne.s32.totalorder %s51, %s65
      %p67 = scmp.eq.s32.totalorder %s20, 0
      %p68 = por %p66, %p67
      %s70 = sadd.s32 %s69, 1
      %p73 = scmp.eq.s32.totalorder %s14, 1
      %p74 = scmp.ne.s32.totalorder %s69, %s71
      %p75 = scmp.eq.s32.totalorder %s14, 0
      %p76 = por %p74, %p75
      %p77 = scmp.ne.s32.totalorder %s69, %s71
      %p78 = scmp.eq.s32.totalorder %s19, 1
      %p79 = por %p77, %p78
      %p80 = scmp.ne.s32.totalorder %s71, %s72
      %p81 = scmp.eq.s32.totalorder %s19, 0
      %p82 = por %p80, %p81
      %p83 = scmp.ne.s32.totalorder %s71, %s72
      %p84 = scmp.eq.s32.totalorder %s20, 1
      %p85 = por %p83, %p84
      %p87 = scmp.ne.s32.totalorder %s72, %s86
      %p88 = scmp.eq.s32.totalorder %s20, 0
      %p89 = por %p87, %p88
      %s91 = sadd.s32 %s90, 1
      %p94 = scmp.eq.s32.totalorder %s14, 1
      %p95 = scmp.ne.s32.totalorder %s90, %s92
      %p96 = scmp.eq.s32.totalorder %s14, 0
      %p97 = por %p95, %p96
      %p98 = scmp.ne.s32.totalorder %s90, %s92
      %p99 = scmp.eq.s32.totalorder %s19, 1
      %p100 = por %p98, %p99
      %p101 = scmp.ne.s32.totalorder %s92, %s93
      %p102 = scmp.eq.s32.totalorder %s19, 0
      %p103 = por %p101, %p102
      %p104 = scmp.ne.s32.totalorder %s92, %s93
      %p105 = scmp.eq.s32.totalorder %s20, 1
      %p106 = por %p104, %p105
      %p108 = scmp.ne.s32.totalorder %s93, %s107
      %p109 = scmp.eq.s32.totalorder %s20, 0
      %p110 = por %p108, %p109
      %s112 = sadd.s32 %s111, 1
      %p115 = scmp.eq.s32.totalorder %s14, 1
      %p116 = scmp.ne.s32.totalorder %s111, %s113
      %p117 = scmp.eq.s32.totalorder %s14, 0
      %p118 = por %p116, %p117
      %p119 = scmp.ne.s32.totalorder %s111, %s113
      %p120 = scmp.eq.s32.totalorder %s19, 1
      %p121 = por %p119, %p120
      %p122 = scmp.ne.s32.totalorder %s113, %s114
      %p123 = scmp.eq.s32.totalorder %s19, 0
      %p124 = por %p122, %p123
      %p125 = scmp.ne.s32.totalorder %s113, %s114
      %p126 = scmp.eq.s32.totalorder %s20, 1
      %p127 = por %p125, %p126
      %p129 = scmp.ne.s32.totalorder %s114, %s128
      %p130 = scmp.eq.s32.totalorder %s20, 0
      %p131 = por %p129, %p130
      %s132 = ssub.s32 %s14, %s21
      %p133 = scmp.eq.s32.totalorder %s132, 0
      %s135 = sadd.s32 %s134, 1
      %s136 = scalar_select %p133, %s134, %s135
      %p139 = pneg %p133
      %p140 = scmp.eq.s32.totalorder %s14, 1
      %p141 = por %p139, %p140
      %p142 = scmp.ne.s32.totalorder %s134, %s137
      %p143 = scmp.eq.s32.totalorder %s14, 0
      %p144 = por %p142, %p143
      %p145 = scmp.ne.s32.totalorder %s134, %s137
      %p146 = scmp.eq.s32.totalorder %s19, 1
      %p147 = por %p145, %p146
      %p148 = scmp.ne.s32.totalorder %s137, %s138
      %p149 = scmp.eq.s32.totalorder %s19, 0
      %p150 = por %p148, %p149
      %p151 = scmp.ne.s32.totalorder %s137, %s138
      %p152 = scmp.eq.s32.totalorder %s20, 1
      %p153 = por %p151, %p152
      %p155 = scmp.ne.s32.totalorder %s138, %s154
      %p156 = scmp.eq.s32.totalorder %s20, 0
      %p157 = por %p155, %p156
      %p158 = scmp.le.s32.totalorder 1, %s14
      %p159 = scmp.lt.s32.totalorder %s14, 3
      %p160 = pnand %p158, %p159
      %p161 = pneg %p160
      // Predicated region
      $region9: #{sgd_gmm_forward.1} parent=5 // pred_check
        _
      $region10: #{sgd_gmm_forward.1} parent=5 // pred_check_branch
        %163 = sbr.rel (%p160) target = $region12
      $region11: #{sgd_gmm_forward.1} parent=5 // pred_region
        %s164 = ssub.s32 %s14, 1
        // Predicated region
        $region13: #{sgd_gmm_forward.1} parent=11 // pred_check
          %p165 = pneg %p61
        $region14: #{sgd_gmm_forward.1} parent=11 // pred_check_branch
          %167 = sbr.rel (%p165) target = $region16
        $region15: #{sgd_gmm_forward.1} parent=11 // pred_region
          _
        $region16: #{sgd_gmm_forward.1} parent=11 // pred_fallthru
          _
        // Predicated region
        $region17: #{sgd_gmm_forward.1} parent=11 // pred_check
          %p168 = pneg %p82
        $region18: #{sgd_gmm_forward.1} parent=11 // pred_check_branch
          %170 = sbr.rel (%p168) target = $region20
        $region19: #{sgd_gmm_forward.1} parent=11 // pred_region
          _
        $region20: #{sgd_gmm_forward.1} parent=11 // pred_fallthru
          _
        // Predicated region
        $region21: #{sgd_gmm_forward.1} parent=11 // pred_check
          %p171 = pneg %p103
        $region22: #{sgd_gmm_forward.1} parent=11 // pred_check_branch
          %173 = sbr.rel (%p171) target = $region24
        $region23: #{sgd_gmm_forward.1} parent=11 // pred_region
          _
        $region24: #{sgd_gmm_forward.1} parent=11 // pred_fallthru
          _
        // Predicated region
        $region25: #{sgd_gmm_forward.1} parent=11 // pred_check
          %p174 = pneg %p124
        $region26: #{sgd_gmm_forward.1} parent=11 // pred_check_branch
          %176 = sbr.rel (%p174) target = $region28
        $region27: #{sgd_gmm_forward.1} parent=11 // pred_region
          _
        $region28: #{sgd_gmm_forward.1} parent=11 // pred_fallthru
          _
      $region12: #{sgd_gmm_forward.1} parent=5 // pred_fallthru
        _
      %p177 = scmp.lt.s32.totalorder %s14, 2
      // Predicated region
      $region29: #{sgd_gmm_forward.1} parent=5 // pred_check
        %p178 = pneg %p177
      $region30: #{sgd_gmm_forward.1} parent=5 // pred_check_branch
        %180 = sbr.rel (%p178) target = $region32
      $region31: #{sgd_gmm_forward.1} parent=5 // pred_region
        // Predicated region
        $region33: #{sgd_gmm_forward.1} parent=31 // pred_check
          %p181 = pneg %p34
        $region34: #{sgd_gmm_forward.1} parent=31 // pred_check_branch
          %183 = sbr.rel (%p181) target = $region36
        $region35: #{sgd_gmm_forward.1} parent=31 // pred_region
          %s184 = smul.u32 256, %s14
          %p185 = scmp.lt.s32.totalorder %s184, 511
          %s186 = scalar_select %p185, %s184, 511
          %s187 = smul.addr %s186, 8
          %s188 = scalar_lea.vmem %s0, %s187
          %s189 = smul.u32 256, %s14
        $region36: #{sgd_gmm_forward.1} parent=31 // pred_fallthru
          _
      $region32: #{sgd_gmm_forward.1} parent=5 // pred_fallthru
        _
      %p190 = scmp.le.s32.totalorder 1, %s14
      %p191 = scmp.lt.s32.totalorder %s14, 3
      %p192 = pnand %p190, %p191
      %p193 = pneg %p192
      // Predicated region
      $region37: #{sgd_gmm_forward.1} parent=5 // pred_check
        _
      $region38: #{sgd_gmm_forward.1} parent=5 // pred_check_branch
        %195 = sbr.rel (%p192) target = $region40
      $region39: #{sgd_gmm_forward.1} parent=5 // pred_region
        %s196 = ssub.s32 %s14, 1
        %s197 = smul.u32 256, %s19
        %p198 = scmp.lt.s32.totalorder %s197, 511
        %s199 = scalar_select %p198, %s197, 511
        %s200 = smul.addr %s199, 8
        %s201 = scalar_lea.vmem %s0, %s200
        %p202 = pneg %p40
        %p203 = pneg %p37
        %p204 = pneg %p61
        %p205 = pneg %p58
        %p206 = pneg %p82
        %p207 = pneg %p79
        %p208 = pneg %p103
        %p209 = pneg %p100
        %p210 = pneg %p124
        %p211 = pneg %p121
        %p212 = pneg %p150
        %p213 = pneg %p147
        %s214 = sand.u32 %s137, 1
        %s215 = scalar_lea.sflag [#allocation3], %s214
        %s216 = sand.u32 %s137, 1
        %s217 = smul.addr %s216, 16
        %s218 = scalar_lea.vmem [#allocation2], %s217
        %s219 = smul.u32 256, %s19
        %p220 = scmp.lt.s32.totalorder %s219, 511
        %s221 = scalar_select %p220, %s219, 511
        %s222 = smul.addr %s221, 8
        %s223 = scalar_lea.vmem %s0, %s222
        %s224 = smul.u32 256, %s19
        %s225 = smul.u32 16, %s19
        %v226 = vld [vmem:[%s223] sm:$0xff]
        %v227 = vld [vmem:[%s223 + $0x8] sm:$0xff]
        %v228 = vld [vmem:[%s223 + $0x10] sm:$0xff]
        %v229 = vld [vmem:[%s223 + $0x18] sm:$0xff]
        %v230 = vld [vmem:[%s223 + $0x20] sm:$0xff]
        %v231 = vld [vmem:[%s223 + $0x28] sm:$0xff]
        %v232 = vld [vmem:[%s223 + $0x30] sm:$0xff]
        %v233 = vld [vmem:[%s223 + $0x38] sm:$0xff]
        %v234 = vld [vmem:[%s223 + $0x40] sm:$0xff]
        %v235 = vld [vmem:[%s223 + $0x48] sm:$0xff]
        %v236 = vld [vmem:[%s223 + $0x50] sm:$0xff]
        %v237 = vld [vmem:[%s223 + $0x58] sm:$0xff]
        %v238 = vld [vmem:[%s223 + $0x60] sm:$0xff]
        %v239 = vld [vmem:[%s223 + $0x68] sm:$0xff]
        %v240 = vld [vmem:[%s223 + $0x70] sm:$0xff]
        %v241 = vld [vmem:[%s223 + $0x78] sm:$0xff]
        %v242 = vld [vmem:[%s223 + $0x80] sm:$0xff]
        %v243 = vld [vmem:[%s223 + $0x88] sm:$0xff]
        %v244 = vld [vmem:[%s223 + $0x90] sm:$0xff]
        %v245 = vld [vmem:[%s223 + $0x98] sm:$0xff]
        %v246 = vld [vmem:[%s223 + $0xa0] sm:$0xff]
        %v247 = vld [vmem:[%s223 + $0xa8] sm:$0xff]
        %v248 = vld [vmem:[%s223 + $0xb0] sm:$0xff]
        %v249 = vld [vmem:[%s223 + $0xb8] sm:$0xff]
        %v250 = vld [vmem:[%s223 + $0xc0] sm:$0xff]
        %v251 = vld [vmem:[%s223 + $0xc8] sm:$0xff]
        %v252 = vld [vmem:[%s223 + $0xd0] sm:$0xff]
        %v253 = vld [vmem:[%s223 + $0xd8] sm:$0xff]
        %v254 = vld [vmem:[%s223 + $0xe0] sm:$0xff]
        %v255 = vld [vmem:[%s223 + $0xe8] sm:$0xff]
        %v256 = vld [vmem:[%s223 + $0xf0] sm:$0xff]
        %v257 = vld [vmem:[%s223 + $0xf8] sm:$0xff]
        %v258 = vld [vmem:[%s223 + $0x100] sm:$0xff]
        %v259 = vld [vmem:[%s223 + $0x108] sm:$0xff]
        %v260 = vld [vmem:[%s223 + $0x110] sm:$0xff]
        %v261 = vld [vmem:[%s223 + $0x118] sm:$0xff]
        %v262 = vld [vmem:[%s223 + $0x120] sm:$0xff]
        %v263 = vld [vmem:[%s223 + $0x128] sm:$0xff]
        %v264 = vld [vmem:[%s223 + $0x130] sm:$0xff]
        %v265 = vld [vmem:[%s223 + $0x138] sm:$0xff]
        %v266 = vld [vmem:[%s223 + $0x140] sm:$0xff]
        %v267 = vld [vmem:[%s223 + $0x148] sm:$0xff]
        %v268 = vld [vmem:[%s223 + $0x150] sm:$0xff]
        %v269 = vld [vmem:[%s223 + $0x158] sm:$0xff]
        %v270 = vld [vmem:[%s223 + $0x160] sm:$0xff]
        %v271 = vld [vmem:[%s223 + $0x168] sm:$0xff]
        %v272 = vld [vmem:[%s223 + $0x170] sm:$0xff]
        %v273 = vld [vmem:[%s223 + $0x178] sm:$0xff]
        %v274 = vld [vmem:[%s223 + $0x180] sm:$0xff]
        %v275 = vld [vmem:[%s223 + $0x188] sm:$0xff]
        %v276 = vld [vmem:[%s223 + $0x190] sm:$0xff]
        %v277 = vld [vmem:[%s223 + $0x198] sm:$0xff]
        %v278 = vld [vmem:[%s223 + $0x1a0] sm:$0xff]
        %v279 = vld [vmem:[%s223 + $0x1a8] sm:$0xff]
        %v280 = vld [vmem:[%s223 + $0x1b0] sm:$0xff]
        %v281 = vld [vmem:[%s223 + $0x1b8] sm:$0xff]
        %v282 = vld [vmem:[%s223 + $0x1c0] sm:$0xff]
        %v283 = vld [vmem:[%s223 + $0x1c8] sm:$0xff]
        %v284 = vld [vmem:[%s223 + $0x1d0] sm:$0xff]
        %v285 = vld [vmem:[%s223 + $0x1d8] sm:$0xff]
        %v286 = vld [vmem:[%s223 + $0x1e0] sm:$0xff]
        %v287 = vld [vmem:[%s223 + $0x1e8] sm:$0xff]
        %v288 = vld [vmem:[%s223 + $0x1f0] sm:$0xff]
        %v289 = vld [vmem:[%s223 + $0x1f8] sm:$0xff]
        %v290 = vld [vmem:[%s223 + $0x200] sm:$0xff]
        %v291 = vld [vmem:[%s223 + $0x208] sm:$0xff]
        %v292 = vld [vmem:[%s223 + $0x210] sm:$0xff]
        %v293 = vld [vmem:[%s223 + $0x218] sm:$0xff]
        %v294 = vld [vmem:[%s223 + $0x220] sm:$0xff]
        %v295 = vld [vmem:[%s223 + $0x228] sm:$0xff]
        %v296 = vld [vmem:[%s223 + $0x230] sm:$0xff]
        %v297 = vld [vmem:[%s223 + $0x238] sm:$0xff]
        %v298 = vld [vmem:[%s223 + $0x240] sm:$0xff]
        %v299 = vld [vmem:[%s223 + $0x248] sm:$0xff]
        %v300 = vld [vmem:[%s223 + $0x250] sm:$0xff]
        %v301 = vld [vmem:[%s223 + $0x258] sm:$0xff]
        %v302 = vld [vmem:[%s223 + $0x260] sm:$0xff]
        %v303 = vld [vmem:[%s223 + $0x268] sm:$0xff]
        %v304 = vld [vmem:[%s223 + $0x270] sm:$0xff]
        %v305 = vld [vmem:[%s223 + $0x278] sm:$0xff]
        %v306 = vld [vmem:[%s223 + $0x280] sm:$0xff]
        %v307 = vld [vmem:[%s223 + $0x288] sm:$0xff]
        %v308 = vld [vmem:[%s223 + $0x290] sm:$0xff]
        %v309 = vld [vmem:[%s223 + $0x298] sm:$0xff]
        %v310 = vld [vmem:[%s223 + $0x2a0] sm:$0xff]
        %v311 = vld [vmem:[%s223 + $0x2a8] sm:$0xff]
        %v312 = vld [vmem:[%s223 + $0x2b0] sm:$0xff]
        %v313 = vld [vmem:[%s223 + $0x2b8] sm:$0xff]
        %v314 = vld [vmem:[%s223 + $0x2c0] sm:$0xff]
        %v315 = vld [vmem:[%s223 + $0x2c8] sm:$0xff]
        %v316 = vld [vmem:[%s223 + $0x2d0] sm:$0xff]
        %v317 = vld [vmem:[%s223 + $0x2d8] sm:$0xff]
        %v318 = vld [vmem:[%s223 + $0x2e0] sm:$0xff]
        %v319 = vld [vmem:[%s223 + $0x2e8] sm:$0xff]
        %v320 = vld [vmem:[%s223 + $0x2f0] sm:$0xff]
        %v321 = vld [vmem:[%s223 + $0x2f8] sm:$0xff]
        %v322 = vld [vmem:[%s223 + $0x300] sm:$0xff]
        %v323 = vld [vmem:[%s223 + $0x308] sm:$0xff]
        %v324 = vld [vmem:[%s223 + $0x310] sm:$0xff]
        %v325 = vld [vmem:[%s223 + $0x318] sm:$0xff]
        %v326 = vld [vmem:[%s223 + $0x320] sm:$0xff]
        %v327 = vld [vmem:[%s223 + $0x328] sm:$0xff]
        %v328 = vld [vmem:[%s223 + $0x330] sm:$0xff]
        %v329 = vld [vmem:[%s223 + $0x338] sm:$0xff]
        %v330 = vld [vmem:[%s223 + $0x340] sm:$0xff]
        %v331 = vld [vmem:[%s223 + $0x348] sm:$0xff]
        %v332 = vld [vmem:[%s223 + $0x350] sm:$0xff]
        %v333 = vld [vmem:[%s223 + $0x358] sm:$0xff]
        %v334 = vld [vmem:[%s223 + $0x360] sm:$0xff]
        %v335 = vld [vmem:[%s223 + $0x368] sm:$0xff]
        %v336 = vld [vmem:[%s223 + $0x370] sm:$0xff]
        %v337 = vld [vmem:[%s223 + $0x378] sm:$0xff]
        %v338 = vld [vmem:[%s223 + $0x380] sm:$0xff]
        %v339 = vld [vmem:[%s223 + $0x388] sm:$0xff]
        %v340 = vld [vmem:[%s223 + $0x390] sm:$0xff]
        %v341 = vld [vmem:[%s223 + $0x398] sm:$0xff]
        %v342 = vld [vmem:[%s223 + $0x3a0] sm:$0xff]
        %v343 = vld [vmem:[%s223 + $0x3a8] sm:$0xff]
        %v344 = vld [vmem:[%s223 + $0x3b0] sm:$0xff]
        %v345 = vld [vmem:[%s223 + $0x3b8] sm:$0xff]
        %v346 = vld [vmem:[%s223 + $0x3c0] sm:$0xff]
        %v347 = vld [vmem:[%s223 + $0x3c8] sm:$0xff]
        %v348 = vld [vmem:[%s223 + $0x3d0] sm:$0xff]
        %v349 = vld [vmem:[%s223 + $0x3d8] sm:$0xff]
        %v350 = vld [vmem:[%s223 + $0x3e0] sm:$0xff]
        %v351 = vld [vmem:[%s223 + $0x3e8] sm:$0xff]
        %v352 = vld [vmem:[%s223 + $0x3f0] sm:$0xff]
        %v353 = vld [vmem:[%s223 + $0x3f8] sm:$0xff]
        %v354 = vld [vmem:[%s223 + $0x400] sm:$0xff]
        %v355 = vld [vmem:[%s223 + $0x408] sm:$0xff]
        %v356 = vld [vmem:[%s223 + $0x410] sm:$0xff]
        %v357 = vld [vmem:[%s223 + $0x418] sm:$0xff]
        %v358 = vld [vmem:[%s223 + $0x420] sm:$0xff]
        %v359 = vld [vmem:[%s223 + $0x428] sm:$0xff]
        %v360 = vld [vmem:[%s223 + $0x430] sm:$0xff]
        %v361 = vld [vmem:[%s223 + $0x438] sm:$0xff]
        %v362 = vld [vmem:[%s223 + $0x440] sm:$0xff]
        %v363 = vld [vmem:[%s223 + $0x448] sm:$0xff]
        %v364 = vld [vmem:[%s223 + $0x450] sm:$0xff]
        %v365 = vld [vmem:[%s223 + $0x458] sm:$0xff]
        %v366 = vld [vmem:[%s223 + $0x460] sm:$0xff]
        %v367 = vld [vmem:[%s223 + $0x468] sm:$0xff]
        %v368 = vld [vmem:[%s223 + $0x470] sm:$0xff]
        %v369 = vld [vmem:[%s223 + $0x478] sm:$0xff]
        %v370 = vld [vmem:[%s223 + $0x480] sm:$0xff]
        %v371 = vld [vmem:[%s223 + $0x488] sm:$0xff]
        %v372 = vld [vmem:[%s223 + $0x490] sm:$0xff]
        %v373 = vld [vmem:[%s223 + $0x498] sm:$0xff]
        %v374 = vld [vmem:[%s223 + $0x4a0] sm:$0xff]
        %v375 = vld [vmem:[%s223 + $0x4a8] sm:$0xff]
        %v376 = vld [vmem:[%s223 + $0x4b0] sm:$0xff]
        %v377 = vld [vmem:[%s223 + $0x4b8] sm:$0xff]
        %v378 = vld [vmem:[%s223 + $0x4c0] sm:$0xff]
        %v379 = vld [vmem:[%s223 + $0x4c8] sm:$0xff]
        %v380 = vld [vmem:[%s223 + $0x4d0] sm:$0xff]
        %v381 = vld [vmem:[%s223 + $0x4d8] sm:$0xff]
        %v382 = vld [vmem:[%s223 + $0x4e0] sm:$0xff]
        %v383 = vld [vmem:[%s223 + $0x4e8] sm:$0xff]
        %v384 = vld [vmem:[%s223 + $0x4f0] sm:$0xff]
        %v385 = vld [vmem:[%s223 + $0x4f8] sm:$0xff]
        %v386 = vld [vmem:[%s223 + $0x500] sm:$0xff]
        %v387 = vld [vmem:[%s223 + $0x508] sm:$0xff]
        %v388 = vld [vmem:[%s223 + $0x510] sm:$0xff]
        %v389 = vld [vmem:[%s223 + $0x518] sm:$0xff]
        %v390 = vld [vmem:[%s223 + $0x520] sm:$0xff]
        %v391 = vld [vmem:[%s223 + $0x528] sm:$0xff]
        %v392 = vld [vmem:[%s223 + $0x530] sm:$0xff]
        %v393 = vld [vmem:[%s223 + $0x538] sm:$0xff]
        %v394 = vld [vmem:[%s223 + $0x540] sm:$0xff]
        %v395 = vld [vmem:[%s223 + $0x548] sm:$0xff]
        %v396 = vld [vmem:[%s223 + $0x550] sm:$0xff]
        %v397 = vld [vmem:[%s223 + $0x558] sm:$0xff]
        %v398 = vld [vmem:[%s223 + $0x560] sm:$0xff]
        %v399 = vld [vmem:[%s223 + $0x568] sm:$0xff]
        %v400 = vld [vmem:[%s223 + $0x570] sm:$0xff]
        %v401 = vld [vmem:[%s223 + $0x578] sm:$0xff]
        %v402 = vld [vmem:[%s223 + $0x580] sm:$0xff]
        %v403 = vld [vmem:[%s223 + $0x588] sm:$0xff]
        %v404 = vld [vmem:[%s223 + $0x590] sm:$0xff]
        %v405 = vld [vmem:[%s223 + $0x598] sm:$0xff]
        %v406 = vld [vmem:[%s223 + $0x5a0] sm:$0xff]
        %v407 = vld [vmem:[%s223 + $0x5a8] sm:$0xff]
        %v408 = vld [vmem:[%s223 + $0x5b0] sm:$0xff]
        %v409 = vld [vmem:[%s223 + $0x5b8] sm:$0xff]
        %v410 = vld [vmem:[%s223 + $0x5c0] sm:$0xff]
        %v411 = vld [vmem:[%s223 + $0x5c8] sm:$0xff]
        %v412 = vld [vmem:[%s223 + $0x5d0] sm:$0xff]
        %v413 = vld [vmem:[%s223 + $0x5d8] sm:$0xff]
        %v414 = vld [vmem:[%s223 + $0x5e0] sm:$0xff]
        %v415 = vld [vmem:[%s223 + $0x5e8] sm:$0xff]
        %v416 = vld [vmem:[%s223 + $0x5f0] sm:$0xff]
        %v417 = vld [vmem:[%s223 + $0x5f8] sm:$0xff]
        %v418 = vld [vmem:[%s223 + $0x600] sm:$0xff]
        %v419 = vld [vmem:[%s223 + $0x608] sm:$0xff]
        %v420 = vld [vmem:[%s223 + $0x610] sm:$0xff]
        %v421 = vld [vmem:[%s223 + $0x618] sm:$0xff]
        %v422 = vld [vmem:[%s223 + $0x620] sm:$0xff]
        %v423 = vld [vmem:[%s223 + $0x628] sm:$0xff]
        %v424 = vld [vmem:[%s223 + $0x630] sm:$0xff]
        %v425 = vld [vmem:[%s223 + $0x638] sm:$0xff]
        %v426 = vld [vmem:[%s223 + $0x640] sm:$0xff]
        %v427 = vld [vmem:[%s223 + $0x648] sm:$0xff]
        %v428 = vld [vmem:[%s223 + $0x650] sm:$0xff]
        %v429 = vld [vmem:[%s223 + $0x658] sm:$0xff]
        %v430 = vld [vmem:[%s223 + $0x660] sm:$0xff]
        %v431 = vld [vmem:[%s223 + $0x668] sm:$0xff]
        %v432 = vld [vmem:[%s223 + $0x670] sm:$0xff]
        %v433 = vld [vmem:[%s223 + $0x678] sm:$0xff]
        %v434 = vld [vmem:[%s223 + $0x680] sm:$0xff]
        %v435 = vld [vmem:[%s223 + $0x688] sm:$0xff]
        %v436 = vld [vmem:[%s223 + $0x690] sm:$0xff]
        %v437 = vld [vmem:[%s223 + $0x698] sm:$0xff]
        %v438 = vld [vmem:[%s223 + $0x6a0] sm:$0xff]
        %v439 = vld [vmem:[%s223 + $0x6a8] sm:$0xff]
        %v440 = vld [vmem:[%s223 + $0x6b0] sm:$0xff]
        %v441 = vld [vmem:[%s223 + $0x6b8] sm:$0xff]
        %v442 = vld [vmem:[%s223 + $0x6c0] sm:$0xff]
        %v443 = vld [vmem:[%s223 + $0x6c8] sm:$0xff]
        %v444 = vld [vmem:[%s223 + $0x6d0] sm:$0xff]
        %v445 = vld [vmem:[%s223 + $0x6d8] sm:$0xff]
        %v446 = vld [vmem:[%s223 + $0x6e0] sm:$0xff]
        %v447 = vld [vmem:[%s223 + $0x6e8] sm:$0xff]
        %v448 = vld [vmem:[%s223 + $0x6f0] sm:$0xff]
        %v449 = vld [vmem:[%s223 + $0x6f8] sm:$0xff]
        %v450 = vld [vmem:[%s223 + $0x700] sm:$0xff]
        %v451 = vld [vmem:[%s223 + $0x708] sm:$0xff]
        %v452 = vld [vmem:[%s223 + $0x710] sm:$0xff]
        %v453 = vld [vmem:[%s223 + $0x718] sm:$0xff]
        %v454 = vld [vmem:[%s223 + $0x720] sm:$0xff]
        %v455 = vld [vmem:[%s223 + $0x728] sm:$0xff]
        %v456 = vld [vmem:[%s223 + $0x730] sm:$0xff]
        %v457 = vld [vmem:[%s223 + $0x738] sm:$0xff]
        %v458 = vld [vmem:[%s223 + $0x740] sm:$0xff]
        %v459 = vld [vmem:[%s223 + $0x748] sm:$0xff]
        %v460 = vld [vmem:[%s223 + $0x750] sm:$0xff]
        %v461 = vld [vmem:[%s223 + $0x758] sm:$0xff]
        %v462 = vld [vmem:[%s223 + $0x760] sm:$0xff]
        %v463 = vld [vmem:[%s223 + $0x768] sm:$0xff]
        %v464 = vld [vmem:[%s223 + $0x770] sm:$0xff]
        %v465 = vld [vmem:[%s223 + $0x778] sm:$0xff]
        %v466 = vld [vmem:[%s223 + $0x780] sm:$0xff]
        %v467 = vld [vmem:[%s223 + $0x788] sm:$0xff]
        %v468 = vld [vmem:[%s223 + $0x790] sm:$0xff]
        %v469 = vld [vmem:[%s223 + $0x798] sm:$0xff]
        %v470 = vld [vmem:[%s223 + $0x7a0] sm:$0xff]
        %v471 = vld [vmem:[%s223 + $0x7a8] sm:$0xff]
        %v472 = vld [vmem:[%s223 + $0x7b0] sm:$0xff]
        %v473 = vld [vmem:[%s223 + $0x7b8] sm:$0xff]
        %v474 = vld [vmem:[%s223 + $0x7c0] sm:$0xff]
        %v475 = vld [vmem:[%s223 + $0x7c8] sm:$0xff]
        %v476 = vld [vmem:[%s223 + $0x7d0] sm:$0xff]
        %v477 = vld [vmem:[%s223 + $0x7d8] sm:$0xff]
        %v478 = vld [vmem:[%s223 + $0x7e0] sm:$0xff]
        %v479 = vld [vmem:[%s223 + $0x7e8] sm:$0xff]
        %v480 = vld [vmem:[%s223 + $0x7f0] sm:$0xff]
        %v481 = vld [vmem:[%s223 + $0x7f8] sm:$0xff]
        %v482 = vld [vmem:[%s1] sm:$0xff]
        %v483 = vld [vmem:[%s1 + $0x8] sm:$0xff]
        %v484 = vld [vmem:[%s1 + $0x10] sm:$0xff]
        %v485 = vld [vmem:[%s1 + $0x18] sm:$0xff]
        %vm486 = vcmask 64512
        %v488 = vsel %vm486, %v482, 0
        %v491 = vsel %vm486, %v483, 0
        %v494 = vsel %vm486, %v484, 0
        %v497 = vsel %vm486, %v485, 0
        %v500 = vsel %vm486, %v226, 0
        %v503 = vsel %vm486, %v227, 0
        %v506 = vsel %vm486, %v228, 0
        %v509 = vsel %vm486, %v229, 0
        %v512 = vsel %vm486, %v230, 0
        %v515 = vsel %vm486, %v231, 0
        %v518 = vsel %vm486, %v232, 0
        %v521 = vsel %vm486, %v233, 0
        %v524 = vsel %vm486, %v234, 0
        %v527 = vsel %vm486, %v235, 0
        %v530 = vsel %vm486, %v236, 0
        %v533 = vsel %vm486, %v237, 0
        %v536 = vsel %vm486, %v238, 0
        %v539 = vsel %vm486, %v239, 0
        %v542 = vsel %vm486, %v240, 0
        %v545 = vsel %vm486, %v241, 0
        %v548 = vsel %vm486, %v242, 0
        %v551 = vsel %vm486, %v243, 0
        %v554 = vsel %vm486, %v244, 0
        %v557 = vsel %vm486, %v245, 0
        %v560 = vsel %vm486, %v246, 0
        %v563 = vsel %vm486, %v247, 0
        %v566 = vsel %vm486, %v248, 0
        %v569 = vsel %vm486, %v249, 0
        %v572 = vsel %vm486, %v250, 0
        %v575 = vsel %vm486, %v251, 0
        %v578 = vsel %vm486, %v252, 0
        %v581 = vsel %vm486, %v253, 0
        %v584 = vsel %vm486, %v254, 0
        %v587 = vsel %vm486, %v255, 0
        %v590 = vsel %vm486, %v256, 0
        %v593 = vsel %vm486, %v257, 0
        %v596 = vsel %vm486, %v258, 0
        %v599 = vsel %vm486, %v259, 0
        %v602 = vsel %vm486, %v260, 0
        %v605 = vsel %vm486, %v261, 0
        %v608 = vsel %vm486, %v262, 0
        %v611 = vsel %vm486, %v263, 0
        %v614 = vsel %vm486, %v264, 0
        %v617 = vsel %vm486, %v265, 0
        %v620 = vsel %vm486, %v266, 0
        %v623 = vsel %vm486, %v267, 0
        %v626 = vsel %vm486, %v268, 0
        %v629 = vsel %vm486, %v269, 0
        %v632 = vsel %vm486, %v270, 0
        %v635 = vsel %vm486, %v271, 0
        %v638 = vsel %vm486, %v272, 0
        %v641 = vsel %vm486, %v273, 0
        %v644 = vsel %vm486, %v274, 0
        %v647 = vsel %vm486, %v275, 0
        %v650 = vsel %vm486, %v276, 0
        %v653 = vsel %vm486, %v277, 0
        %v656 = vsel %vm486, %v278, 0
        %v659 = vsel %vm486, %v279, 0
        %v662 = vsel %vm486, %v280, 0
        %v665 = vsel %vm486, %v281, 0
        %v668 = vsel %vm486, %v282, 0
        %v671 = vsel %vm486, %v283, 0
        %v674 = vsel %vm486, %v284, 0
        %v677 = vsel %vm486, %v285, 0
        %v680 = vsel %vm486, %v286, 0
        %v683 = vsel %vm486, %v287, 0
        %v686 = vsel %vm486, %v288, 0
        %v689 = vsel %vm486, %v289, 0
        %v692 = vsel %vm486, %v290, 0
        %v695 = vsel %vm486, %v291, 0
        %v698 = vsel %vm486, %v292, 0
        %v701 = vsel %vm486, %v293, 0
        %v704 = vsel %vm486, %v294, 0
        %v707 = vsel %vm486, %v295, 0
        %v710 = vsel %vm486, %v296, 0
        %v713 = vsel %vm486, %v297, 0
        %v716 = vsel %vm486, %v298, 0
        %v719 = vsel %vm486, %v299, 0
        %v722 = vsel %vm486, %v300, 0
        %v725 = vsel %vm486, %v301, 0
        %v728 = vsel %vm486, %v302, 0
        %v731 = vsel %vm486, %v303, 0
        %v734 = vsel %vm486, %v304, 0
        %v737 = vsel %vm486, %v305, 0
        %v740 = vsel %vm486, %v306, 0
        %v743 = vsel %vm486, %v307, 0
        %v746 = vsel %vm486, %v308, 0
        %v749 = vsel %vm486, %v309, 0
        %v752 = vsel %vm486, %v310, 0
        %v755 = vsel %vm486, %v311, 0
        %v758 = vsel %vm486, %v312, 0
        %v761 = vsel %vm486, %v313, 0
        %v764 = vsel %vm486, %v314, 0
        %v767 = vsel %vm486, %v315, 0
        %v770 = vsel %vm486, %v316, 0
        %v773 = vsel %vm486, %v317, 0
        %v776 = vsel %vm486, %v318, 0
        %v779 = vsel %vm486, %v319, 0
        %v782 = vsel %vm486, %v320, 0
        %v785 = vsel %vm486, %v321, 0
        %v788 = vsel %vm486, %v322, 0
        %v791 = vsel %vm486, %v323, 0
        %v794 = vsel %vm486, %v324, 0
        %v797 = vsel %vm486, %v325, 0
        %v800 = vsel %vm486, %v326, 0
        %v803 = vsel %vm486, %v327, 0
        %v806 = vsel %vm486, %v328, 0
        %v809 = vsel %vm486, %v329, 0
        %v812 = vsel %vm486, %v330, 0
        %v815 = vsel %vm486, %v331, 0
        %v818 = vsel %vm486, %v332, 0
        %v821 = vsel %vm486, %v333, 0
        %v824 = vsel %vm486, %v334, 0
        %v827 = vsel %vm486, %v335, 0
        %v830 = vsel %vm486, %v336, 0
        %v833 = vsel %vm486, %v337, 0
        %v836 = vsel %vm486, %v338, 0
        %v839 = vsel %vm486, %v339, 0
        %v842 = vsel %vm486, %v340, 0
        %v845 = vsel %vm486, %v341, 0
        %v848 = vsel %vm486, %v342, 0
        %v851 = vsel %vm486, %v343, 0
        %v854 = vsel %vm486, %v344, 0
        %v857 = vsel %vm486, %v345, 0
        %v860 = vsel %vm486, %v346, 0
        %v863 = vsel %vm486, %v347, 0
        %v866 = vsel %vm486, %v348, 0
        %v869 = vsel %vm486, %v349, 0
        %v872 = vsel %vm486, %v350, 0
        %v875 = vsel %vm486, %v351, 0
        %v878 = vsel %vm486, %v352, 0
        %v881 = vsel %vm486, %v353, 0
        %v884 = vsel %vm486, %v354, 0
        %v887 = vsel %vm486, %v355, 0
        %v890 = vsel %vm486, %v356, 0
        %v893 = vsel %vm486, %v357, 0
        %v896 = vsel %vm486, %v358, 0
        %v899 = vsel %vm486, %v359, 0
        %v902 = vsel %vm486, %v360, 0
        %v905 = vsel %vm486, %v361, 0
        %v908 = vsel %vm486, %v362, 0
        %v911 = vsel %vm486, %v363, 0
        %v914 = vsel %vm486, %v364, 0
        %v917 = vsel %vm486, %v365, 0
        %v920 = vsel %vm486, %v366, 0
        %v923 = vsel %vm486, %v367, 0
        %v926 = vsel %vm486, %v368, 0
        %v929 = vsel %vm486, %v369, 0
        %v932 = vsel %vm486, %v370, 0
        %v935 = vsel %vm486, %v371, 0
        %v938 = vsel %vm486, %v372, 0
        %v941 = vsel %vm486, %v373, 0
        %v944 = vsel %vm486, %v374, 0
        %v947 = vsel %vm486, %v375, 0
        %v950 = vsel %vm486, %v376, 0
        %v953 = vsel %vm486, %v377, 0
        %v956 = vsel %vm486, %v378, 0
        %v959 = vsel %vm486, %v379, 0
        %v962 = vsel %vm486, %v380, 0
        %v965 = vsel %vm486, %v381, 0
        %v968 = vsel %vm486, %v382, 0
        %v971 = vsel %vm486, %v383, 0
        %v974 = vsel %vm486, %v384, 0
        %v977 = vsel %vm486, %v385, 0
        %v980 = vsel %vm486, %v386, 0
        %v983 = vsel %vm486, %v387, 0
        %v986 = vsel %vm486, %v388, 0
        %v989 = vsel %vm486, %v389, 0
        %v992 = vsel %vm486, %v390, 0
        %v995 = vsel %vm486, %v391, 0
        %v998 = vsel %vm486, %v392, 0
        %v1001 = vsel %vm486, %v393, 0
        %v1004 = vsel %vm486, %v394, 0
        %v1007 = vsel %vm486, %v395, 0
        %v1010 = vsel %vm486, %v396, 0
        %v1013 = vsel %vm486, %v397, 0
        %v1016 = vsel %vm486, %v398, 0
        %v1019 = vsel %vm486, %v399, 0
        %v1022 = vsel %vm486, %v400, 0
        %v1025 = vsel %vm486, %v401, 0
        %v1028 = vsel %vm486, %v402, 0
        %v1031 = vsel %vm486, %v403, 0
        %v1034 = vsel %vm486, %v404, 0
        %v1037 = vsel %vm486, %v405, 0
        %v1040 = vsel %vm486, %v406, 0
        %v1043 = vsel %vm486, %v407, 0
        %v1046 = vsel %vm486, %v408, 0
        %v1049 = vsel %vm486, %v409, 0
        %v1052 = vsel %vm486, %v410, 0
        %v1055 = vsel %vm486, %v411, 0
        %v1058 = vsel %vm486, %v412, 0
        %v1061 = vsel %vm486, %v413, 0
        %v1064 = vsel %vm486, %v414, 0
        %v1067 = vsel %vm486, %v415, 0
        %v1070 = vsel %vm486, %v416, 0
        %v1073 = vsel %vm486, %v417, 0
        %v1076 = vsel %vm486, %v418, 0
        %v1079 = vsel %vm486, %v419, 0
        %v1082 = vsel %vm486, %v420, 0
        %v1085 = vsel %vm486, %v421, 0
        %v1088 = vsel %vm486, %v422, 0
        %v1091 = vsel %vm486, %v423, 0
        %v1094 = vsel %vm486, %v424, 0
        %v1097 = vsel %vm486, %v425, 0
        %v1100 = vsel %vm486, %v426, 0
        %v1103 = vsel %vm486, %v427, 0
        %v1106 = vsel %vm486, %v428, 0
        %v1109 = vsel %vm486, %v429, 0
        %v1112 = vsel %vm486, %v430, 0
        %v1115 = vsel %vm486, %v431, 0
        %v1118 = vsel %vm486, %v432, 0
        %v1121 = vsel %vm486, %v433, 0
        %v1124 = vsel %vm486, %v434, 0
        %v1127 = vsel %vm486, %v435, 0
        %v1130 = vsel %vm486, %v436, 0
        %v1133 = vsel %vm486, %v437, 0
        %v1136 = vsel %vm486, %v438, 0
        %v1139 = vsel %vm486, %v439, 0
        %v1142 = vsel %vm486, %v440, 0
        %v1145 = vsel %vm486, %v441, 0
        %v1148 = vsel %vm486, %v442, 0
        %v1151 = vsel %vm486, %v443, 0
        %v1154 = vsel %vm486, %v444, 0
        %v1157 = vsel %vm486, %v445, 0
        %v1160 = vsel %vm486, %v446, 0
        %v1163 = vsel %vm486, %v447, 0
        %v1166 = vsel %vm486, %v448, 0
        %v1169 = vsel %vm486, %v449, 0
        %v1172 = vsel %vm486, %v450, 0
        %v1175 = vsel %vm486, %v451, 0
        %v1178 = vsel %vm486, %v452, 0
        %v1181 = vsel %vm486, %v453, 0
        %v1184 = vsel %vm486, %v454, 0
        %v1187 = vsel %vm486, %v455, 0
        %v1190 = vsel %vm486, %v456, 0
        %v1193 = vsel %vm486, %v457, 0
        %v1196 = vsel %vm486, %v458, 0
        %v1199 = vsel %vm486, %v459, 0
        %v1202 = vsel %vm486, %v460, 0
        %v1205 = vsel %vm486, %v461, 0
        %v1208 = vsel %vm486, %v462, 0
        %v1211 = vsel %vm486, %v463, 0
        %v1214 = vsel %vm486, %v464, 0
        %v1217 = vsel %vm486, %v465, 0
        %v1220 = vsel %vm486, %v466, 0
        %v1223 = vsel %vm486, %v467, 0
        %v1226 = vsel %vm486, %v468, 0
        %v1229 = vsel %vm486, %v469, 0
        %v1232 = vsel %vm486, %v470, 0
        %v1235 = vsel %vm486, %v471, 0
        %v1238 = vsel %vm486, %v472, 0
        %v1241 = vsel %vm486, %v473, 0
        %v1244 = vsel %vm486, %v474, 0
        %v1247 = vsel %vm486, %v475, 0
        %v1250 = vsel %vm486, %v476, 0
        %v1253 = vsel %vm486, %v477, 0
        %v1256 = vsel %vm486, %v478, 0
        %v1259 = vsel %vm486, %v479, 0
        %v1262 = vsel %vm486, %v480, 0
        %v1265 = vsel %vm486, %v481, 0
        %1267 = vmatprep.subr.mxu0 0.0
        %1268 = vmatpush1.xpose.msra.mxu0 %v500
        %1269 = vmatprep.subr.mxu0 0.0
        %1270 = vmatpush1.xpose.msra.mxu0 %v503
        %1271 = vmatprep.subr.mxu0 0.0
        %1272 = vmatpush1.xpose.msra.mxu0 %v506
        %1273 = vmatprep.subr.mxu0 0.0
        %1274 = vmatpush1.xpose.msra.mxu0 %v509
        %1275 = vmatprep.subr.mxu0 0.0
        %1276 = vmatpush1.xpose.msra.mxu0 %v512
        %1277 = vmatprep.subr.mxu0 0.0
        %1278 = vmatpush1.xpose.msra.mxu0 %v515
        %1279 = vmatprep.subr.mxu0 0.0
        %1280 = vmatpush1.xpose.msra.mxu0 %v518
        %1281 = vmatprep.subr.mxu0 0.0
        %1282 = vmatpush1.xpose.msra.mxu0 %v521
        %1283 = vmatprep.subr.mxu0 0.0
        %1284 = vmatpush1.xpose.msra.mxu0 %v524
        %1285 = vmatprep.subr.mxu0 0.0
        %1286 = vmatpush1.xpose.msra.mxu0 %v527
        %1287 = vmatprep.subr.mxu0 0.0
        %1288 = vmatpush1.xpose.msra.mxu0 %v530
        %1289 = vmatprep.subr.mxu0 0.0
        %1290 = vmatpush1.xpose.msra.mxu0 %v533
        %1291 = vmatprep.subr.mxu0 0.0
        %1292 = vmatpush1.xpose.msra.mxu0 %v536
        %1293 = vmatprep.subr.mxu0 0.0
        %1294 = vmatpush1.xpose.msra.mxu0 %v539
        %1295 = vmatprep.subr.mxu0 0.0
        %1296 = vmatpush1.xpose.msra.mxu0 %v542
        %1297 = vmatprep.subr.mxu0 0.0
        %1298 = vmatpush1.xpose.msra.mxu0 %v545
        %1299 = vmatprep.subr.mxu0 0.0
        %1300 = vmatpush1.xpose.msra.mxu0 %v548
        %1301 = vmatprep.subr.mxu0 0.0
        %1302 = vmatpush1.xpose.msra.mxu0 %v551
        %1303 = vmatprep.subr.mxu0 0.0
        %1304 = vmatpush1.xpose.msra.mxu0 %v554
        %1305 = vmatprep.subr.mxu0 0.0
        %1306 = vmatpush1.xpose.msra.mxu0 %v557
        %1307 = vmatprep.subr.mxu0 0.0
        %1308 = vmatpush1.xpose.msra.mxu0 %v560
        %1309 = vmatprep.subr.mxu0 0.0
        %1310 = vmatpush1.xpose.msra.mxu0 %v563
        %1311 = vmatprep.subr.mxu0 0.0
        %1312 = vmatpush1.xpose.msra.mxu0 %v566
        %1313 = vmatprep.subr.mxu0 0.0
        %1314 = vmatpush1.xpose.msra.mxu0 %v569
        %1315 = vmatprep.subr.mxu0 0.0
        %1316 = vmatpush1.xpose.msra.mxu0 %v572
        %1317 = vmatprep.subr.mxu0 0.0
        %1318 = vmatpush1.xpose.msra.mxu0 %v575
        %1319 = vmatprep.subr.mxu0 0.0
        %1320 = vmatpush1.xpose.msra.mxu0 %v578
        %1321 = vmatprep.subr.mxu0 0.0
        %1322 = vmatpush1.xpose.msra.mxu0 %v581
        %1323 = vmatprep.subr.mxu0 0.0
        %1324 = vmatpush1.xpose.msra.mxu0 %v584
        %1325 = vmatprep.subr.mxu0 0.0
        %1326 = vmatpush1.xpose.msra.mxu0 %v587
        %1327 = vmatprep.subr.mxu0 0.0
        %1328 = vmatpush1.xpose.msra.mxu0 %v590
        %1329 = vmatprep.subr.mxu0 0.0
        %1330 = vmatpush1.xpose.msra.mxu0 %v593
        %1331 = vmatprep.mubr.f32.mxu0 0.0
        %1332 = vmatmul.mubr.f32.gmra.mrb[0].mxu0 %v488
        %v1333 = vpop.f32.mrb[0].mxu0
        %v1334 = vadd.f32 0.0, %v1333
        %v1335 = vpop.f32.mrb[0].mxu0
        %v1336 = vadd.f32 0.0, %v1335
        %1337 = vmatprep.mubr.f32.mxu0 0.0
        %1338 = vmatmul.mubr.f32.gmra.mrb[0].mxu0 %v491
        %v1339 = vpop.f32.mrb[0].mxu0
        %v1340 = vadd.f32 0.0, %v1339
        %v1341 = vpop.f32.mrb[0].mxu0
        %v1342 = vadd.f32 0.0, %v1341
        %1343 = vmatprep.mubr.f32.mxu0 0.0
        %1344 = vmatmul.mubr.f32.gmra.mrb[0].mxu0 %v494
        %v1345 = vpop.f32.mrb[0].mxu0
        %v1346 = vadd.f32 0.0, %v1345
        %v1347 = vpop.f32.mrb[0].mxu0
        %v1348 = vadd.f32 0.0, %v1347
        %1349 = vmatprep.mubr.f32.mxu0 0.0
        %1350 = vmatmul.mubr.f32.gmra.mrb[0].mxu0 %v497
        %v1351 = vpop.f32.mrb[0].mxu0
        %v1352 = vadd.f32 0.0, %v1351
        %v1353 = vpop.f32.mrb[0].mxu0
        %v1354 = vadd.f32 0.0, %v1353
        %1355 = vdwg.mxu0
        %1356 = vmatprep.subr.mxu0 0.0
        %1357 = vmatpush1.xpose.msra.mxu0 %v596
        %1358 = vmatprep.subr.mxu0 0.0
        %1359 = vmatpush1.xpose.msra.mxu0 %v599
        %1360 = vmatprep.subr.mxu0 0.0
        %1361 = vmatpush1.xpose.msra.mxu0 %v602
        %1362 = vmatprep.subr.mxu0 0.0
        %1363 = vmatpush1.xpose.msra.mxu0 %v605
        %1364 = vmatprep.subr.mxu0 0.0
        %1365 = vmatpush1.xpose.msra.mxu0 %v608
        %1366 = vmatprep.subr.mxu0 0.0
        %1367 = vmatpush1.xpose.msra.mxu0 %v611
        %1368 = vmatprep.subr.mxu0 0.0
        %1369 = vmatpush1.xpose.msra.mxu0 %v614
        %1370 = vmatprep.subr.mxu0 0.0
        %1371 = vmatpush1.xpose.msra.mxu0 %v617
        %1372 = vmatprep.subr.mxu0 0.0
        %1373 = vmatpush1.xpose.msra.mxu0 %v620
        %1374 = vmatprep.subr.mxu0 0.0
        %1375 = vmatpush1.xpose.msra.mxu0 %v623
        %1376 = vmatprep.subr.mxu0 0.0
        %1377 = vmatpush1.xpose.msra.mxu0 %v626
        %1378 = vmatprep.subr.mxu0 0.0
        %1379 = vmatpush1.xpose.msra.mxu0 %v629
        %1380 = vmatprep.subr.mxu0 0.0
        %1381 = vmatpush1.xpose.msra.mxu0 %v632
        %1382 = vmatprep.subr.mxu0 0.0
        %1383 = vmatpush1.xpose.msra.mxu0 %v635
        %1384 = vmatprep.subr.mxu0 0.0
        %1385 = vmatpush1.xpose.msra.mxu0 %v638
        %1386 = vmatprep.subr.mxu0 0.0
        %1387 = vmatpush1.xpose.msra.mxu0 %v641
        %1388 = vmatprep.subr.mxu0 0.0
        %1389 = vmatpush1.xpose.msra.mxu0 %v644
        %1390 = vmatprep.subr.mxu0 0.0
        %1391 = vmatpush1.xpose.msra.mxu0 %v647
        %1392 = vmatprep.subr.mxu0 0.0
        %1393 = vmatpush1.xpose.msra.mxu0 %v650
        %1394 = vmatprep.subr.mxu0 0.0
        %1395 = vmatpush1.xpose.msra.mxu0 %v653
        %1396 = vmatprep.subr.mxu0 0.0
        %1397 = vmatpush1.xpose.msra.mxu0 %v656
        %1398 = vmatprep.subr.mxu0 0.0
        %1399 = vmatpush1.xpose.msra.mxu0 %v659
        %1400 = vmatprep.subr.mxu0 0.0
        %1401 = vmatpush1.xpose.msra.mxu0 %v662
        %1402 = vmatprep.subr.mxu0 0.0
        %1403 = vmatpush1.xpose.msra.mxu0 %v665
        %1404 = vmatprep.subr.mxu0 0.0
        %1405 = vmatpush1.xpose.msra.mxu0 %v668
        %1406 = vmatprep.subr.mxu0 0.0
        %1407 = vmatpush1.xpose.msra.mxu0 %v671
        %1408 = vmatprep.subr.mxu0 0.0
        %1409 = vmatpush1.xpose.msra.mxu0 %v674
        %1410 = vmatprep.subr.mxu0 0.0
        %1411 = vmatpush1.xpose.msra.mxu0 %v677
        %1412 = vmatprep.subr.mxu0 0.0
        %1413 = vmatpush1.xpose.msra.mxu0 %v680
        %1414 = vmatprep.subr.mxu0 0.0
        %1415 = vmatpush1.xpose.msra.mxu0 %v683
        %1416 = vmatprep.subr.mxu0 0.0
        %1417 = vmatpush1.xpose.msra.mxu0 %v686
        %1418 = vmatprep.subr.mxu0 0.0
        %1419 = vmatpush1.xpose.msra.mxu0 %v689
        %1420 = vmatprep.mubr.f32.mxu0 0.0
        %1421 = vmatmul.mubr.f32.gmra.mrb[0].mxu0 %v488
        %v1422 = vpop.f32.mrb[0].mxu0
        %v1423 = vadd.f32 0.0, %v1422
        %v1424 = vpop.f32.mrb[0].mxu0
        %v1425 = vadd.f32 0.0, %v1424
        %1426 = vmatprep.mubr.f32.mxu0 0.0
        %1427 = vmatmul.mubr.f32.gmra.mrb[0].mxu0 %v491
        %v1428 = vpop.f32.mrb[0].mxu0
        %v1429 = vadd.f32 0.0, %v1428
        %v1430 = vpop.f32.mrb[0].mxu0
        %v1431 = vadd.f32 0.0, %v1430
        %1432 = vmatprep.mubr.f32.mxu0 0.0
        %1433 = vmatmul.mubr.f32.gmra.mrb[0].mxu0 %v494
        %v1434 = vpop.f32.mrb[0].mxu0
        %v1435 = vadd.f32 0.0, %v1434
        %v1436 = vpop.f32.mrb[0].mxu0
        %v1437 = vadd.f32 0.0, %v1436
        %1438 = vmatprep.mubr.f32.mxu0 0.0
        %1439 = vmatmul.mubr.f32.gmra.mrb[0].mxu0 %v497
        %v1440 = vpop.f32.mrb[0].mxu0
        %v1441 = vadd.f32 0.0, %v1440
        %v1442 = vpop.f32.mrb[0].mxu0
        %v1443 = vadd.f32 0.0, %v1442
        %1444 = vdwg.mxu0
        %1445 = vmatprep.subr.mxu0 0.0
        %1446 = vmatpush1.xpose.msra.mxu0 %v692
        %1447 = vmatprep.subr.mxu0 0.0
        %1448 = vmatpush1.xpose.msra.mxu0 %v695
        %1449 = vmatprep.subr.mxu0 0.0
        %1450 = vmatpush1.xpose.msra.mxu0 %v698
        %1451 = vmatprep.subr.mxu0 0.0
        %1452 = vmatpush1.xpose.msra.mxu0 %v701
        %1453 = vmatprep.subr.mxu0 0.0
        %1454 = vmatpush1.xpose.msra.mxu0 %v704
        %1455 = vmatprep.subr.mxu0 0.0
        %1456 = vmatpush1.xpose.msra.mxu0 %v707
        %1457 = vmatprep.subr.mxu0 0.0
        %1458 = vmatpush1.xpose.msra.mxu0 %v710
        %1459 = vmatprep.subr.mxu0 0.0
        %1460 = vmatpush1.xpose.msra.mxu0 %v713
        %1461 = vmatprep.subr.mxu0 0.0
        %1462 = vmatpush1.xpose.msra.mxu0 %v716
        %1463 = vmatprep.subr.mxu0 0.0
        %1464 = vmatpush1.xpose.msra.mxu0 %v719
        %1465 = vmatprep.subr.mxu0 0.0
        %1466 = vmatpush1.xpose.msra.mxu0 %v722
        %1467 = vmatprep.subr.mxu0 0.0
        %1468 = vmatpush1.xpose.msra.mxu0 %v725
        %1469 = vmatprep.subr.mxu0 0.0
        %1470 = vmatpush1.xpose.msra.mxu0 %v728
        %1471 = vmatprep.subr.mxu0 0.0
        %1472 = vmatpush1.xpose.msra.mxu0 %v731
        %1473 = vmatprep.subr.mxu0 0.0
        %1474 = vmatpush1.xpose.msra.mxu0 %v734
        %1475 = vmatprep.subr.mxu0 0.0
        %1476 = vmatpush1.xpose.msra.mxu0 %v737
        %1477 = vmatprep.subr.mxu0 0.0
        %1478 = vmatpush1.xpose.msra.mxu0 %v740
        %1479 = vmatprep.subr.mxu0 0.0
        %1480 = vmatpush1.xpose.msra.mxu0 %v743
        %1481 = vmatprep.subr.mxu0 0.0
        %1482 = vmatpush1.xpose.msra.mxu0 %v746
        %1483 = vmatprep.subr.mxu0 0.0
        %1484 = vmatpush1.xpose.msra.mxu0 %v749
        %1485 = vmatprep.subr.mxu0 0.0
        %1486 = vmatpush1.xpose.msra.mxu0 %v752
        %1487 = vmatprep.subr.mxu0 0.0
        %1488 = vmatpush1.xpose.msra.mxu0 %v755
        %1489 = vmatprep.subr.mxu0 0.0
        %1490 = vmatpush1.xpose.msra.mxu0 %v758
        %1491 = vmatprep.subr.mxu0 0.0
        %1492 = vmatpush1.xpose.msra.mxu0 %v761
        %1493 = vmatprep.subr.mxu0 0.0
        %1494 = vmatpush1.xpose.msra.mxu0 %v764
        %1495 = vmatprep.subr.mxu0 0.0
        %1496 = vmatpush1.xpose.msra.mxu0 %v767
        %1497 = vmatprep.subr.mxu0 0.0
        %1498 = vmatpush1.xpose.msra.mxu0 %v770
        %1499 = vmatprep.subr.mxu0 0.0
        %1500 = vmatpush1.xpose.msra.mxu0 %v773
        %1501 = vmatprep.subr.mxu0 0.0
        %1502 = vmatpush1.xpose.msra.mxu0 %v776
        %1503 = vmatprep.subr.mxu0 0.0
        %1504 = vmatpush1.xpose.msra.mxu0 %v779
        %1505 = vmatprep.subr.mxu0 0.0
        %1506 = vmatpush1.xpose.msra.mxu0 %v782
        %1507 = vmatprep.subr.mxu0 0.0
        %1508 = vmatpush1.xpose.msra.mxu0 %v785
        %1509 = vmatprep.mubr.f32.mxu0 0.0
        %1510 = vmatmul.mubr.f32.gmra.mrb[0].mxu0 %v488
        %v1511 = vpop.f32.mrb[0].mxu0
        %v1512 = vadd.f32 0.0, %v1511
        %v1513 = vpop.f32.mrb[0].mxu0
        %v1514 = vadd.f32 0.0, %v1513
        %1515 = vmatprep.mubr.f32.mxu0 0.0
        %1516 = vmatmul.mubr.f32.gmra.mrb[0].mxu0 %v491
        %v1517 = vpop.f32.mrb[0].mxu0
        %v1518 = vadd.f32 0.0, %v1517
        %v1519 = vpop.f32.mrb[0].mxu0
        %v1520 = vadd.f32 0.0, %v1519
        %1521 = vmatprep.mubr.f32.mxu0 0.0
        %1522 = vmatmul.mubr.f32.gmra.mrb[0].mxu0 %v494
        %v1523 = vpop.f32.mrb[0].mxu0
        %v1524 = vadd.f32 0.0, %v1523
        %v1525 = vpop.f32.mrb[0].mxu0
        %v1526 = vadd.f32 0.0, %v1525
        %1527 = vmatprep.mubr.f32.mxu0 0.0
        %1528 = vmatmul.mubr.f32.gmra.mrb[0].mxu0 %v497
        %v1529 = vpop.f32.mrb[0].mxu0
        %v1530 = vadd.f32 0.0, %v1529
        %v1531 = vpop.f32.mrb[0].mxu0
        %v1532 = vadd.f32 0.0, %v1531
        %1533 = vdwg.mxu0
        %1534 = vmatprep.subr.mxu0 0.0
        %1535 = vmatpush1.xpose.msra.mxu0 %v788
        %1536 = vmatprep.subr.mxu0 0.0
        %1537 = vmatpush1.xpose.msra.mxu0 %v791
        %1538 = vmatprep.subr.mxu0 0.0
        %1539 = vmatpush1.xpose.msra.mxu0 %v794
        %1540 = vmatprep.subr.mxu0 0.0
        %1541 = vmatpush1.xpose.msra.mxu0 %v797
        %1542 = vmatprep.subr.mxu0 0.0
        %1543 = vmatpush1.xpose.msra.mxu0 %v800
        %1544 = vmatprep.subr.mxu0 0.0
        %1545 = vmatpush1.xpose.msra.mxu0 %v803
        %1546 = vmatprep.subr.mxu0 0.0
        %1547 = vmatpush1.xpose.msra.mxu0 %v806
        %1548 = vmatprep.subr.mxu0 0.0
        %1549 = vmatpush1.xpose.msra.mxu0 %v809
        %1550 = vmatprep.subr.mxu0 0.0
        %1551 = vmatpush1.xpose.msra.mxu0 %v812
        %1552 = vmatprep.subr.mxu0 0.0
        %1553 = vmatpush1.xpose.msra.mxu0 %v815
        %1554 = vmatprep.subr.mxu0 0.0
        %1555 = vmatpush1.xpose.msra.mxu0 %v818
        %1556 = vmatprep.subr.mxu0 0.0
        %1557 = vmatpush1.xpose.msra.mxu0 %v821
        %1558 = vmatprep.subr.mxu0 0.0
        %1559 = vmatpush1.xpose.msra.mxu0 %v824
        %1560 = vmatprep.subr.mxu0 0.0
        %1561 = vmatpush1.xpose.msra.mxu0 %v827
        %1562 = vmatprep.subr.mxu0 0.0
        %1563 = vmatpush1.xpose.msra.mxu0 %v830
        %1564 = vmatprep.subr.mxu0 0.0
        %1565 = vmatpush1.xpose.msra.mxu0 %v833
        %1566 = vmatprep.subr.mxu0 0.0
        %1567 = vmatpush1.xpose.msra.mxu0 %v836
        %1568 = vmatprep.subr.mxu0 0.0
        %1569 = vmatpush1.xpose.msra.mxu0 %v839
        %1570 = vmatprep.subr.mxu0 0.0
        %1571 = vmatpush1.xpose.msra.mxu0 %v842
        %1572 = vmatprep.subr.mxu0 0.0
        %1573 = vmatpush1.xpose.msra.mxu0 %v845
        %1574 = vmatprep.subr.mxu0 0.0
        %1575 = vmatpush1.xpose.msra.mxu0 %v848
        %1576 = vmatprep.subr.mxu0 0.0
        %1577 = vmatpush1.xpose.msra.mxu0 %v851
        %1578 = vmatprep.subr.mxu0 0.0
        %1579 = vmatpush1.xpose.msra.mxu0 %v854
        %1580 = vmatprep.subr.mxu0 0.0
        %1581 = vmatpush1.xpose.msra.mxu0 %v857
        %1582 = vmatprep.subr.mxu0 0.0
        %1583 = vmatpush1.xpose.msra.mxu0 %v860
        %1584 = vmatprep.subr.mxu0 0.0
        %1585 = vmatpush1.xpose.msra.mxu0 %v863
        %1586 = vmatprep.subr.mxu0 0.0
        %1587 = vmatpush1.xpose.msra.mxu0 %v866
        %1588 = vmatprep.subr.mxu0 0.0
        %1589 = vmatpush1.xpose.msra.mxu0 %v869
        %1590 = vmatprep.subr.mxu0 0.0
        %1591 = vmatpush1.xpose.msra.mxu0 %v872
        %1592 = vmatprep.subr.mxu0 0.0
        %1593 = vmatpush1.xpose.msra.mxu0 %v875
        %1594 = vmatprep.subr.mxu0 0.0
        %1595 = vmatpush1.xpose.msra.mxu0 %v878
        %1596 = vmatprep.subr.mxu0 0.0
        %1597 = vmatpush1.xpose.msra.mxu0 %v881
        %1598 = vmatprep.mubr.f32.mxu0 0.0
        %1599 = vmatmul.mubr.f32.gmra.mrb[0].mxu0 %v488
        %v1600 = vpop.f32.mrb[0].mxu0
        %v1601 = vadd.f32 0.0, %v1600
        %v1602 = vpop.f32.mrb[0].mxu0
        %v1603 = vadd.f32 0.0, %v1602
        %1604 = vmatprep.mubr.f32.mxu0 0.0
        %1605 = vmatmul.mubr.f32.gmra.mrb[0].mxu0 %v491
        %v1606 = vpop.f32.mrb[0].mxu0
        %v1607 = vadd.f32 0.0, %v1606
        %v1608 = vpop.f32.mrb[0].mxu0
        %v1609 = vadd.f32 0.0, %v1608
        %1610 = vmatprep.mubr.f32.mxu0 0.0
        %1611 = vmatmul.mubr.f32.gmra.mrb[0].mxu0 %v494
        %v1612 = vpop.f32.mrb[0].mxu0
        %v1613 = vadd.f32 0.0, %v1612
        %v1614 = vpop.f32.mrb[0].mxu0
        %v1615 = vadd.f32 0.0, %v1614
        %1616 = vmatprep.mubr.f32.mxu0 0.0
        %1617 = vmatmul.mubr.f32.gmra.mrb[0].mxu0 %v497
        %v1618 = vpop.f32.mrb[0].mxu0
        %v1619 = vadd.f32 0.0, %v1618
        %v1620 = vpop.f32.mrb[0].mxu0
        %v1621 = vadd.f32 0.0, %v1620
        %1622 = vdwg.mxu0
        %1623 = vmatprep.subr.mxu0 0.0
        %1624 = vmatpush1.xpose.msra.mxu0 %v884
        %1625 = vmatprep.subr.mxu0 0.0
        %1626 = vmatpush1.xpose.msra.mxu0 %v887
        %1627 = vmatprep.subr.mxu0 0.0
        %1628 = vmatpush1.xpose.msra.mxu0 %v890
        %1629 = vmatprep.subr.mxu0 0.0
        %1630 = vmatpush1.xpose.msra.mxu0 %v893
        %1631 = vmatprep.subr.mxu0 0.0
        %1632 = vmatpush1.xpose.msra.mxu0 %v896
        %1633 = vmatprep.subr.mxu0 0.0
        %1634 = vmatpush1.xpose.msra.mxu0 %v899
        %1635 = vmatprep.subr.mxu0 0.0
        %1636 = vmatpush1.xpose.msra.mxu0 %v902
        %1637 = vmatprep.subr.mxu0 0.0
        %1638 = vmatpush1.xpose.msra.mxu0 %v905
        %1639 = vmatprep.subr.mxu0 0.0
        %1640 = vmatpush1.xpose.msra.mxu0 %v908
        %1641 = vmatprep.subr.mxu0 0.0
        %1642 = vmatpush1.xpose.msra.mxu0 %v911
        %1643 = vmatprep.subr.mxu0 0.0
        %1644 = vmatpush1.xpose.msra.mxu0 %v914
        %1645 = vmatprep.subr.mxu0 0.0
        %1646 = vmatpush1.xpose.msra.mxu0 %v917
        %1647 = vmatprep.subr.mxu0 0.0
        %1648 = vmatpush1.xpose.msra.mxu0 %v920
        %1649 = vmatprep.subr.mxu0 0.0
        %1650 = vmatpush1.xpose.msra.mxu0 %v923
        %1651 = vmatprep.subr.mxu0 0.0
        %1652 = vmatpush1.xpose.msra.mxu0 %v926
        %1653 = vmatprep.subr.mxu0 0.0
        %1654 = vmatpush1.xpose.msra.mxu0 %v929
        %1655 = vmatprep.subr.mxu0 0.0
        %1656 = vmatpush1.xpose.msra.mxu0 %v932
        %1657 = vmatprep.subr.mxu0 0.0
        %1658 = vmatpush1.xpose.msra.mxu0 %v935
        %1659 = vmatprep.subr.mxu0 0.0
        %1660 = vmatpush1.xpose.msra.mxu0 %v938
        %1661 = vmatprep.subr.mxu0 0.0
        %1662 = vmatpush1.xpose.msra.mxu0 %v941
        %1663 = vmatprep.subr.mxu0 0.0
        %1664 = vmatpush1.xpose.msra.mxu0 %v944
        %1665 = vmatprep.subr.mxu0 0.0
        %1666 = vmatpush1.xpose.msra.mxu0 %v947
        %1667 = vmatprep.subr.mxu0 0.0
        %1668 = vmatpush1.xpose.msra.mxu0 %v950
        %1669 = vmatprep.subr.mxu0 0.0
        %1670 = vmatpush1.xpose.msra.mxu0 %v953
        %1671 = vmatprep.subr.mxu0 0.0
        %1672 = vmatpush1.xpose.msra.mxu0 %v956
        %1673 = vmatprep.subr.mxu0 0.0
        %1674 = vmatpush1.xpose.msra.mxu0 %v959
        %1675 = vmatprep.subr.mxu0 0.0
        %1676 = vmatpush1.xpose.msra.mxu0 %v962
        %1677 = vmatprep.subr.mxu0 0.0
        %1678 = vmatpush1.xpose.msra.mxu0 %v965
        %1679 = vmatprep.subr.mxu0 0.0
        %1680 = vmatpush1.xpose.msra.mxu0 %v968
        %1681 = vmatprep.subr.mxu0 0.0
        %1682 = vmatpush1.xpose.msra.mxu0 %v971
        %1683 = vmatprep.subr.mxu0 0.0
        %1684 = vmatpush1.xpose.msra.mxu0 %v974
        %1685 = vmatprep.subr.mxu0 0.0
        %1686 = vmatpush1.xpose.msra.mxu0 %v977
        %1687 = vmatprep.mubr.f32.mxu0 0.0
        %1688 = vmatmul.mubr.f32.gmra.mrb[0].mxu0 %v488
        %v1689 = vpop.f32.mrb[0].mxu0
        %v1690 = vadd.f32 0.0, %v1689
        %v1691 = vpop.f32.mrb[0].mxu0
        %v1692 = vadd.f32 0.0, %v1691
        %1693 = vmatprep.mubr.f32.mxu0 0.0
        %1694 = vmatmul.mubr.f32.gmra.mrb[0].mxu0 %v491
        %v1695 = vpop.f32.mrb[0].mxu0
        %v1696 = vadd.f32 0.0, %v1695
        %v1697 = vpop.f32.mrb[0].mxu0
        %v1698 = vadd.f32 0.0, %v1697
        %1699 = vmatprep.mubr.f32.mxu0 0.0
        %1700 = vmatmul.mubr.f32.gmra.mrb[0].mxu0 %v494
        %v1701 = vpop.f32.mrb[0].mxu0
        %v1702 = vadd.f32 0.0, %v1701
        %v1703 = vpop.f32.mrb[0].mxu0
        %v1704 = vadd.f32 0.0, %v1703
        %1705 = vmatprep.mubr.f32.mxu0 0.0
        %1706 = vmatmul.mubr.f32.gmra.mrb[0].mxu0 %v497
        %v1707 = vpop.f32.mrb[0].mxu0
        %v1708 = vadd.f32 0.0, %v1707
        %v1709 = vpop.f32.mrb[0].mxu0
        %v1710 = vadd.f32 0.0, %v1709
        %1711 = vdwg.mxu0
        %1712 = vmatprep.subr.mxu0 0.0
        %1713 = vmatpush1.xpose.msra.mxu0 %v980
        %1714 = vmatprep.subr.mxu0 0.0
        %1715 = vmatpush1.xpose.msra.mxu0 %v983
        %1716 = vmatprep.subr.mxu0 0.0
        %1717 = vmatpush1.xpose.msra.mxu0 %v986
        %1718 = vmatprep.subr.mxu0 0.0
        %1719 = vmatpush1.xpose.msra.mxu0 %v989
        %1720 = vmatprep.subr.mxu0 0.0
        %1721 = vmatpush1.xpose.msra.mxu0 %v992
        %1722 = vmatprep.subr.mxu0 0.0
        %1723 = vmatpush1.xpose.msra.mxu0 %v995
        %1724 = vmatprep.subr.mxu0 0.0
        %1725 = vmatpush1.xpose.msra.mxu0 %v998
        %1726 = vmatprep.subr.mxu0 0.0
        %1727 = vmatpush1.xpose.msra.mxu0 %v1001
        %1728 = vmatprep.subr.mxu0 0.0
        %1729 = vmatpush1.xpose.msra.mxu0 %v1004
        %1730 = vmatprep.subr.mxu0 0.0
        %1731 = vmatpush1.xpose.msra.mxu0 %v1007
        %1732 = vmatprep.subr.mxu0 0.0
        %1733 = vmatpush1.xpose.msra.mxu0 %v1010
        %1734 = vmatprep.subr.mxu0 0.0
        %1735 = vmatpush1.xpose.msra.mxu0 %v1013
        %1736 = vmatprep.subr.mxu0 0.0
        %1737 = vmatpush1.xpose.msra.mxu0 %v1016
        %1738 = vmatprep.subr.mxu0 0.0
        %1739 = vmatpush1.xpose.msra.mxu0 %v1019
        %1740 = vmatprep.subr.mxu0 0.0
        %1741 = vmatpush1.xpose.msra.mxu0 %v1022
        %1742 = vmatprep.subr.mxu0 0.0
        %1743 = vmatpush1.xpose.msra.mxu0 %v1025
        %1744 = vmatprep.subr.mxu0 0.0
        %1745 = vmatpush1.xpose.msra.mxu0 %v1028
        %1746 = vmatprep.subr.mxu0 0.0
        %1747 = vmatpush1.xpose.msra.mxu0 %v1031
        %1748 = vmatprep.subr.mxu0 0.0
        %1749 = vmatpush1.xpose.msra.mxu0 %v1034
        %1750 = vmatprep.subr.mxu0 0.0
        %1751 = vmatpush1.xpose.msra.mxu0 %v1037
        %1752 = vmatprep.subr.mxu0 0.0
        %1753 = vmatpush1.xpose.msra.mxu0 %v1040
        %1754 = vmatprep.subr.mxu0 0.0
        %1755 = vmatpush1.xpose.msra.mxu0 %v1043
        %1756 = vmatprep.subr.mxu0 0.0
        %1757 = vmatpush1.xpose.msra.mxu0 %v1046
        %1758 = vmatprep.subr.mxu0 0.0
        %1759 = vmatpush1.xpose.msra.mxu0 %v1049
        %1760 = vmatprep.subr.mxu0 0.0
        %1761 = vmatpush1.xpose.msra.mxu0 %v1052
        %1762 = vmatprep.subr.mxu0 0.0
        %1763 = vmatpush1.xpose.msra.mxu0 %v1055
        %1764 = vmatprep.subr.mxu0 0.0
        %1765 = vmatpush1.xpose.msra.mxu0 %v1058
        %1766 = vmatprep.subr.mxu0 0.0
        %1767 = vmatpush1.xpose.msra.mxu0 %v1061
        %1768 = vmatprep.subr.mxu0 0.0
        %1769 = vmatpush1.xpose.msra.mxu0 %v1064
        %1770 = vmatprep.subr.mxu0 0.0
        %1771 = vmatpush1.xpose.msra.mxu0 %v1067
        %1772 = vmatprep.subr.mxu0 0.0
        %1773 = vmatpush1.xpose.msra.mxu0 %v1070
        %1774 = vmatprep.subr.mxu0 0.0
        %1775 = vmatpush1.xpose.msra.mxu0 %v1073
        %1776 = vmatprep.mubr.f32.mxu0 0.0
        %1777 = vmatmul.mubr.f32.gmra.mrb[0].mxu0 %v488
        %v1778 = vpop.f32.mrb[0].mxu0
        %v1779 = vadd.f32 0.0, %v1778
        %v1780 = vpop.f32.mrb[0].mxu0
        %v1781 = vadd.f32 0.0, %v1780
        %1782 = vmatprep.mubr.f32.mxu0 0.0
        %1783 = vmatmul.mubr.f32.gmra.mrb[0].mxu0 %v491
        %v1784 = vpop.f32.mrb[0].mxu0
        %v1785 = vadd.f32 0.0, %v1784
        %v1786 = vpop.f32.mrb[0].mxu0
        %v1787 = vadd.f32 0.0, %v1786
        %1788 = vmatprep.mubr.f32.mxu0 0.0
        %1789 = vmatmul.mubr.f32.gmra.mrb[0].mxu0 %v494
        %v1790 = vpop.f32.mrb[0].mxu0
        %v1791 = vadd.f32 0.0, %v1790
        %v1792 = vpop.f32.mrb[0].mxu0
        %v1793 = vadd.f32 0.0, %v1792
        %1794 = vmatprep.mubr.f32.mxu0 0.0
        %1795 = vmatmul.mubr.f32.gmra.mrb[0].mxu0 %v497
        %v1796 = vpop.f32.mrb[0].mxu0
        %v1797 = vadd.f32 0.0, %v1796
        %v1798 = vpop.f32.mrb[0].mxu0
        %v1799 = vadd.f32 0.0, %v1798
        %1800 = vdwg.mxu0
        %1801 = vmatprep.subr.mxu0 0.0
        %1802 = vmatpush1.xpose.msra.mxu0 %v1076
        %1803 = vmatprep.subr.mxu0 0.0
        %1804 = vmatpush1.xpose.msra.mxu0 %v1079
        %1805 = vmatprep.subr.mxu0 0.0
        %1806 = vmatpush1.xpose.msra.mxu0 %v1082
        %1807 = vmatprep.subr.mxu0 0.0
        %1808 = vmatpush1.xpose.msra.mxu0 %v1085
        %1809 = vmatprep.subr.mxu0 0.0
        %1810 = vmatpush1.xpose.msra.mxu0 %v1088
        %1811 = vmatprep.subr.mxu0 0.0
        %1812 = vmatpush1.xpose.msra.mxu0 %v1091
        %1813 = vmatprep.subr.mxu0 0.0
        %1814 = vmatpush1.xpose.msra.mxu0 %v1094
        %1815 = vmatprep.subr.mxu0 0.0
        %1816 = vmatpush1.xpose.msra.mxu0 %v1097
        %1817 = vmatprep.subr.mxu0 0.0
        %1818 = vmatpush1.xpose.msra.mxu0 %v1100
        %1819 = vmatprep.subr.mxu0 0.0
        %1820 = vmatpush1.xpose.msra.mxu0 %v1103
        %1821 = vmatprep.subr.mxu0 0.0
        %1822 = vmatpush1.xpose.msra.mxu0 %v1106
        %1823 = vmatprep.subr.mxu0 0.0
        %1824 = vmatpush1.xpose.msra.mxu0 %v1109
        %1825 = vmatprep.subr.mxu0 0.0
        %1826 = vmatpush1.xpose.msra.mxu0 %v1112
        %1827 = vmatprep.subr.mxu0 0.0
        %1828 = vmatpush1.xpose.msra.mxu0 %v1115
        %1829 = vmatprep.subr.mxu0 0.0
        %1830 = vmatpush1.xpose.msra.mxu0 %v1118
        %1831 = vmatprep.subr.mxu0 0.0
        %1832 = vmatpush1.xpose.msra.mxu0 %v1121
        %1833 = vmatprep.subr.mxu0 0.0
        %1834 = vmatpush1.xpose.msra.mxu0 %v1124
        %1835 = vmatprep.subr.mxu0 0.0
        %1836 = vmatpush1.xpose.msra.mxu0 %v1127
        %1837 = vmatprep.subr.mxu0 0.0
        %1838 = vmatpush1.xpose.msra.mxu0 %v1130
        %1839 = vmatprep.subr.mxu0 0.0
        %1840 = vmatpush1.xpose.msra.mxu0 %v1133
        %1841 = vmatprep.subr.mxu0 0.0
        %1842 = vmatpush1.xpose.msra.mxu0 %v1136
        %1843 = vmatprep.subr.mxu0 0.0
        %1844 = vmatpush1.xpose.msra.mxu0 %v1139
        %1845 = vmatprep.subr.mxu0 0.0
        %1846 = vmatpush1.xpose.msra.mxu0 %v1142
        %1847 = vmatprep.subr.mxu0 0.0
        %1848 = vmatpush1.xpose.msra.mxu0 %v1145
        %1849 = vmatprep.subr.mxu0 0.0
        %1850 = vmatpush1.xpose.msra.mxu0 %v1148
        %1851 = vmatprep.subr.mxu0 0.0
        %1852 = vmatpush1.xpose.msra.mxu0 %v1151
        %1853 = vmatprep.subr.mxu0 0.0
        %1854 = vmatpush1.xpose.msra.mxu0 %v1154
        %1855 = vmatprep.subr.mxu0 0.0
        %1856 = vmatpush1.xpose.msra.mxu0 %v1157
        %1857 = vmatprep.subr.mxu0 0.0
        %1858 = vmatpush1.xpose.msra.mxu0 %v1160
        %1859 = vmatprep.subr.mxu0 0.0
        %1860 = vmatpush1.xpose.msra.mxu0 %v1163
        %1861 = vmatprep.subr.mxu0 0.0
        %1862 = vmatpush1.xpose.msra.mxu0 %v1166
        %1863 = vmatprep.subr.mxu0 0.0
        %1864 = vmatpush1.xpose.msra.mxu0 %v1169
        %1865 = vmatprep.mubr.f32.mxu0 0.0
        %1866 = vmatmul.mubr.f32.gmra.mrb[0].mxu0 %v488
        %v1867 = vpop.f32.mrb[0].mxu0
        %v1868 = vadd.f32 0.0, %v1867
        %v1869 = vpop.f32.mrb[0].mxu0
        %v1870 = vadd.f32 0.0, %v1869
        %1871 = vmatprep.mubr.f32.mxu0 0.0
        %1872 = vmatmul.mubr.f32.gmra.mrb[0].mxu0 %v491
        %v1873 = vpop.f32.mrb[0].mxu0
        %v1874 = vadd.f32 0.0, %v1873
        %v1875 = vpop.f32.mrb[0].mxu0
        %v1876 = vadd.f32 0.0, %v1875
        %1877 = vmatprep.mubr.f32.mxu0 0.0
        %1878 = vmatmul.mubr.f32.gmra.mrb[0].mxu0 %v494
        %v1879 = vpop.f32.mrb[0].mxu0
        %v1880 = vadd.f32 0.0, %v1879
        %v1881 = vpop.f32.mrb[0].mxu0
        %v1882 = vadd.f32 0.0, %v1881
        %1883 = vmatprep.mubr.f32.mxu0 0.0
        %1884 = vmatmul.mubr.f32.gmra.mrb[0].mxu0 %v497
        %v1885 = vpop.f32.mrb[0].mxu0
        %v1886 = vadd.f32 0.0, %v1885
        %v1887 = vpop.f32.mrb[0].mxu0
        %v1888 = vadd.f32 0.0, %v1887
        %1889 = vdwg.mxu0
        %1890 = vmatprep.subr.mxu0 0.0
        %1891 = vmatpush1.xpose.msra.mxu0 %v1172
        %1892 = vmatprep.subr.mxu0 0.0
        %1893 = vmatpush1.xpose.msra.mxu0 %v1175
        %1894 = vmatprep.subr.mxu0 0.0
        %1895 = vmatpush1.xpose.msra.mxu0 %v1178
        %1896 = vmatprep.subr.mxu0 0.0
        %1897 = vmatpush1.xpose.msra.mxu0 %v1181
        %1898 = vmatprep.subr.mxu0 0.0
        %1899 = vmatpush1.xpose.msra.mxu0 %v1184
        %1900 = vmatprep.subr.mxu0 0.0
        %1901 = vmatpush1.xpose.msra.mxu0 %v1187
        %1902 = vmatprep.subr.mxu0 0.0
        %1903 = vmatpush1.xpose.msra.mxu0 %v1190
        %1904 = vmatprep.subr.mxu0 0.0
        %1905 = vmatpush1.xpose.msra.mxu0 %v1193
        %1906 = vmatprep.subr.mxu0 0.0
        %1907 = vmatpush1.xpose.msra.mxu0 %v1196
        %1908 = vmatprep.subr.mxu0 0.0
        %1909 = vmatpush1.xpose.msra.mxu0 %v1199
        %1910 = vmatprep.subr.mxu0 0.0
        %1911 = vmatpush1.xpose.msra.mxu0 %v1202
        %1912 = vmatprep.subr.mxu0 0.0
        %1913 = vmatpush1.xpose.msra.mxu0 %v1205
        %1914 = vmatprep.subr.mxu0 0.0
        %1915 = vmatpush1.xpose.msra.mxu0 %v1208
        %1916 = vmatprep.subr.mxu0 0.0
        %1917 = vmatpush1.xpose.msra.mxu0 %v1211
        %1918 = vmatprep.subr.mxu0 0.0
        %1919 = vmatpush1.xpose.msra.mxu0 %v1214
        %1920 = vmatprep.subr.mxu0 0.0
        %1921 = vmatpush1.xpose.msra.mxu0 %v1217
        %1922 = vmatprep.subr.mxu0 0.0
        %1923 = vmatpush1.xpose.msra.mxu0 %v1220
        %1924 = vmatprep.subr.mxu0 0.0
        %1925 = vmatpush1.xpose.msra.mxu0 %v1223
        %1926 = vmatprep.subr.mxu0 0.0
        %1927 = vmatpush1.xpose.msra.mxu0 %v1226
        %1928 = vmatprep.subr.mxu0 0.0
        %1929 = vmatpush1.xpose.msra.mxu0 %v1229
        %1930 = vmatprep.subr.mxu0 0.0
        %1931 = vmatpush1.xpose.msra.mxu0 %v1232
        %1932 = vmatprep.subr.mxu0 0.0
        %1933 = vmatpush1.xpose.msra.mxu0 %v1235
        %1934 = vmatprep.subr.mxu0 0.0
        %1935 = vmatpush1.xpose.msra.mxu0 %v1238
        %1936 = vmatprep.subr.mxu0 0.0
        %1937 = vmatpush1.xpose.msra.mxu0 %v1241
        %1938 = vmatprep.subr.mxu0 0.0
        %1939 = vmatpush1.xpose.msra.mxu0 %v1244
        %1940 = vmatprep.subr.mxu0 0.0
        %1941 = vmatpush1.xpose.msra.mxu0 %v1247
        %1942 = vmatprep.subr.mxu0 0.0
        %1943 = vmatpush1.xpose.msra.mxu0 %v1250
        %1944 = vmatprep.subr.mxu0 0.0
        %1945 = vmatpush1.xpose.msra.mxu0 %v1253
        %1946 = vmatprep.subr.mxu0 0.0
        %1947 = vmatpush1.xpose.msra.mxu0 %v1256
        %1948 = vmatprep.subr.mxu0 0.0
        %1949 = vmatpush1.xpose.msra.mxu0 %v1259
        %1950 = vmatprep.subr.mxu0 0.0
        %1951 = vmatpush1.xpose.msra.mxu0 %v1262
        %1952 = vmatprep.subr.mxu0 0.0
        %1953 = vmatpush1.xpose.msra.mxu0 %v1265
        %1954 = vmatprep.mubr.f32.mxu0 0.0
        %1955 = vmatmul.mubr.f32.gmra.mrb[0].mxu0 %v488
        %v1956 = vpop.f32.mrb[0].mxu0
        %v1957 = vadd.f32 0.0, %v1956
        %v1958 = vpop.f32.mrb[0].mxu0
        %v1959 = vadd.f32 0.0, %v1958
        %1960 = vmatprep.mubr.f32.mxu0 0.0
        %1961 = vmatmul.mubr.f32.gmra.mrb[0].mxu0 %v491
        %v1962 = vpop.f32.mrb[0].mxu0
        %v1963 = vadd.f32 0.0, %v1962
        %v1964 = vpop.f32.mrb[0].mxu0
        %v1965 = vadd.f32 0.0, %v1964
        %1966 = vmatprep.mubr.f32.mxu0 0.0
        %1967 = vmatmul.mubr.f32.gmra.mrb[0].mxu0 %v494
        %v1968 = vpop.f32.mrb[0].mxu0
        %v1969 = vadd.f32 0.0, %v1968
        %v1970 = vpop.f32.mrb[0].mxu0
        %v1971 = vadd.f32 0.0, %v1970
        %1972 = vmatprep.mubr.f32.mxu0 0.0
        %1973 = vmatmul.mubr.f32.gmra.mrb[0].mxu0 %v497
        %v1974 = vpop.f32.mrb[0].mxu0
        %v1975 = vadd.f32 0.0, %v1974
        %v1976 = vpop.f32.mrb[0].mxu0
        %v1977 = vadd.f32 0.0, %v1976
        %1978 = vdwg.mxu0
        %v1979 = vld [vmem:[%s3] sm:$0xf]
        %v1980 = vmul.f32 %v1334, %v1334
        %v1981 = vmul.f32 %v1336, %v1336
        %v1982 = vmul.f32 %v1423, %v1423
        %v1983 = vmul.f32 %v1425, %v1425
        %v1984 = vmul.f32 %v1512, %v1512
        %v1985 = vmul.f32 %v1514, %v1514
        %v1986 = vmul.f32 %v1601, %v1601
        %v1987 = vmul.f32 %v1603, %v1603
        %v1988 = vmul.f32 %v1690, %v1690
        %v1989 = vmul.f32 %v1692, %v1692
        %v1990 = vmul.f32 %v1779, %v1779
        %v1991 = vmul.f32 %v1781, %v1781
        %v1992 = vmul.f32 %v1868, %v1868
        %v1993 = vmul.f32 %v1870, %v1870
        %v1994 = vmul.f32 %v1957, %v1957
        %v1995 = vmul.f32 %v1959, %v1959
        %v1996 = vmul.f32 %v1340, %v1340
        %v1997 = vmul.f32 %v1342, %v1342
        %v1998 = vmul.f32 %v1429, %v1429
        %v1999 = vmul.f32 %v1431, %v1431
        %v2000 = vmul.f32 %v1518, %v1518
        %v2001 = vmul.f32 %v1520, %v1520
        %v2002 = vmul.f32 %v1607, %v1607
        %v2003 = vmul.f32 %v1609, %v1609
        %v2004 = vmul.f32 %v1696, %v1696
        %v2005 = vmul.f32 %v1698, %v1698
        %v2006 = vmul.f32 %v1785, %v1785
        %v2007 = vmul.f32 %v1787, %v1787
        %v2008 = vmul.f32 %v1874, %v1874
        %v2009 = vmul.f32 %v1876, %v1876
        %v2010 = vmul.f32 %v1963, %v1963
        %v2011 = vmul.f32 %v1965, %v1965
        %v2012 = vmul.f32 %v1346, %v1346
        %v2013 = vmul.f32 %v1348, %v1348
        %v2014 = vmul.f32 %v1435, %v1435
        %v2015 = vmul.f32 %v1437, %v1437
        %v2016 = vmul.f32 %v1524, %v1524
        %v2017 = vmul.f32 %v1526, %v1526
        %v2018 = vmul.f32 %v1613, %v1613
        %v2019 = vmul.f32 %v1615, %v1615
        %v2020 = vmul.f32 %v1702, %v1702
        %v2021 = vmul.f32 %v1704, %v1704
        %v2022 = vmul.f32 %v1791, %v1791
        %v2023 = vmul.f32 %v1793, %v1793
        %v2024 = vmul.f32 %v1880, %v1880
        %v2025 = vmul.f32 %v1882, %v1882
        %v2026 = vmul.f32 %v1969, %v1969
        %v2027 = vmul.f32 %v1971, %v1971
        %v2028 = vmul.f32 %v1352, %v1352
        %v2029 = vmul.f32 %v1354, %v1354
        %v2030 = vmul.f32 %v1441, %v1441
        %v2031 = vmul.f32 %v1443, %v1443
        %v2032 = vmul.f32 %v1530, %v1530
        %v2033 = vmul.f32 %v1532, %v1532
        %v2034 = vmul.f32 %v1619, %v1619
        %v2035 = vmul.f32 %v1621, %v1621
        %v2036 = vmul.f32 %v1708, %v1708
        %v2037 = vmul.f32 %v1710, %v1710
        %v2038 = vmul.f32 %v1797, %v1797
        %v2039 = vmul.f32 %v1799, %v1799
        %v2040 = vmul.f32 %v1886, %v1886
        %v2041 = vmul.f32 %v1888, %v1888
        %v2042 = vmul.f32 %v1975, %v1975
        %v2043 = vmul.f32 %v1977, %v1977
        %vm2044 = vcmask 261120
        %v2046 = vsel %vm2044, %v1979, 0
        %2048 = vmatprep.subr.mxu0 %v1981
        %2049 = vmatpush1.msra.mxu0 %v1980
        %2050 = vmatprep.subr.mxu0 %v1997
        %2051 = vmatpush1.msra.mxu0 %v1996
        %2052 = vmatprep.subr.mxu0 %v2013
        %2053 = vmatpush1.msra.mxu0 %v2012
        %2054 = vmatprep.subr.mxu0 %v2029
        %2055 = vmatpush1.msra.mxu0 %v2028
        %2056 = vmatprep.subr.mxu0 0.0
        %2057 = vmatpush1.msra.mxu0 0.0
        %2058 = vmatprep.subr.mxu0 0.0
        %2059 = vmatpush1.msra.mxu0 0.0
        %2060 = vmatprep.subr.mxu0 0.0
        %2061 = vmatpush1.msra.mxu0 0.0
        %2062 = vmatprep.subr.mxu0 0.0
        %2063 = vmatpush1.msra.mxu0 0.0
        %2064 = vmatprep.subr.mxu0 0.0
        %2065 = vmatpush1.msra.mxu0 0.0
        %2066 = vmatprep.subr.mxu0 0.0
        %2067 = vmatpush1.msra.mxu0 0.0
        %2068 = vmatprep.subr.mxu0 0.0
        %2069 = vmatpush1.msra.mxu0 0.0
        %2070 = vmatprep.subr.mxu0 0.0
        %2071 = vmatpush1.msra.mxu0 0.0
        %2072 = vmatprep.subr.mxu0 0.0
        %2073 = vmatpush1.msra.mxu0 0.0
        %2074 = vmatprep.subr.mxu0 0.0
        %2075 = vmatpush1.msra.mxu0 0.0
        %2076 = vmatprep.subr.mxu0 0.0
        %2077 = vmatpush1.msra.mxu0 0.0
        %2078 = vmatprep.subr.mxu0 0.0
        %2079 = vmatpush1.msra.mxu0 0.0
        %2080 = vmatprep.subr.mxu0 0.0
        %2081 = vmatpush1.msra.mxu0 0.0
        %2082 = vmatprep.subr.mxu0 0.0
        %2083 = vmatpush1.msra.mxu0 0.0
        %2084 = vmatprep.subr.mxu0 0.0
        %2085 = vmatpush1.msra.mxu0 0.0
        %2086 = vmatprep.subr.mxu0 0.0
        %2087 = vmatpush1.msra.mxu0 0.0
        %2088 = vmatprep.subr.mxu0 0.0
        %2089 = vmatpush1.msra.mxu0 0.0
        %2090 = vmatprep.subr.mxu0 0.0
        %2091 = vmatpush1.msra.mxu0 0.0
        %2092 = vmatprep.subr.mxu0 0.0
        %2093 = vmatpush1.msra.mxu0 0.0
        %2094 = vmatprep.subr.mxu0 0.0
        %2095 = vmatpush1.msra.mxu0 0.0
        %2096 = vmatprep.subr.mxu0 0.0
        %2097 = vmatpush1.msra.mxu0 0.0
        %2098 = vmatprep.subr.mxu0 0.0
        %2099 = vmatpush1.msra.mxu0 0.0
        %2100 = vmatprep.subr.mxu0 0.0
        %2101 = vmatpush1.msra.mxu0 0.0
        %2102 = vmatprep.subr.mxu0 0.0
        %2103 = vmatpush1.msra.mxu0 0.0
        %2104 = vmatprep.subr.mxu0 0.0
        %2105 = vmatpush1.msra.mxu0 0.0
        %2106 = vmatprep.subr.mxu0 0.0
        %2107 = vmatpush1.msra.mxu0 0.0
        %2108 = vmatprep.subr.mxu0 0.0
        %2109 = vmatpush1.msra.mxu0 0.0
        %2110 = vmatprep.subr.mxu0 0.0
        %2111 = vmatpush1.msra.mxu0 0.0
        %2112 = vmatprep.mubr.f32.mxu0 0.0
        %2113 = vmatmul.mubr.f32.gmra.mrb[0].mxu0 %v2046
        %v2114 = vpop.f32.mrb[0].mxu0
        %v2115 = vadd.f32 0.0, %v2114
        %v2116 = vpop.f32.mrb[0].mxu0
        %v2117 = vadd.f32 0.0, %v2116
        %2118 = vdwg.mxu0
        %2119 = vmatprep.subr.mxu0 %v1983
        %2120 = vmatpush1.msra.mxu0 %v1982
        %2121 = vmatprep.subr.mxu0 %v1999
        %2122 = vmatpush1.msra.mxu0 %v1998
        %2123 = vmatprep.subr.mxu0 %v2015
        %2124 = vmatpush1.msra.mxu0 %v2014
        %2125 = vmatprep.subr.mxu0 %v2031
        %2126 = vmatpush1.msra.mxu0 %v2030
        %2127 = vmatprep.subr.mxu0 0.0
        %2128 = vmatpush1.msra.mxu0 0.0
        %2129 = vmatprep.subr.mxu0 0.0
        %2130 = vmatpush1.msra.mxu0 0.0
        %2131 = vmatprep.subr.mxu0 0.0
        %2132 = vmatpush1.msra.mxu0 0.0
        %2133 = vmatprep.subr.mxu0 0.0
        %2134 = vmatpush1.msra.mxu0 0.0
        %2135 = vmatprep.subr.mxu0 0.0
        %2136 = vmatpush1.msra.mxu0 0.0
        %2137 = vmatprep.subr.mxu0 0.0
        %2138 = vmatpush1.msra.mxu0 0.0
        %2139 = vmatprep.subr.mxu0 0.0
        %2140 = vmatpush1.msra.mxu0 0.0
        %2141 = vmatprep.subr.mxu0 0.0
        %2142 = vmatpush1.msra.mxu0 0.0
        %2143 = vmatprep.subr.mxu0 0.0
        %2144 = vmatpush1.msra.mxu0 0.0
        %2145 = vmatprep.subr.mxu0 0.0
        %2146 = vmatpush1.msra.mxu0 0.0
        %2147 = vmatprep.subr.mxu0 0.0
        %2148 = vmatpush1.msra.mxu0 0.0
        %2149 = vmatprep.subr.mxu0 0.0
        %2150 = vmatpush1.msra.mxu0 0.0
        %2151 = vmatprep.subr.mxu0 0.0
        %2152 = vmatpush1.msra.mxu0 0.0
        %2153 = vmatprep.subr.mxu0 0.0
        %2154 = vmatpush1.msra.mxu0 0.0
        %2155 = vmatprep.subr.mxu0 0.0
        %2156 = vmatpush1.msra.mxu0 0.0
        %2157 = vmatprep.subr.mxu0 0.0
        %2158 = vmatpush1.msra.mxu0 0.0
        %2159 = vmatprep.subr.mxu0 0.0
        %2160 = vmatpush1.msra.mxu0 0.0
        %2161 = vmatprep.subr.mxu0 0.0
        %2162 = vmatpush1.msra.mxu0 0.0
        %2163 = vmatprep.subr.mxu0 0.0
        %2164 = vmatpush1.msra.mxu0 0.0
        %2165 = vmatprep.subr.mxu0 0.0
        %2166 = vmatpush1.msra.mxu0 0.0
        %2167 = vmatprep.subr.mxu0 0.0
        %2168 = vmatpush1.msra.mxu0 0.0
        %2169 = vmatprep.subr.mxu0 0.0
        %2170 = vmatpush1.msra.mxu0 0.0
        %2171 = vmatprep.subr.mxu0 0.0
        %2172 = vmatpush1.msra.mxu0 0.0
        %2173 = vmatprep.subr.mxu0 0.0
        %2174 = vmatpush1.msra.mxu0 0.0
        %2175 = vmatprep.subr.mxu0 0.0
        %2176 = vmatpush1.msra.mxu0 0.0
        %2177 = vmatprep.subr.mxu0 0.0
        %2178 = vmatpush1.msra.mxu0 0.0
        %2179 = vmatprep.subr.mxu0 0.0
        %2180 = vmatpush1.msra.mxu0 0.0
        %2181 = vmatprep.subr.mxu0 0.0
        %2182 = vmatpush1.msra.mxu0 0.0
        %2183 = vmatprep.mubr.f32.mxu0 0.0
        %2184 = vmatmul.mubr.f32.gmra.mrb[0].mxu0 %v2046
        %v2185 = vpop.f32.mrb[0].mxu0
        %v2186 = vadd.f32 0.0, %v2185
        %v2187 = vpop.f32.mrb[0].mxu0
        %v2188 = vadd.f32 0.0, %v2187
        %2189 = vdwg.mxu0
        %2190 = vmatprep.subr.mxu0 %v1985
        %2191 = vmatpush1.msra.mxu0 %v1984
        %2192 = vmatprep.subr.mxu0 %v2001
        %2193 = vmatpush1.msra.mxu0 %v2000
        %2194 = vmatprep.subr.mxu0 %v2017
        %2195 = vmatpush1.msra.mxu0 %v2016
        %2196 = vmatprep.subr.mxu0 %v2033
        %2197 = vmatpush1.msra.mxu0 %v2032
        %2198 = vmatprep.subr.mxu0 0.0
        %2199 = vmatpush1.msra.mxu0 0.0
        %2200 = vmatprep.subr.mxu0 0.0
        %2201 = vmatpush1.msra.mxu0 0.0
        %2202 = vmatprep.subr.mxu0 0.0
        %2203 = vmatpush1.msra.mxu0 0.0
        %2204 = vmatprep.subr.mxu0 0.0
        %2205 = vmatpush1.msra.mxu0 0.0
        %2206 = vmatprep.subr.mxu0 0.0
        %2207 = vmatpush1.msra.mxu0 0.0
        %2208 = vmatprep.subr.mxu0 0.0
        %2209 = vmatpush1.msra.mxu0 0.0
        %2210 = vmatprep.subr.mxu0 0.0
        %2211 = vmatpush1.msra.mxu0 0.0
        %2212 = vmatprep.subr.mxu0 0.0
        %2213 = vmatpush1.msra.mxu0 0.0
        %2214 = vmatprep.subr.mxu0 0.0
        %2215 = vmatpush1.msra.mxu0 0.0
        %2216 = vmatprep.subr.mxu0 0.0
        %2217 = vmatpush1.msra.mxu0 0.0
        %2218 = vmatprep.subr.mxu0 0.0
        %2219 = vmatpush1.msra.mxu0 0.0
        %2220 = vmatprep.subr.mxu0 0.0
        %2221 = vmatpush1.msra.mxu0 0.0
        %2222 = vmatprep.subr.mxu0 0.0
        %2223 = vmatpush1.msra.mxu0 0.0
        %2224 = vmatprep.subr.mxu0 0.0
        %2225 = vmatpush1.msra.mxu0 0.0
        %2226 = vmatprep.subr.mxu0 0.0
        %2227 = vmatpush1.msra.mxu0 0.0
        %2228 = vmatprep.subr.mxu0 0.0
        %2229 = vmatpush1.msra.mxu0 0.0
        %2230 = vmatprep.subr.mxu0 0.0
        %2231 = vmatpush1.msra.mxu0 0.0
        %2232 = vmatprep.subr.mxu0 0.0
        %2233 = vmatpush1.msra.mxu0 0.0
        %2234 = vmatprep.subr.mxu0 0.0
        %2235 = vmatpush1.msra.mxu0 0.0
        %2236 = vmatprep.subr.mxu0 0.0
        %2237 = vmatpush1.msra.mxu0 0.0
        %2238 = vmatprep.subr.mxu0 0.0
        %2239 = vmatpush1.msra.mxu0 0.0
        %2240 = vmatprep.subr.mxu0 0.0
        %2241 = vmatpush1.msra.mxu0 0.0
        %2242 = vmatprep.subr.mxu0 0.0
        %2243 = vmatpush1.msra.mxu0 0.0
        %2244 = vmatprep.subr.mxu0 0.0
        %2245 = vmatpush1.msra.mxu0 0.0
        %2246 = vmatprep.subr.mxu0 0.0
        %2247 = vmatpush1.msra.mxu0 0.0
        %2248 = vmatprep.subr.mxu0 0.0
        %2249 = vmatpush1.msra.mxu0 0.0
        %2250 = vmatprep.subr.mxu0 0.0
        %2251 = vmatpush1.msra.mxu0 0.0
        %2252 = vmatprep.subr.mxu0 0.0
        %2253 = vmatpush1.msra.mxu0 0.0
        %2254 = vmatprep.mubr.f32.mxu0 0.0
        %2255 = vmatmul.mubr.f32.gmra.mrb[0].mxu0 %v2046
        %v2256 = vpop.f32.mrb[0].mxu0
        %v2257 = vadd.f32 0.0, %v2256
        %v2258 = vpop.f32.mrb[0].mxu0
        %v2259 = vadd.f32 0.0, %v2258
        %2260 = vdwg.mxu0
        %2261 = vmatprep.subr.mxu0 %v1987
        %2262 = vmatpush1.msra.mxu0 %v1986
        %2263 = vmatprep.subr.mxu0 %v2003
        %2264 = vmatpush1.msra.mxu0 %v2002
        %2265 = vmatprep.subr.mxu0 %v2019
        %2266 = vmatpush1.msra.mxu0 %v2018
        %2267 = vmatprep.subr.mxu0 %v2035
        %2268 = vmatpush1.msra.mxu0 %v2034
        %2269 = vmatprep.subr.mxu0 0.0
        %2270 = vmatpush1.msra.mxu0 0.0
        %2271 = vmatprep.subr.mxu0 0.0
        %2272 = vmatpush1.msra.mxu0 0.0
        %2273 = vmatprep.subr.mxu0 0.0
        %2274 = vmatpush1.msra.mxu0 0.0
        %2275 = vmatprep.subr.mxu0 0.0
        %2276 = vmatpush1.msra.mxu0 0.0
        %2277 = vmatprep.subr.mxu0 0.0
        %2278 = vmatpush1.msra.mxu0 0.0
        %2279 = vmatprep.subr.mxu0 0.0
        %2280 = vmatpush1.msra.mxu0 0.0
        %2281 = vmatprep.subr.mxu0 0.0
        %2282 = vmatpush1.msra.mxu0 0.0
        %2283 = vmatprep.subr.mxu0 0.0
        %2284 = vmatpush1.msra.mxu0 0.0
        %2285 = vmatprep.subr.mxu0 0.0
        %2286 = vmatpush1.msra.mxu0 0.0
        %2287 = vmatprep.subr.mxu0 0.0
        %2288 = vmatpush1.msra.mxu0 0.0
        %2289 = vmatprep.subr.mxu0 0.0
        %2290 = vmatpush1.msra.mxu0 0.0
        %2291 = vmatprep.subr.mxu0 0.0
        %2292 = vmatpush1.msra.mxu0 0.0
        %2293 = vmatprep.subr.mxu0 0.0
        %2294 = vmatpush1.msra.mxu0 0.0
        %2295 = vmatprep.subr.mxu0 0.0
        %2296 = vmatpush1.msra.mxu0 0.0
        %2297 = vmatprep.subr.mxu0 0.0
        %2298 = vmatpush1.msra.mxu0 0.0
        %2299 = vmatprep.subr.mxu0 0.0
        %2300 = vmatpush1.msra.mxu0 0.0
        %2301 = vmatprep.subr.mxu0 0.0
        %2302 = vmatpush1.msra.mxu0 0.0
        %2303 = vmatprep.subr.mxu0 0.0
        %2304 = vmatpush1.msra.mxu0 0.0
        %2305 = vmatprep.subr.mxu0 0.0
        %2306 = vmatpush1.msra.mxu0 0.0
        %2307 = vmatprep.subr.mxu0 0.0
        %2308 = vmatpush1.msra.mxu0 0.0
        %2309 = vmatprep.subr.mxu0 0.0
        %2310 = vmatpush1.msra.mxu0 0.0
        %2311 = vmatprep.subr.mxu0 0.0
        %2312 = vmatpush1.msra.mxu0 0.0
        %2313 = vmatprep.subr.mxu0 0.0
        %2314 = vmatpush1.msra.mxu0 0.0
        %2315 = vmatprep.subr.mxu0 0.0
        %2316 = vmatpush1.msra.mxu0 0.0
        %2317 = vmatprep.subr.mxu0 0.0
        %2318 = vmatpush1.msra.mxu0 0.0
        %2319 = vmatprep.subr.mxu0 0.0
        %2320 = vmatpush1.msra.mxu0 0.0
        %2321 = vmatprep.subr.mxu0 0.0
        %2322 = vmatpush1.msra.mxu0 0.0
        %2323 = vmatprep.subr.mxu0 0.0
        %2324 = vmatpush1.msra.mxu0 0.0
        %2325 = vmatprep.mubr.f32.mxu0 0.0
        %2326 = vmatmul.mubr.f32.gmra.mrb[0].mxu0 %v2046
        %v2327 = vpop.f32.mrb[0].mxu0
        %v2328 = vadd.f32 0.0, %v2327
        %v2329 = vpop.f32.mrb[0].mxu0
        %v2330 = vadd.f32 0.0, %v2329
        %2331 = vdwg.mxu0
        %2332 = vmatprep.subr.mxu0 %v1989
        %2333 = vmatpush1.msra.mxu0 %v1988
        %2334 = vmatprep.subr.mxu0 %v2005
        %2335 = vmatpush1.msra.mxu0 %v2004
        %2336 = vmatprep.subr.mxu0 %v2021
        %2337 = vmatpush1.msra.mxu0 %v2020
        %2338 = vmatprep.subr.mxu0 %v2037
        %2339 = vmatpush1.msra.mxu0 %v2036
        %2340 = vmatprep.subr.mxu0 0.0
        %2341 = vmatpush1.msra.mxu0 0.0
        %2342 = vmatprep.subr.mxu0 0.0
        %2343 = vmatpush1.msra.mxu0 0.0
        %2344 = vmatprep.subr.mxu0 0.0
        %2345 = vmatpush1.msra.mxu0 0.0
        %2346 = vmatprep.subr.mxu0 0.0
        %2347 = vmatpush1.msra.mxu0 0.0
        %2348 = vmatprep.subr.mxu0 0.0
        %2349 = vmatpush1.msra.mxu0 0.0
        %2350 = vmatprep.subr.mxu0 0.0
        %2351 = vmatpush1.msra.mxu0 0.0
        %2352 = vmatprep.subr.mxu0 0.0
        %2353 = vmatpush1.msra.mxu0 0.0
        %2354 = vmatprep.subr.mxu0 0.0
        %2355 = vmatpush1.msra.mxu0 0.0
        %2356 = vmatprep.subr.mxu0 0.0
        %2357 = vmatpush1.msra.mxu0 0.0
        %2358 = vmatprep.subr.mxu0 0.0
        %2359 = vmatpush1.msra.mxu0 0.0
        %2360 = vmatprep.subr.mxu0 0.0
        %2361 = vmatpush1.msra.mxu0 0.0
        %2362 = vmatprep.subr.mxu0 0.0
        %2363 = vmatpush1.msra.mxu0 0.0
        %2364 = vmatprep.subr.mxu0 0.0
        %2365 = vmatpush1.msra.mxu0 0.0
        %2366 = vmatprep.subr.mxu0 0.0
        %2367 = vmatpush1.msra.mxu0 0.0
        %2368 = vmatprep.subr.mxu0 0.0
        %2369 = vmatpush1.msra.mxu0 0.0
        %2370 = vmatprep.subr.mxu0 0.0
        %2371 = vmatpush1.msra.mxu0 0.0
        %2372 = vmatprep.subr.mxu0 0.0
        %2373 = vmatpush1.msra.mxu0 0.0
        %2374 = vmatprep.subr.mxu0 0.0
        %2375 = vmatpush1.msra.mxu0 0.0
        %2376 = vmatprep.subr.mxu0 0.0
        %2377 = vmatpush1.msra.mxu0 0.0
        %2378 = vmatprep.subr.mxu0 0.0
        %2379 = vmatpush1.msra.mxu0 0.0
        %2380 = vmatprep.subr.mxu0 0.0
        %2381 = vmatpush1.msra.mxu0 0.0
        %2382 = vmatprep.subr.mxu0 0.0
        %2383 = vmatpush1.msra.mxu0 0.0
        %2384 = vmatprep.subr.mxu0 0.0
        %2385 = vmatpush1.msra.mxu0 0.0
        %2386 = vmatprep.subr.mxu0 0.0
        %2387 = vmatpush1.msra.mxu0 0.0
        %2388 = vmatprep.subr.mxu0 0.0
        %2389 = vmatpush1.msra.mxu0 0.0
        %2390 = vmatprep.subr.mxu0 0.0
        %2391 = vmatpush1.msra.mxu0 0.0
        %2392 = vmatprep.subr.mxu0 0.0
        %2393 = vmatpush1.msra.mxu0 0.0
        %2394 = vmatprep.subr.mxu0 0.0
        %2395 = vmatpush1.msra.mxu0 0.0
        %2396 = vmatprep.mubr.f32.mxu0 0.0
        %2397 = vmatmul.mubr.f32.gmra.mrb[0].mxu0 %v2046
        %v2398 = vpop.f32.mrb[0].mxu0
        %v2399 = vadd.f32 0.0, %v2398
        %v2400 = vpop.f32.mrb[0].mxu0
        %v2401 = vadd.f32 0.0, %v2400
        %2402 = vdwg.mxu0
        %2403 = vmatprep.subr.mxu0 %v1991
        %2404 = vmatpush1.msra.mxu0 %v1990
        %2405 = vmatprep.subr.mxu0 %v2007
        %2406 = vmatpush1.msra.mxu0 %v2006
        %2407 = vmatprep.subr.mxu0 %v2023
        %2408 = vmatpush1.msra.mxu0 %v2022
        %2409 = vmatprep.subr.mxu0 %v2039
        %2410 = vmatpush1.msra.mxu0 %v2038
        %2411 = vmatprep.subr.mxu0 0.0
        %2412 = vmatpush1.msra.mxu0 0.0
        %2413 = vmatprep.subr.mxu0 0.0
        %2414 = vmatpush1.msra.mxu0 0.0
        %2415 = vmatprep.subr.mxu0 0.0
        %2416 = vmatpush1.msra.mxu0 0.0
        %2417 = vmatprep.subr.mxu0 0.0
        %2418 = vmatpush1.msra.mxu0 0.0
        %2419 = vmatprep.subr.mxu0 0.0
        %2420 = vmatpush1.msra.mxu0 0.0
        %2421 = vmatprep.subr.mxu0 0.0
        %2422 = vmatpush1.msra.mxu0 0.0
        %2423 = vmatprep.subr.mxu0 0.0
        %2424 = vmatpush1.msra.mxu0 0.0
        %2425 = vmatprep.subr.mxu0 0.0
        %2426 = vmatpush1.msra.mxu0 0.0
        %2427 = vmatprep.subr.mxu0 0.0
        %2428 = vmatpush1.msra.mxu0 0.0
        %2429 = vmatprep.subr.mxu0 0.0
        %2430 = vmatpush1.msra.mxu0 0.0
        %2431 = vmatprep.subr.mxu0 0.0
        %2432 = vmatpush1.msra.mxu0 0.0
        %2433 = vmatprep.subr.mxu0 0.0
        %2434 = vmatpush1.msra.mxu0 0.0
        %2435 = vmatprep.subr.mxu0 0.0
        %2436 = vmatpush1.msra.mxu0 0.0
        %2437 = vmatprep.subr.mxu0 0.0
        %2438 = vmatpush1.msra.mxu0 0.0
        %2439 = vmatprep.subr.mxu0 0.0
        %2440 = vmatpush1.msra.mxu0 0.0
        %2441 = vmatprep.subr.mxu0 0.0
        %2442 = vmatpush1.msra.mxu0 0.0
        %2443 = vmatprep.subr.mxu0 0.0
        %2444 = vmatpush1.msra.mxu0 0.0
        %2445 = vmatprep.subr.mxu0 0.0
        %2446 = vmatpush1.msra.mxu0 0.0
        %2447 = vmatprep.subr.mxu0 0.0
        %2448 = vmatpush1.msra.mxu0 0.0
        %2449 = vmatprep.subr.mxu0 0.0
        %2450 = vmatpush1.msra.mxu0 0.0
        %2451 = vmatprep.subr.mxu0 0.0
        %2452 = vmatpush1.msra.mxu0 0.0
        %2453 = vmatprep.subr.mxu0 0.0
        %2454 = vmatpush1.msra.mxu0 0.0
        %2455 = vmatprep.subr.mxu0 0.0
        %2456 = vmatpush1.msra.mxu0 0.0
        %2457 = vmatprep.subr.mxu0 0.0
        %2458 = vmatpush1.msra.mxu0 0.0
        %2459 = vmatprep.subr.mxu0 0.0
        %2460 = vmatpush1.msra.mxu0 0.0
        %2461 = vmatprep.subr.mxu0 0.0
        %2462 = vmatpush1.msra.mxu0 0.0
        %2463 = vmatprep.subr.mxu0 0.0
        %2464 = vmatpush1.msra.mxu0 0.0
        %2465 = vmatprep.subr.mxu0 0.0
        %2466 = vmatpush1.msra.mxu0 0.0
        %2467 = vmatprep.mubr.f32.mxu0 0.0
        %2468 = vmatmul.mubr.f32.gmra.mrb[0].mxu0 %v2046
        %v2469 = vpop.f32.mrb[0].mxu0
        %v2470 = vadd.f32 0.0, %v2469
        %v2471 = vpop.f32.mrb[0].mxu0
        %v2472 = vadd.f32 0.0, %v2471
        %2473 = vdwg.mxu0
        %2474 = vmatprep.subr.mxu0 %v1993
        %2475 = vmatpush1.msra.mxu0 %v1992
        %2476 = vmatprep.subr.mxu0 %v2009
        %2477 = vmatpush1.msra.mxu0 %v2008
        %2478 = vmatprep.subr.mxu0 %v2025
        %2479 = vmatpush1.msra.mxu0 %v2024
        %2480 = vmatprep.subr.mxu0 %v2041
        %2481 = vmatpush1.msra.mxu0 %v2040
        %2482 = vmatprep.subr.mxu0 0.0
        %2483 = vmatpush1.msra.mxu0 0.0
        %2484 = vmatprep.subr.mxu0 0.0
        %2485 = vmatpush1.msra.mxu0 0.0
        %2486 = vmatprep.subr.mxu0 0.0
        %2487 = vmatpush1.msra.mxu0 0.0
        %2488 = vmatprep.subr.mxu0 0.0
        %2489 = vmatpush1.msra.mxu0 0.0
        %2490 = vmatprep.subr.mxu0 0.0
        %2491 = vmatpush1.msra.mxu0 0.0
        %2492 = vmatprep.subr.mxu0 0.0
        %2493 = vmatpush1.msra.mxu0 0.0
        %2494 = vmatprep.subr.mxu0 0.0
        %2495 = vmatpush1.msra.mxu0 0.0
        %2496 = vmatprep.subr.mxu0 0.0
        %2497 = vmatpush1.msra.mxu0 0.0
        %2498 = vmatprep.subr.mxu0 0.0
        %2499 = vmatpush1.msra.mxu0 0.0
        %2500 = vmatprep.subr.mxu0 0.0
        %2501 = vmatpush1.msra.mxu0 0.0
        %2502 = vmatprep.subr.mxu0 0.0
        %2503 = vmatpush1.msra.mxu0 0.0
        %2504 = vmatprep.subr.mxu0 0.0
        %2505 = vmatpush1.msra.mxu0 0.0
        %2506 = vmatprep.subr.mxu0 0.0
        %2507 = vmatpush1.msra.mxu0 0.0
        %2508 = vmatprep.subr.mxu0 0.0
        %2509 = vmatpush1.msra.mxu0 0.0
        %2510 = vmatprep.subr.mxu0 0.0
        %2511 = vmatpush1.msra.mxu0 0.0
        %2512 = vmatprep.subr.mxu0 0.0
        %2513 = vmatpush1.msra.mxu0 0.0
        %2514 = vmatprep.subr.mxu0 0.0
        %2515 = vmatpush1.msra.mxu0 0.0
        %2516 = vmatprep.subr.mxu0 0.0
        %2517 = vmatpush1.msra.mxu0 0.0
        %2518 = vmatprep.subr.mxu0 0.0
        %2519 = vmatpush1.msra.mxu0 0.0
        %2520 = vmatprep.subr.mxu0 0.0
        %2521 = vmatpush1.msra.mxu0 0.0
        %2522 = vmatprep.subr.mxu0 0.0
        %2523 = vmatpush1.msra.mxu0 0.0
        %2524 = vmatprep.subr.mxu0 0.0
        %2525 = vmatpush1.msra.mxu0 0.0
        %2526 = vmatprep.subr.mxu0 0.0
        %2527 = vmatpush1.msra.mxu0 0.0
        %2528 = vmatprep.subr.mxu0 0.0
        %2529 = vmatpush1.msra.mxu0 0.0
        %2530 = vmatprep.subr.mxu0 0.0
        %2531 = vmatpush1.msra.mxu0 0.0
        %2532 = vmatprep.subr.mxu0 0.0
        %2533 = vmatpush1.msra.mxu0 0.0
        %2534 = vmatprep.subr.mxu0 0.0
        %2535 = vmatpush1.msra.mxu0 0.0
        %2536 = vmatprep.subr.mxu0 0.0
        %2537 = vmatpush1.msra.mxu0 0.0
        %2538 = vmatprep.mubr.f32.mxu0 0.0
        %2539 = vmatmul.mubr.f32.gmra.mrb[0].mxu0 %v2046
        %v2540 = vpop.f32.mrb[0].mxu0
        %v2541 = vadd.f32 0.0, %v2540
        %v2542 = vpop.f32.mrb[0].mxu0
        %v2543 = vadd.f32 0.0, %v2542
        %2544 = vdwg.mxu0
        %2545 = vmatprep.subr.mxu0 %v1995
        %2546 = vmatpush1.msra.mxu0 %v1994
        %2547 = vmatprep.subr.mxu0 %v2011
        %2548 = vmatpush1.msra.mxu0 %v2010
        %2549 = vmatprep.subr.mxu0 %v2027
        %2550 = vmatpush1.msra.mxu0 %v2026
        %2551 = vmatprep.subr.mxu0 %v2043
        %2552 = vmatpush1.msra.mxu0 %v2042
        %2553 = vmatprep.subr.mxu0 0.0
        %2554 = vmatpush1.msra.mxu0 0.0
        %2555 = vmatprep.subr.mxu0 0.0
        %2556 = vmatpush1.msra.mxu0 0.0
        %2557 = vmatprep.subr.mxu0 0.0
        %2558 = vmatpush1.msra.mxu0 0.0
        %2559 = vmatprep.subr.mxu0 0.0
        %2560 = vmatpush1.msra.mxu0 0.0
        %2561 = vmatprep.subr.mxu0 0.0
        %2562 = vmatpush1.msra.mxu0 0.0
        %2563 = vmatprep.subr.mxu0 0.0
        %2564 = vmatpush1.msra.mxu0 0.0
        %2565 = vmatprep.subr.mxu0 0.0
        %2566 = vmatpush1.msra.mxu0 0.0
        %2567 = vmatprep.subr.mxu0 0.0
        %2568 = vmatpush1.msra.mxu0 0.0
        %2569 = vmatprep.subr.mxu0 0.0
        %2570 = vmatpush1.msra.mxu0 0.0
        %2571 = vmatprep.subr.mxu0 0.0
        %2572 = vmatpush1.msra.mxu0 0.0
        %2573 = vmatprep.subr.mxu0 0.0
        %2574 = vmatpush1.msra.mxu0 0.0
        %2575 = vmatprep.subr.mxu0 0.0
        %2576 = vmatpush1.msra.mxu0 0.0
        %2577 = vmatprep.subr.mxu0 0.0
        %2578 = vmatpush1.msra.mxu0 0.0
        %2579 = vmatprep.subr.mxu0 0.0
        %2580 = vmatpush1.msra.mxu0 0.0
        %2581 = vmatprep.subr.mxu0 0.0
        %2582 = vmatpush1.msra.mxu0 0.0
        %2583 = vmatprep.subr.mxu0 0.0
        %2584 = vmatpush1.msra.mxu0 0.0
        %2585 = vmatprep.subr.mxu0 0.0
        %2586 = vmatpush1.msra.mxu0 0.0
        %2587 = vmatprep.subr.mxu0 0.0
        %2588 = vmatpush1.msra.mxu0 0.0
        %2589 = vmatprep.subr.mxu0 0.0
        %2590 = vmatpush1.msra.mxu0 0.0
        %2591 = vmatprep.subr.mxu0 0.0
        %2592 = vmatpush1.msra.mxu0 0.0
        %2593 = vmatprep.subr.mxu0 0.0
        %2594 = vmatpush1.msra.mxu0 0.0
        %2595 = vmatprep.subr.mxu0 0.0
        %2596 = vmatpush1.msra.mxu0 0.0
        %2597 = vmatprep.subr.mxu0 0.0
        %2598 = vmatpush1.msra.mxu0 0.0
        %2599 = vmatprep.subr.mxu0 0.0
        %2600 = vmatpush1.msra.mxu0 0.0
        %2601 = vmatprep.subr.mxu0 0.0
        %2602 = vmatpush1.msra.mxu0 0.0
        %2603 = vmatprep.subr.mxu0 0.0
        %2604 = vmatpush1.msra.mxu0 0.0
        %2605 = vmatprep.subr.mxu0 0.0
        %2606 = vmatpush1.msra.mxu0 0.0
        %2607 = vmatprep.subr.mxu0 0.0
        %2608 = vmatpush1.msra.mxu0 0.0
        %2609 = vmatprep.mubr.f32.mxu0 0.0
        %2610 = vmatmul.mubr.f32.gmra.mrb[0].mxu0 %v2046
        %v2611 = vpop.f32.mrb[0].mxu0
        %v2612 = vadd.f32 0.0, %v2611
        %v2613 = vpop.f32.mrb[0].mxu0
        %v2614 = vadd.f32 0.0, %v2613
        %2615 = vdwg.mxu0
        %v2616 = vld [vmem:[%s2] sm:$0xf]
        %v2618 = vsel %vm486, %v2616, 0
        %2620 = vmatprep.subr.mxu0 0.0
        %2621 = vmatpush1.xpose.msra.mxu0 %v500
        %2622 = vmatprep.subr.mxu0 0.0
        %2623 = vmatpush1.xpose.msra.mxu0 %v503
        %2624 = vmatprep.subr.mxu0 0.0
        %2625 = vmatpush1.xpose.msra.mxu0 %v506
        %2626 = vmatprep.subr.mxu0 0.0
        %2627 = vmatpush1.xpose.msra.mxu0 %v509
        %2628 = vmatprep.subr.mxu0 0.0
        %2629 = vmatpush1.xpose.msra.mxu0 %v512
        %2630 = vmatprep.subr.mxu0 0.0
        %2631 = vmatpush1.xpose.msra.mxu0 %v515
        %2632 = vmatprep.subr.mxu0 0.0
        %2633 = vmatpush1.xpose.msra.mxu0 %v518
        %2634 = vmatprep.subr.mxu0 0.0
        %2635 = vmatpush1.xpose.msra.mxu0 %v521
        %2636 = vmatprep.subr.mxu0 0.0
        %2637 = vmatpush1.xpose.msra.mxu0 %v524
        %2638 = vmatprep.subr.mxu0 0.0
        %2639 = vmatpush1.xpose.msra.mxu0 %v527
        %2640 = vmatprep.subr.mxu0 0.0
        %2641 = vmatpush1.xpose.msra.mxu0 %v530
        %2642 = vmatprep.subr.mxu0 0.0
        %2643 = vmatpush1.xpose.msra.mxu0 %v533
        %2644 = vmatprep.subr.mxu0 0.0
        %2645 = vmatpush1.xpose.msra.mxu0 %v536
        %2646 = vmatprep.subr.mxu0 0.0
        %2647 = vmatpush1.xpose.msra.mxu0 %v539
        %2648 = vmatprep.subr.mxu0 0.0
        %2649 = vmatpush1.xpose.msra.mxu0 %v542
        %2650 = vmatprep.subr.mxu0 0.0
        %2651 = vmatpush1.xpose.msra.mxu0 %v545
        %2652 = vmatprep.subr.mxu0 0.0
        %2653 = vmatpush1.xpose.msra.mxu0 %v548
        %2654 = vmatprep.subr.mxu0 0.0
        %2655 = vmatpush1.xpose.msra.mxu0 %v551
        %2656 = vmatprep.subr.mxu0 0.0
        %2657 = vmatpush1.xpose.msra.mxu0 %v554
        %2658 = vmatprep.subr.mxu0 0.0
        %2659 = vmatpush1.xpose.msra.mxu0 %v557
        %2660 = vmatprep.subr.mxu0 0.0
        %2661 = vmatpush1.xpose.msra.mxu0 %v560
        %2662 = vmatprep.subr.mxu0 0.0
        %2663 = vmatpush1.xpose.msra.mxu0 %v563
        %2664 = vmatprep.subr.mxu0 0.0
        %2665 = vmatpush1.xpose.msra.mxu0 %v566
        %2666 = vmatprep.subr.mxu0 0.0
        %2667 = vmatpush1.xpose.msra.mxu0 %v569
        %2668 = vmatprep.subr.mxu0 0.0
        %2669 = vmatpush1.xpose.msra.mxu0 %v572
        %2670 = vmatprep.subr.mxu0 0.0
        %2671 = vmatpush1.xpose.msra.mxu0 %v575
        %2672 = vmatprep.subr.mxu0 0.0
        %2673 = vmatpush1.xpose.msra.mxu0 %v578
        %2674 = vmatprep.subr.mxu0 0.0
        %2675 = vmatpush1.xpose.msra.mxu0 %v581
        %2676 = vmatprep.subr.mxu0 0.0
        %2677 = vmatpush1.xpose.msra.mxu0 %v584
        %2678 = vmatprep.subr.mxu0 0.0
        %2679 = vmatpush1.xpose.msra.mxu0 %v587
        %2680 = vmatprep.subr.mxu0 0.0
        %2681 = vmatpush1.xpose.msra.mxu0 %v590
        %2682 = vmatprep.subr.mxu0 0.0
        %2683 = vmatpush1.xpose.msra.mxu0 %v593
        %2684 = vmatprep.mubr.f32.mxu0 0.0
        %2685 = vmatmul.mubr.f32.gmra.mrb[0].mxu0 %v2618
        %v2686 = vpop.f32.mrb[0].mxu0
        %v2687 = vadd.f32 0.0, %v2686
        %v2688 = vpop.f32.mrb[0].mxu0
        %v2689 = vadd.f32 0.0, %v2688
        %2690 = vdwg.mxu0
        %2691 = vmatprep.subr.mxu0 0.0
        %2692 = vmatpush1.xpose.msra.mxu0 %v596
        %2693 = vmatprep.subr.mxu0 0.0
        %2694 = vmatpush1.xpose.msra.mxu0 %v599
        %2695 = vmatprep.subr.mxu0 0.0
        %2696 = vmatpush1.xpose.msra.mxu0 %v602
        %2697 = vmatprep.subr.mxu0 0.0
        %2698 = vmatpush1.xpose.msra.mxu0 %v605
        %2699 = vmatprep.subr.mxu0 0.0
        %2700 = vmatpush1.xpose.msra.mxu0 %v608
        %2701 = vmatprep.subr.mxu0 0.0
        %2702 = vmatpush1.xpose.msra.mxu0 %v611
        %2703 = vmatprep.subr.mxu0 0.0
        %2704 = vmatpush1.xpose.msra.mxu0 %v614
        %2705 = vmatprep.subr.mxu0 0.0
        %2706 = vmatpush1.xpose.msra.mxu0 %v617
        %2707 = vmatprep.subr.mxu0 0.0
        %2708 = vmatpush1.xpose.msra.mxu0 %v620
        %2709 = vmatprep.subr.mxu0 0.0
        %2710 = vmatpush1.xpose.msra.mxu0 %v623
        %2711 = vmatprep.subr.mxu0 0.0
        %2712 = vmatpush1.xpose.msra.mxu0 %v626
        %2713 = vmatprep.subr.mxu0 0.0
        %2714 = vmatpush1.xpose.msra.mxu0 %v629
        %2715 = vmatprep.subr.mxu0 0.0
        %2716 = vmatpush1.xpose.msra.mxu0 %v632
        %2717 = vmatprep.subr.mxu0 0.0
        %2718 = vmatpush1.xpose.msra.mxu0 %v635
        %2719 = vmatprep.subr.mxu0 0.0
        %2720 = vmatpush1.xpose.msra.mxu0 %v638
        %2721 = vmatprep.subr.mxu0 0.0
        %2722 = vmatpush1.xpose.msra.mxu0 %v641
        %2723 = vmatprep.subr.mxu0 0.0
        %2724 = vmatpush1.xpose.msra.mxu0 %v644
        %2725 = vmatprep.subr.mxu0 0.0
        %2726 = vmatpush1.xpose.msra.mxu0 %v647
        %2727 = vmatprep.subr.mxu0 0.0
        %2728 = vmatpush1.xpose.msra.mxu0 %v650
        %2729 = vmatprep.subr.mxu0 0.0
        %2730 = vmatpush1.xpose.msra.mxu0 %v653
        %2731 = vmatprep.subr.mxu0 0.0
        %2732 = vmatpush1.xpose.msra.mxu0 %v656
        %2733 = vmatprep.subr.mxu0 0.0
        %2734 = vmatpush1.xpose.msra.mxu0 %v659
        %2735 = vmatprep.subr.mxu0 0.0
        %2736 = vmatpush1.xpose.msra.mxu0 %v662
        %2737 = vmatprep.subr.mxu0 0.0
        %2738 = vmatpush1.xpose.msra.mxu0 %v665
        %2739 = vmatprep.subr.mxu0 0.0
        %2740 = vmatpush1.xpose.msra.mxu0 %v668
        %2741 = vmatprep.subr.mxu0 0.0
        %2742 = vmatpush1.xpose.msra.mxu0 %v671
        %2743 = vmatprep.subr.mxu0 0.0
        %2744 = vmatpush1.xpose.msra.mxu0 %v674
        %2745 = vmatprep.subr.mxu0 0.0
        %2746 = vmatpush1.xpose.msra.mxu0 %v677
        %2747 = vmatprep.subr.mxu0 0.0
        %2748 = vmatpush1.xpose.msra.mxu0 %v680
        %2749 = vmatprep.subr.mxu0 0.0
        %2750 = vmatpush1.xpose.msra.mxu0 %v683
        %2751 = vmatprep.subr.mxu0 0.0
        %2752 = vmatpush1.xpose.msra.mxu0 %v686
        %2753 = vmatprep.subr.mxu0 0.0
        %2754 = vmatpush1.xpose.msra.mxu0 %v689
        %2755 = vmatprep.mubr.f32.mxu0 0.0
        %2756 = vmatmul.mubr.f32.gmra.mrb[0].mxu0 %v2618
        %v2757 = vpop.f32.mrb[0].mxu0
        %v2758 = vadd.f32 0.0, %v2757
        %v2759 = vpop.f32.mrb[0].mxu0
        %v2760 = vadd.f32 0.0, %v2759
        %2761 = vdwg.mxu0
        %2762 = vmatprep.subr.mxu0 0.0
        %2763 = vmatpush1.xpose.msra.mxu0 %v692
        %2764 = vmatprep.subr.mxu0 0.0
        %2765 = vmatpush1.xpose.msra.mxu0 %v695
        %2766 = vmatprep.subr.mxu0 0.0
        %2767 = vmatpush1.xpose.msra.mxu0 %v698
        %2768 = vmatprep.subr.mxu0 0.0
        %2769 = vmatpush1.xpose.msra.mxu0 %v701
        %2770 = vmatprep.subr.mxu0 0.0
        %2771 = vmatpush1.xpose.msra.mxu0 %v704
        %2772 = vmatprep.subr.mxu0 0.0
        %2773 = vmatpush1.xpose.msra.mxu0 %v707
        %2774 = vmatprep.subr.mxu0 0.0
        %2775 = vmatpush1.xpose.msra.mxu0 %v710
        %2776 = vmatprep.subr.mxu0 0.0
        %2777 = vmatpush1.xpose.msra.mxu0 %v713
        %2778 = vmatprep.subr.mxu0 0.0
        %2779 = vmatpush1.xpose.msra.mxu0 %v716
        %2780 = vmatprep.subr.mxu0 0.0
        %2781 = vmatpush1.xpose.msra.mxu0 %v719
        %2782 = vmatprep.subr.mxu0 0.0
        %2783 = vmatpush1.xpose.msra.mxu0 %v722
        %2784 = vmatprep.subr.mxu0 0.0
        %2785 = vmatpush1.xpose.msra.mxu0 %v725
        %2786 = vmatprep.subr.mxu0 0.0
        %2787 = vmatpush1.xpose.msra.mxu0 %v728
        %2788 = vmatprep.subr.mxu0 0.0
        %2789 = vmatpush1.xpose.msra.mxu0 %v731
        %2790 = vmatprep.subr.mxu0 0.0
        %2791 = vmatpush1.xpose.msra.mxu0 %v734
        %2792 = vmatprep.subr.mxu0 0.0
        %2793 = vmatpush1.xpose.msra.mxu0 %v737
        %2794 = vmatprep.subr.mxu0 0.0
        %2795 = vmatpush1.xpose.msra.mxu0 %v740
        %2796 = vmatprep.subr.mxu0 0.0
        %2797 = vmatpush1.xpose.msra.mxu0 %v743
        %2798 = vmatprep.subr.mxu0 0.0
        %2799 = vmatpush1.xpose.msra.mxu0 %v746
        %2800 = vmatprep.subr.mxu0 0.0
        %2801 = vmatpush1.xpose.msra.mxu0 %v749
        %2802 = vmatprep.subr.mxu0 0.0
        %2803 = vmatpush1.xpose.msra.mxu0 %v752
        %2804 = vmatprep.subr.mxu0 0.0
        %2805 = vmatpush1.xpose.msra.mxu0 %v755
        %2806 = vmatprep.subr.mxu0 0.0
        %2807 = vmatpush1.xpose.msra.mxu0 %v758
        %2808 = vmatprep.subr.mxu0 0.0
        %2809 = vmatpush1.xpose.msra.mxu0 %v761
        %2810 = vmatprep.subr.mxu0 0.0
        %2811 = vmatpush1.xpose.msra.mxu0 %v764
        %2812 = vmatprep.subr.mxu0 0.0
        %2813 = vmatpush1.xpose.msra.mxu0 %v767
        %2814 = vmatprep.subr.mxu0 0.0
        %2815 = vmatpush1.xpose.msra.mxu0 %v770
        %2816 = vmatprep.subr.mxu0 0.0
        %2817 = vmatpush1.xpose.msra.mxu0 %v773
        %2818 = vmatprep.subr.mxu0 0.0
        %2819 = vmatpush1.xpose.msra.mxu0 %v776
        %2820 = vmatprep.subr.mxu0 0.0
        %2821 = vmatpush1.xpose.msra.mxu0 %v779
        %2822 = vmatprep.subr.mxu0 0.0
        %2823 = vmatpush1.xpose.msra.mxu0 %v782
        %2824 = vmatprep.subr.mxu0 0.0
        %2825 = vmatpush1.xpose.msra.mxu0 %v785
        %2826 = vmatprep.mubr.f32.mxu0 0.0
        %2827 = vmatmul.mubr.f32.gmra.mrb[0].mxu0 %v2618
        %v2828 = vpop.f32.mrb[0].mxu0
        %v2829 = vadd.f32 0.0, %v2828
        %v2830 = vpop.f32.mrb[0].mxu0
        %v2831 = vadd.f32 0.0, %v2830
        %2832 = vdwg.mxu0
        %2833 = vmatprep.subr.mxu0 0.0
        %2834 = vmatpush1.xpose.msra.mxu0 %v788
        %2835 = vmatprep.subr.mxu0 0.0
        %2836 = vmatpush1.xpose.msra.mxu0 %v791
        %2837 = vmatprep.subr.mxu0 0.0
        %2838 = vmatpush1.xpose.msra.mxu0 %v794
        %2839 = vmatprep.subr.mxu0 0.0
        %2840 = vmatpush1.xpose.msra.mxu0 %v797
        %2841 = vmatprep.subr.mxu0 0.0
        %2842 = vmatpush1.xpose.msra.mxu0 %v800
        %2843 = vmatprep.subr.mxu0 0.0
        %2844 = vmatpush1.xpose.msra.mxu0 %v803
        %2845 = vmatprep.subr.mxu0 0.0
        %2846 = vmatpush1.xpose.msra.mxu0 %v806
        %2847 = vmatprep.subr.mxu0 0.0
        %2848 = vmatpush1.xpose.msra.mxu0 %v809
        %2849 = vmatprep.subr.mxu0 0.0
        %2850 = vmatpush1.xpose.msra.mxu0 %v812
        %2851 = vmatprep.subr.mxu0 0.0
        %2852 = vmatpush1.xpose.msra.mxu0 %v815
        %2853 = vmatprep.subr.mxu0 0.0
        %2854 = vmatpush1.xpose.msra.mxu0 %v818
        %2855 = vmatprep.subr.mxu0 0.0
        %2856 = vmatpush1.xpose.msra.mxu0 %v821
        %2857 = vmatprep.subr.mxu0 0.0
        %2858 = vmatpush1.xpose.msra.mxu0 %v824
        %2859 = vmatprep.subr.mxu0 0.0
        %2860 = vmatpush1.xpose.msra.mxu0 %v827
        %2861 = vmatprep.subr.mxu0 0.0
        %2862 = vmatpush1.xpose.msra.mxu0 %v830
        %2863 = vmatprep.subr.mxu0 0.0
        %2864 = vmatpush1.xpose.msra.mxu0 %v833
        %2865 = vmatprep.subr.mxu0 0.0
        %2866 = vmatpush1.xpose.msra.mxu0 %v836
        %2867 = vmatprep.subr.mxu0 0.0
        %2868 = vmatpush1.xpose.msra.mxu0 %v839
        %2869 = vmatprep.subr.mxu0 0.0
        %2870 = vmatpush1.xpose.msra.mxu0 %v842
        %2871 = vmatprep.subr.mxu0 0.0
        %2872 = vmatpush1.xpose.msra.mxu0 %v845
        %2873 = vmatprep.subr.mxu0 0.0
        %2874 = vmatpush1.xpose.msra.mxu0 %v848
        %2875 = vmatprep.subr.mxu0 0.0
        %2876 = vmatpush1.xpose.msra.mxu0 %v851
        %2877 = vmatprep.subr.mxu0 0.0
        %2878 = vmatpush1.xpose.msra.mxu0 %v854
        %2879 = vmatprep.subr.mxu0 0.0
        %2880 = vmatpush1.xpose.msra.mxu0 %v857
        %2881 = vmatprep.subr.mxu0 0.0
        %2882 = vmatpush1.xpose.msra.mxu0 %v860
        %2883 = vmatprep.subr.mxu0 0.0
        %2884 = vmatpush1.xpose.msra.mxu0 %v863
        %2885 = vmatprep.subr.mxu0 0.0
        %2886 = vmatpush1.xpose.msra.mxu0 %v866
        %2887 = vmatprep.subr.mxu0 0.0
        %2888 = vmatpush1.xpose.msra.mxu0 %v869
        %2889 = vmatprep.subr.mxu0 0.0
        %2890 = vmatpush1.xpose.msra.mxu0 %v872
        %2891 = vmatprep.subr.mxu0 0.0
        %2892 = vmatpush1.xpose.msra.mxu0 %v875
        %2893 = vmatprep.subr.mxu0 0.0
        %2894 = vmatpush1.xpose.msra.mxu0 %v878
        %2895 = vmatprep.subr.mxu0 0.0
        %2896 = vmatpush1.xpose.msra.mxu0 %v881
        %2897 = vmatprep.mubr.f32.mxu0 0.0
        %2898 = vmatmul.mubr.f32.gmra.mrb[0].mxu0 %v2618
        %v2899 = vpop.f32.mrb[0].mxu0
        %v2900 = vadd.f32 0.0, %v2899
        %v2901 = vpop.f32.mrb[0].mxu0
        %v2902 = vadd.f32 0.0, %v2901
        %2903 = vdwg.mxu0
        %2904 = vmatprep.subr.mxu0 0.0
        %2905 = vmatpush1.xpose.msra.mxu0 %v884
        %2906 = vmatprep.subr.mxu0 0.0
        %2907 = vmatpush1.xpose.msra.mxu0 %v887
        %2908 = vmatprep.subr.mxu0 0.0
        %2909 = vmatpush1.xpose.msra.mxu0 %v890
        %2910 = vmatprep.subr.mxu0 0.0
        %2911 = vmatpush1.xpose.msra.mxu0 %v893
        %2912 = vmatprep.subr.mxu0 0.0
        %2913 = vmatpush1.xpose.msra.mxu0 %v896
        %2914 = vmatprep.subr.mxu0 0.0
        %2915 = vmatpush1.xpose.msra.mxu0 %v899
        %2916 = vmatprep.subr.mxu0 0.0
        %2917 = vmatpush1.xpose.msra.mxu0 %v902
        %2918 = vmatprep.subr.mxu0 0.0
        %2919 = vmatpush1.xpose.msra.mxu0 %v905
        %2920 = vmatprep.subr.mxu0 0.0
        %2921 = vmatpush1.xpose.msra.mxu0 %v908
        %2922 = vmatprep.subr.mxu0 0.0
        %2923 = vmatpush1.xpose.msra.mxu0 %v911
        %2924 = vmatprep.subr.mxu0 0.0
        %2925 = vmatpush1.xpose.msra.mxu0 %v914
        %2926 = vmatprep.subr.mxu0 0.0
        %2927 = vmatpush1.xpose.msra.mxu0 %v917
        %2928 = vmatprep.subr.mxu0 0.0
        %2929 = vmatpush1.xpose.msra.mxu0 %v920
        %2930 = vmatprep.subr.mxu0 0.0
        %2931 = vmatpush1.xpose.msra.mxu0 %v923
        %2932 = vmatprep.subr.mxu0 0.0
        %2933 = vmatpush1.xpose.msra.mxu0 %v926
        %2934 = vmatprep.subr.mxu0 0.0
        %2935 = vmatpush1.xpose.msra.mxu0 %v929
        %2936 = vmatprep.subr.mxu0 0.0
        %2937 = vmatpush1.xpose.msra.mxu0 %v932
        %2938 = vmatprep.subr.mxu0 0.0
        %2939 = vmatpush1.xpose.msra.mxu0 %v935
        %2940 = vmatprep.subr.mxu0 0.0
        %2941 = vmatpush1.xpose.msra.mxu0 %v938
        %2942 = vmatprep.subr.mxu0 0.0
        %2943 = vmatpush1.xpose.msra.mxu0 %v941
        %2944 = vmatprep.subr.mxu0 0.0
        %2945 = vmatpush1.xpose.msra.mxu0 %v944
        %2946 = vmatprep.subr.mxu0 0.0
        %2947 = vmatpush1.xpose.msra.mxu0 %v947
        %2948 = vmatprep.subr.mxu0 0.0
        %2949 = vmatpush1.xpose.msra.mxu0 %v950
        %2950 = vmatprep.subr.mxu0 0.0
        %2951 = vmatpush1.xpose.msra.mxu0 %v953
        %2952 = vmatprep.subr.mxu0 0.0
        %2953 = vmatpush1.xpose.msra.mxu0 %v956
        %2954 = vmatprep.subr.mxu0 0.0
        %2955 = vmatpush1.xpose.msra.mxu0 %v959
        %2956 = vmatprep.subr.mxu0 0.0
        %2957 = vmatpush1.xpose.msra.mxu0 %v962
        %2958 = vmatprep.subr.mxu0 0.0
        %2959 = vmatpush1.xpose.msra.mxu0 %v965
        %2960 = vmatprep.subr.mxu0 0.0
        %2961 = vmatpush1.xpose.msra.mxu0 %v968
        %2962 = vmatprep.subr.mxu0 0.0
        %2963 = vmatpush1.xpose.msra.mxu0 %v971
        %2964 = vmatprep.subr.mxu0 0.0
        %2965 = vmatpush1.xpose.msra.mxu0 %v974
        %2966 = vmatprep.subr.mxu0 0.0
        %2967 = vmatpush1.xpose.msra.mxu0 %v977
        %2968 = vmatprep.mubr.f32.mxu0 0.0
        %2969 = vmatmul.mubr.f32.gmra.mrb[0].mxu0 %v2618
        %v2970 = vpop.f32.mrb[0].mxu0
        %v2971 = vadd.f32 0.0, %v2970
        %v2972 = vpop.f32.mrb[0].mxu0
        %v2973 = vadd.f32 0.0, %v2972
        %2974 = vdwg.mxu0
        %2975 = vmatprep.subr.mxu0 0.0
        %2976 = vmatpush1.xpose.msra.mxu0 %v980
        %2977 = vmatprep.subr.mxu0 0.0
        %2978 = vmatpush1.xpose.msra.mxu0 %v983
        %2979 = vmatprep.subr.mxu0 0.0
        %2980 = vmatpush1.xpose.msra.mxu0 %v986
        %2981 = vmatprep.subr.mxu0 0.0
        %2982 = vmatpush1.xpose.msra.mxu0 %v989
        %2983 = vmatprep.subr.mxu0 0.0
        %2984 = vmatpush1.xpose.msra.mxu0 %v992
        %2985 = vmatprep.subr.mxu0 0.0
        %2986 = vmatpush1.xpose.msra.mxu0 %v995
        %2987 = vmatprep.subr.mxu0 0.0
        %2988 = vmatpush1.xpose.msra.mxu0 %v998
        %2989 = vmatprep.subr.mxu0 0.0
        %2990 = vmatpush1.xpose.msra.mxu0 %v1001
        %2991 = vmatprep.subr.mxu0 0.0
        %2992 = vmatpush1.xpose.msra.mxu0 %v1004
        %2993 = vmatprep.subr.mxu0 0.0
        %2994 = vmatpush1.xpose.msra.mxu0 %v1007
        %2995 = vmatprep.subr.mxu0 0.0
        %2996 = vmatpush1.xpose.msra.mxu0 %v1010
        %2997 = vmatprep.subr.mxu0 0.0
        %2998 = vmatpush1.xpose.msra.mxu0 %v1013
        %2999 = vmatprep.subr.mxu0 0.0
        %3000 = vmatpush1.xpose.msra.mxu0 %v1016
        %3001 = vmatprep.subr.mxu0 0.0
        %3002 = vmatpush1.xpose.msra.mxu0 %v1019
        %3003 = vmatprep.subr.mxu0 0.0
        %3004 = vmatpush1.xpose.msra.mxu0 %v1022
        %3005 = vmatprep.subr.mxu0 0.0
        %3006 = vmatpush1.xpose.msra.mxu0 %v1025
        %3007 = vmatprep.subr.mxu0 0.0
        %3008 = vmatpush1.xpose.msra.mxu0 %v1028
        %3009 = vmatprep.subr.mxu0 0.0
        %3010 = vmatpush1.xpose.msra.mxu0 %v1031
        %3011 = vmatprep.subr.mxu0 0.0
        %3012 = vmatpush1.xpose.msra.mxu0 %v1034
        %3013 = vmatprep.subr.mxu0 0.0
        %3014 = vmatpush1.xpose.msra.mxu0 %v1037
        %3015 = vmatprep.subr.mxu0 0.0
        %3016 = vmatpush1.xpose.msra.mxu0 %v1040
        %3017 = vmatprep.subr.mxu0 0.0
        %3018 = vmatpush1.xpose.msra.mxu0 %v1043
        %3019 = vmatprep.subr.mxu0 0.0
        %3020 = vmatpush1.xpose.msra.mxu0 %v1046
        %3021 = vmatprep.subr.mxu0 0.0
        %3022 = vmatpush1.xpose.msra.mxu0 %v1049
        %3023 = vmatprep.subr.mxu0 0.0
        %3024 = vmatpush1.xpose.msra.mxu0 %v1052
        %3025 = vmatprep.subr.mxu0 0.0
        %3026 = vmatpush1.xpose.msra.mxu0 %v1055
        %3027 = vmatprep.subr.mxu0 0.0
        %3028 = vmatpush1.xpose.msra.mxu0 %v1058
        %3029 = vmatprep.subr.mxu0 0.0
        %3030 = vmatpush1.xpose.msra.mxu0 %v1061
        %3031 = vmatprep.subr.mxu0 0.0
        %3032 = vmatpush1.xpose.msra.mxu0 %v1064
        %3033 = vmatprep.subr.mxu0 0.0
        %3034 = vmatpush1.xpose.msra.mxu0 %v1067
        %3035 = vmatprep.subr.mxu0 0.0
        %3036 = vmatpush1.xpose.msra.mxu0 %v1070
        %3037 = vmatprep.subr.mxu0 0.0
        %3038 = vmatpush1.xpose.msra.mxu0 %v1073
        %3039 = vmatprep.mubr.f32.mxu0 0.0
        %3040 = vmatmul.mubr.f32.gmra.mrb[0].mxu0 %v2618
        %v3041 = vpop.f32.mrb[0].mxu0
        %v3042 = vadd.f32 0.0, %v3041
        %v3043 = vpop.f32.mrb[0].mxu0
        %v3044 = vadd.f32 0.0, %v3043
        %3045 = vdwg.mxu0
        %3046 = vmatprep.subr.mxu0 0.0
        %3047 = vmatpush1.xpose.msra.mxu0 %v1076
        %3048 = vmatprep.subr.mxu0 0.0
        %3049 = vmatpush1.xpose.msra.mxu0 %v1079
        %3050 = vmatprep.subr.mxu0 0.0
        %3051 = vmatpush1.xpose.msra.mxu0 %v1082
        %3052 = vmatprep.subr.mxu0 0.0
        %3053 = vmatpush1.xpose.msra.mxu0 %v1085
        %3054 = vmatprep.subr.mxu0 0.0
        %3055 = vmatpush1.xpose.msra.mxu0 %v1088
        %3056 = vmatprep.subr.mxu0 0.0
        %3057 = vmatpush1.xpose.msra.mxu0 %v1091
        %3058 = vmatprep.subr.mxu0 0.0
        %3059 = vmatpush1.xpose.msra.mxu0 %v1094
        %3060 = vmatprep.subr.mxu0 0.0
        %3061 = vmatpush1.xpose.msra.mxu0 %v1097
        %3062 = vmatprep.subr.mxu0 0.0
        %3063 = vmatpush1.xpose.msra.mxu0 %v1100
        %3064 = vmatprep.subr.mxu0 0.0
        %3065 = vmatpush1.xpose.msra.mxu0 %v1103
        %3066 = vmatprep.subr.mxu0 0.0
        %3067 = vmatpush1.xpose.msra.mxu0 %v1106
        %3068 = vmatprep.subr.mxu0 0.0
        %3069 = vmatpush1.xpose.msra.mxu0 %v1109
        %3070 = vmatprep.subr.mxu0 0.0
        %3071 = vmatpush1.xpose.msra.mxu0 %v1112
        %3072 = vmatprep.subr.mxu0 0.0
        %3073 = vmatpush1.xpose.msra.mxu0 %v1115
        %3074 = vmatprep.subr.mxu0 0.0
        %3075 = vmatpush1.xpose.msra.mxu0 %v1118
        %3076 = vmatprep.subr.mxu0 0.0
        %3077 = vmatpush1.xpose.msra.mxu0 %v1121
        %3078 = vmatprep.subr.mxu0 0.0
        %3079 = vmatpush1.xpose.msra.mxu0 %v1124
        %3080 = vmatprep.subr.mxu0 0.0
        %3081 = vmatpush1.xpose.msra.mxu0 %v1127
        %3082 = vmatprep.subr.mxu0 0.0
        %3083 = vmatpush1.xpose.msra.mxu0 %v1130
        %3084 = vmatprep.subr.mxu0 0.0
        %3085 = vmatpush1.xpose.msra.mxu0 %v1133
        %3086 = vmatprep.subr.mxu0 0.0
        %3087 = vmatpush1.xpose.msra.mxu0 %v1136
        %3088 = vmatprep.subr.mxu0 0.0
        %3089 = vmatpush1.xpose.msra.mxu0 %v1139
        %3090 = vmatprep.subr.mxu0 0.0
        %3091 = vmatpush1.xpose.msra.mxu0 %v1142
        %3092 = vmatprep.subr.mxu0 0.0
        %3093 = vmatpush1.xpose.msra.mxu0 %v1145
        %3094 = vmatprep.subr.mxu0 0.0
        %3095 = vmatpush1.xpose.msra.mxu0 %v1148
        %3096 = vmatprep.subr.mxu0 0.0
        %3097 = vmatpush1.xpose.msra.mxu0 %v1151
        %3098 = vmatprep.subr.mxu0 0.0
        %3099 = vmatpush1.xpose.msra.mxu0 %v1154
        %3100 = vmatprep.subr.mxu0 0.0
        %3101 = vmatpush1.xpose.msra.mxu0 %v1157
        %3102 = vmatprep.subr.mxu0 0.0
        %3103 = vmatpush1.xpose.msra.mxu0 %v1160
        %3104 = vmatprep.subr.mxu0 0.0
        %3105 = vmatpush1.xpose.msra.mxu0 %v1163
        %3106 = vmatprep.subr.mxu0 0.0
        %3107 = vmatpush1.xpose.msra.mxu0 %v1166
        %3108 = vmatprep.subr.mxu0 0.0
        %3109 = vmatpush1.xpose.msra.mxu0 %v1169
        %3110 = vmatprep.mubr.f32.mxu0 0.0
        %3111 = vmatmul.mubr.f32.gmra.mrb[0].mxu0 %v2618
        %v3112 = vpop.f32.mrb[0].mxu0
        %v3113 = vadd.f32 0.0, %v3112
        %v3114 = vpop.f32.mrb[0].mxu0
        %v3115 = vadd.f32 0.0, %v3114
        %3116 = vdwg.mxu0
        %3117 = vmatprep.subr.mxu0 0.0
        %3118 = vmatpush1.xpose.msra.mxu0 %v1172
        %3119 = vmatprep.subr.mxu0 0.0
        %3120 = vmatpush1.xpose.msra.mxu0 %v1175
        %3121 = vmatprep.subr.mxu0 0.0
        %3122 = vmatpush1.xpose.msra.mxu0 %v1178
        %3123 = vmatprep.subr.mxu0 0.0
        %3124 = vmatpush1.xpose.msra.mxu0 %v1181
        %3125 = vmatprep.subr.mxu0 0.0
        %3126 = vmatpush1.xpose.msra.mxu0 %v1184
        %3127 = vmatprep.subr.mxu0 0.0
        %3128 = vmatpush1.xpose.msra.mxu0 %v1187
        %3129 = vmatprep.subr.mxu0 0.0
        %3130 = vmatpush1.xpose.msra.mxu0 %v1190
        %3131 = vmatprep.subr.mxu0 0.0
        %3132 = vmatpush1.xpose.msra.mxu0 %v1193
        %3133 = vmatprep.subr.mxu0 0.0
        %3134 = vmatpush1.xpose.msra.mxu0 %v1196
        %3135 = vmatprep.subr.mxu0 0.0
        %3136 = vmatpush1.xpose.msra.mxu0 %v1199
        %3137 = vmatprep.subr.mxu0 0.0
        %3138 = vmatpush1.xpose.msra.mxu0 %v1202
        %3139 = vmatprep.subr.mxu0 0.0
        %3140 = vmatpush1.xpose.msra.mxu0 %v1205
        %3141 = vmatprep.subr.mxu0 0.0
        %3142 = vmatpush1.xpose.msra.mxu0 %v1208
        %3143 = vmatprep.subr.mxu0 0.0
        %3144 = vmatpush1.xpose.msra.mxu0 %v1211
        %3145 = vmatprep.subr.mxu0 0.0
        %3146 = vmatpush1.xpose.msra.mxu0 %v1214
        %3147 = vmatprep.subr.mxu0 0.0
        %3148 = vmatpush1.xpose.msra.mxu0 %v1217
        %3149 = vmatprep.subr.mxu0 0.0
        %3150 = vmatpush1.xpose.msra.mxu0 %v1220
        %3151 = vmatprep.subr.mxu0 0.0
        %3152 = vmatpush1.xpose.msra.mxu0 %v1223
        %3153 = vmatprep.subr.mxu0 0.0
        %3154 = vmatpush1.xpose.msra.mxu0 %v1226
        %3155 = vmatprep.subr.mxu0 0.0
        %3156 = vmatpush1.xpose.msra.mxu0 %v1229
        %3157 = vmatprep.subr.mxu0 0.0
        %3158 = vmatpush1.xpose.msra.mxu0 %v1232
        %3159 = vmatprep.subr.mxu0 0.0
        %3160 = vmatpush1.xpose.msra.mxu0 %v1235
        %3161 = vmatprep.subr.mxu0 0.0
        %3162 = vmatpush1.xpose.msra.mxu0 %v1238
        %3163 = vmatprep.subr.mxu0 0.0
        %3164 = vmatpush1.xpose.msra.mxu0 %v1241
        %3165 = vmatprep.subr.mxu0 0.0
        %3166 = vmatpush1.xpose.msra.mxu0 %v1244
        %3167 = vmatprep.subr.mxu0 0.0
        %3168 = vmatpush1.xpose.msra.mxu0 %v1247
        %3169 = vmatprep.subr.mxu0 0.0
        %3170 = vmatpush1.xpose.msra.mxu0 %v1250
        %3171 = vmatprep.subr.mxu0 0.0
        %3172 = vmatpush1.xpose.msra.mxu0 %v1253
        %3173 = vmatprep.subr.mxu0 0.0
        %3174 = vmatpush1.xpose.msra.mxu0 %v1256
        %3175 = vmatprep.subr.mxu0 0.0
        %3176 = vmatpush1.xpose.msra.mxu0 %v1259
        %3177 = vmatprep.subr.mxu0 0.0
        %3178 = vmatpush1.xpose.msra.mxu0 %v1262
        %3179 = vmatprep.subr.mxu0 0.0
        %3180 = vmatpush1.xpose.msra.mxu0 %v1265
        %3181 = vmatprep.mubr.f32.mxu0 0.0
        %3182 = vmatmul.mubr.f32.gmra.mrb[0].mxu0 %v2618
        %v3183 = vpop.f32.mrb[0].mxu0
        %v3184 = vadd.f32 0.0, %v3183
        %v3185 = vpop.f32.mrb[0].mxu0
        %v3186 = vadd.f32 0.0, %v3185
        %3187 = vdwg.mxu0
        %v3188 = vld [vmem:[%s4] sm:$0xf]
        %3190 = vset.pattern.permute.xlu0 0
        %3191 = vperm.xlu0 %3190, %v3188
        %v3192 = vpop.permute.xlu0 %3191
        %v3194 = vadd.f32 %v3192, %v2115
        %v3195 = vadd.f32 %v3192, %v2117
        %v3196 = vadd.f32 %v3192, %v2186
        %v3197 = vadd.f32 %v3192, %v2188
        %v3198 = vadd.f32 %v3192, %v2257
        %v3199 = vadd.f32 %v3192, %v2259
        %v3200 = vadd.f32 %v3192, %v2328
        %v3201 = vadd.f32 %v3192, %v2330
        %v3202 = vadd.f32 %v3192, %v2399
        %v3203 = vadd.f32 %v3192, %v2401
        %v3204 = vadd.f32 %v3192, %v2470
        %v3205 = vadd.f32 %v3192, %v2472
        %v3206 = vadd.f32 %v3192, %v2541
        %v3207 = vadd.f32 %v3192, %v2543
        %v3208 = vadd.f32 %v3192, %v2612
        %v3209 = vadd.f32 %v3192, %v2614
        %v3210 = vadd.f32 %v3194, %v2687
        %v3211 = vadd.f32 %v3195, %v2689
        %v3212 = vadd.f32 %v3196, %v2758
        %v3213 = vadd.f32 %v3197, %v2760
        %v3214 = vadd.f32 %v3198, %v2829
        %v3215 = vadd.f32 %v3199, %v2831
        %v3216 = vadd.f32 %v3200, %v2900
        %v3217 = vadd.f32 %v3201, %v2902
        %v3218 = vadd.f32 %v3202, %v2971
        %v3219 = vadd.f32 %v3203, %v2973
        %v3220 = vadd.f32 %v3204, %v3042
        %v3221 = vadd.f32 %v3205, %v3044
        %v3222 = vadd.f32 %v3206, %v3113
        %v3223 = vadd.f32 %v3207, %v3115
        %v3224 = vadd.f32 %v3208, %v3184
        %v3225 = vadd.f32 %v3209, %v3186
        %vm3226 = vcmask 1043456
        %v3227 = vsel %vm3226, %v3210, -inf
        %v3228 = vrot.slane %v3227, 4
        %v3229 = vmax.f32 %v3227, %v3228
        %v3230 = vrot.slane %v3229, 2
        %v3231 = vmax.f32 %v3229, %v3230
        %v3232 = vrot.slane %v3231, 1
        %v3233 = vmax.f32 %v3231, %v3232
        %v3234 = vsel %vm3226, %v3211, -inf
        %v3235 = vrot.slane %v3234, 4
        %v3236 = vmax.f32 %v3234, %v3235
        %v3237 = vrot.slane %v3236, 2
        %v3238 = vmax.f32 %v3236, %v3237
        %v3239 = vrot.slane %v3238, 1
        %v3240 = vmax.f32 %v3238, %v3239
        %v3241 = vsel %vm3226, %v3212, -inf
        %v3242 = vrot.slane %v3241, 4
        %v3243 = vmax.f32 %v3241, %v3242
        %v3244 = vrot.slane %v3243, 2
        %v3245 = vmax.f32 %v3243, %v3244
        %v3246 = vrot.slane %v3245, 1
        %v3247 = vmax.f32 %v3245, %v3246
        %v3248 = vsel %vm3226, %v3213, -inf
        %v3249 = vrot.slane %v3248, 4
        %v3250 = vmax.f32 %v3248, %v3249
        %v3251 = vrot.slane %v3250, 2
        %v3252 = vmax.f32 %v3250, %v3251
        %v3253 = vrot.slane %v3252, 1
        %v3254 = vmax.f32 %v3252, %v3253
        %v3255 = vsel %vm3226, %v3214, -inf
        %v3256 = vrot.slane %v3255, 4
        %v3257 = vmax.f32 %v3255, %v3256
        %v3258 = vrot.slane %v3257, 2
        %v3259 = vmax.f32 %v3257, %v3258
        %v3260 = vrot.slane %v3259, 1
        %v3261 = vmax.f32 %v3259, %v3260
        %v3262 = vsel %vm3226, %v3215, -inf
        %v3263 = vrot.slane %v3262, 4
        %v3264 = vmax.f32 %v3262, %v3263
        %v3265 = vrot.slane %v3264, 2
        %v3266 = vmax.f32 %v3264, %v3265
        %v3267 = vrot.slane %v3266, 1
        %v3268 = vmax.f32 %v3266, %v3267
        %v3269 = vsel %vm3226, %v3216, -inf
        %v3270 = vrot.slane %v3269, 4
        %v3271 = vmax.f32 %v3269, %v3270
        %v3272 = vrot.slane %v3271, 2
        %v3273 = vmax.f32 %v3271, %v3272
        %v3274 = vrot.slane %v3273, 1
        %v3275 = vmax.f32 %v3273, %v3274
        %v3276 = vsel %vm3226, %v3217, -inf
        %v3277 = vrot.slane %v3276, 4
        %v3278 = vmax.f32 %v3276, %v3277
        %v3279 = vrot.slane %v3278, 2
        %v3280 = vmax.f32 %v3278, %v3279
        %v3281 = vrot.slane %v3280, 1
        %v3282 = vmax.f32 %v3280, %v3281
        %v3283 = vsel %vm3226, %v3218, -inf
        %v3284 = vrot.slane %v3283, 4
        %v3285 = vmax.f32 %v3283, %v3284
        %v3286 = vrot.slane %v3285, 2
        %v3287 = vmax.f32 %v3285, %v3286
        %v3288 = vrot.slane %v3287, 1
        %v3289 = vmax.f32 %v3287, %v3288
        %v3290 = vsel %vm3226, %v3219, -inf
        %v3291 = vrot.slane %v3290, 4
        %v3292 = vmax.f32 %v3290, %v3291
        %v3293 = vrot.slane %v3292, 2
        %v3294 = vmax.f32 %v3292, %v3293
        %v3295 = vrot.slane %v3294, 1
        %v3296 = vmax.f32 %v3294, %v3295
        %v3297 = vsel %vm3226, %v3220, -inf
        %v3298 = vrot.slane %v3297, 4
        %v3299 = vmax.f32 %v3297, %v3298
        %v3300 = vrot.slane %v3299, 2
        %v3301 = vmax.f32 %v3299, %v3300
        %v3302 = vrot.slane %v3301, 1
        %v3303 = vmax.f32 %v3301, %v3302
        %v3304 = vsel %vm3226, %v3221, -inf
        %v3305 = vrot.slane %v3304, 4
        %v3306 = vmax.f32 %v3304, %v3305
        %v3307 = vrot.slane %v3306, 2
        %v3308 = vmax.f32 %v3306, %v3307
        %v3309 = vrot.slane %v3308, 1
        %v3310 = vmax.f32 %v3308, %v3309
        %v3311 = vsel %vm3226, %v3222, -inf
        %v3312 = vrot.slane %v3311, 4
        %v3313 = vmax.f32 %v3311, %v3312
        %v3314 = vrot.slane %v3313, 2
        %v3315 = vmax.f32 %v3313, %v3314
        %v3316 = vrot.slane %v3315, 1
        %v3317 = vmax.f32 %v3315, %v3316
        %v3318 = vsel %vm3226, %v3223, -inf
        %v3319 = vrot.slane %v3318, 4
        %v3320 = vmax.f32 %v3318, %v3319
        %v3321 = vrot.slane %v3320, 2
        %v3322 = vmax.f32 %v3320, %v3321
        %v3323 = vrot.slane %v3322, 1
        %v3324 = vmax.f32 %v3322, %v3323
        %v3325 = vsel %vm3226, %v3224, -inf
        %v3326 = vrot.slane %v3325, 4
        %v3327 = vmax.f32 %v3325, %v3326
        %v3328 = vrot.slane %v3327, 2
        %v3329 = vmax.f32 %v3327, %v3328
        %v3330 = vrot.slane %v3329, 1
        %v3331 = vmax.f32 %v3329, %v3330
        %v3332 = vsel %vm3226, %v3225, -inf
        %v3333 = vrot.slane %v3332, 4
        %v3334 = vmax.f32 %v3332, %v3333
        %v3335 = vrot.slane %v3334, 2
        %v3336 = vmax.f32 %v3334, %v3335
        %v3337 = vrot.slane %v3336, 1
        %v3338 = vmax.f32 %v3336, %v3337
        %v3339 = vsub.f32 %v3210, %v3233
        %v3340 = vsub.f32 %v3211, %v3240
        %v3341 = vsub.f32 %v3212, %v3247
        %v3342 = vsub.f32 %v3213, %v3254
        %v3343 = vsub.f32 %v3214, %v3261
        %v3344 = vsub.f32 %v3215, %v3268
        %v3345 = vsub.f32 %v3216, %v3275
        %v3346 = vsub.f32 %v3217, %v3282
        %v3347 = vsub.f32 %v3218, %v3289
        %v3348 = vsub.f32 %v3219, %v3296
        %v3349 = vsub.f32 %v3220, %v3303
        %v3350 = vsub.f32 %v3221, %v3310
        %v3351 = vsub.f32 %v3222, %v3317
        %v3352 = vsub.f32 %v3223, %v3324
        %v3353 = vsub.f32 %v3224, %v3331
        %v3354 = vsub.f32 %v3225, %v3338
        %v3355 = vmul.f32 %v3339, 1.442695
        %v3356 = vpow.pop %v3355
        %v3357 = vmul.f32 %v3340, 1.442695
        %v3358 = vpow.pop %v3357
        %v3359 = vmul.f32 %v3341, 1.442695
        %v3360 = vpow.pop %v3359
        %v3361 = vmul.f32 %v3342, 1.442695
        %v3362 = vpow.pop %v3361
        %v3363 = vmul.f32 %v3343, 1.442695
        %v3364 = vpow.pop %v3363
        %v3365 = vmul.f32 %v3344, 1.442695
        %v3366 = vpow.pop %v3365
        %v3367 = vmul.f32 %v3345, 1.442695
        %v3368 = vpow.pop %v3367
        %v3369 = vmul.f32 %v3346, 1.442695
        %v3370 = vpow.pop %v3369
        %v3371 = vmul.f32 %v3347, 1.442695
        %v3372 = vpow.pop %v3371
        %v3373 = vmul.f32 %v3348, 1.442695
        %v3374 = vpow.pop %v3373
        %v3375 = vmul.f32 %v3349, 1.442695
        %v3376 = vpow.pop %v3375
        %v3377 = vmul.f32 %v3350, 1.442695
        %v3378 = vpow.pop %v3377
        %v3379 = vmul.f32 %v3351, 1.442695
        %v3380 = vpow.pop %v3379
        %v3381 = vmul.f32 %v3352, 1.442695
        %v3382 = vpow.pop %v3381
        %v3383 = vmul.f32 %v3353, 1.442695
        %v3384 = vpow.pop %v3383
        %v3385 = vmul.f32 %v3354, 1.442695
        %v3386 = vpow.pop %v3385
        %v3387 = vsel %vm3226, %v3356, 0.0
        %v3388 = vrot.slane %v3387, 4
        %v3389 = vadd.f32 %v3387, %v3388
        %v3390 = vrot.slane %v3389, 2
        %v3391 = vadd.f32 %v3389, %v3390
        %v3392 = vrot.slane %v3391, 1
        %v3393 = vadd.f32 %v3391, %v3392
        %v3394 = vsel %vm3226, %v3358, 0.0
        %v3395 = vrot.slane %v3394, 4
        %v3396 = vadd.f32 %v3394, %v3395
        %v3397 = vrot.slane %v3396, 2
        %v3398 = vadd.f32 %v3396, %v3397
        %v3399 = vrot.slane %v3398, 1
        %v3400 = vadd.f32 %v3398, %v3399
        %v3401 = vsel %vm3226, %v3360, 0.0
        %v3402 = vrot.slane %v3401, 4
        %v3403 = vadd.f32 %v3401, %v3402
        %v3404 = vrot.slane %v3403, 2
        %v3405 = vadd.f32 %v3403, %v3404
        %v3406 = vrot.slane %v3405, 1
        %v3407 = vadd.f32 %v3405, %v3406
        %v3408 = vsel %vm3226, %v3362, 0.0
        %v3409 = vrot.slane %v3408, 4
        %v3410 = vadd.f32 %v3408, %v3409
        %v3411 = vrot.slane %v3410, 2
        %v3412 = vadd.f32 %v3410, %v3411
        %v3413 = vrot.slane %v3412, 1
        %v3414 = vadd.f32 %v3412, %v3413
        %v3415 = vsel %vm3226, %v3364, 0.0
        %v3416 = vrot.slane %v3415, 4
        %v3417 = vadd.f32 %v3415, %v3416
        %v3418 = vrot.slane %v3417, 2
        %v3419 = vadd.f32 %v3417, %v3418
        %v3420 = vrot.slane %v3419, 1
        %v3421 = vadd.f32 %v3419, %v3420
        %v3422 = vsel %vm3226, %v3366, 0.0
        %v3423 = vrot.slane %v3422, 4
        %v3424 = vadd.f32 %v3422, %v3423
        %v3425 = vrot.slane %v3424, 2
        %v3426 = vadd.f32 %v3424, %v3425
        %v3427 = vrot.slane %v3426, 1
        %v3428 = vadd.f32 %v3426, %v3427
        %v3429 = vsel %vm3226, %v3368, 0.0
        %v3430 = vrot.slane %v3429, 4
        %v3431 = vadd.f32 %v3429, %v3430
        %v3432 = vrot.slane %v3431, 2
        %v3433 = vadd.f32 %v3431, %v3432
        %v3434 = vrot.slane %v3433, 1
        %v3435 = vadd.f32 %v3433, %v3434
        %v3436 = vsel %vm3226, %v3370, 0.0
        %v3437 = vrot.slane %v3436, 4
        %v3438 = vadd.f32 %v3436, %v3437
        %v3439 = vrot.slane %v3438, 2
        %v3440 = vadd.f32 %v3438, %v3439
        %v3441 = vrot.slane %v3440, 1
        %v3442 = vadd.f32 %v3440, %v3441
        %v3443 = vsel %vm3226, %v3372, 0.0
        %v3444 = vrot.slane %v3443, 4
        %v3445 = vadd.f32 %v3443, %v3444
        %v3446 = vrot.slane %v3445, 2
        %v3447 = vadd.f32 %v3445, %v3446
        %v3448 = vrot.slane %v3447, 1
        %v3449 = vadd.f32 %v3447, %v3448
        %v3450 = vsel %vm3226, %v3374, 0.0
        %v3451 = vrot.slane %v3450, 4
        %v3452 = vadd.f32 %v3450, %v3451
        %v3453 = vrot.slane %v3452, 2
        %v3454 = vadd.f32 %v3452, %v3453
        %v3455 = vrot.slane %v3454, 1
        %v3456 = vadd.f32 %v3454, %v3455
        %v3457 = vsel %vm3226, %v3376, 0.0
        %v3458 = vrot.slane %v3457, 4
        %v3459 = vadd.f32 %v3457, %v3458
        %v3460 = vrot.slane %v3459, 2
        %v3461 = vadd.f32 %v3459, %v3460
        %v3462 = vrot.slane %v3461, 1
        %v3463 = vadd.f32 %v3461, %v3462
        %v3464 = vsel %vm3226, %v3378, 0.0
        %v3465 = vrot.slane %v3464, 4
        %v3466 = vadd.f32 %v3464, %v3465
        %v3467 = vrot.slane %v3466, 2
        %v3468 = vadd.f32 %v3466, %v3467
        %v3469 = vrot.slane %v3468, 1
        %v3470 = vadd.f32 %v3468, %v3469
        %v3471 = vsel %vm3226, %v3380, 0.0
        %v3472 = vrot.slane %v3471, 4
        %v3473 = vadd.f32 %v3471, %v3472
        %v3474 = vrot.slane %v3473, 2
        %v3475 = vadd.f32 %v3473, %v3474
        %v3476 = vrot.slane %v3475, 1
        %v3477 = vadd.f32 %v3475, %v3476
        %v3478 = vsel %vm3226, %v3382, 0.0
        %v3479 = vrot.slane %v3478, 4
        %v3480 = vadd.f32 %v3478, %v3479
        %v3481 = vrot.slane %v3480, 2
        %v3482 = vadd.f32 %v3480, %v3481
        %v3483 = vrot.slane %v3482, 1
        %v3484 = vadd.f32 %v3482, %v3483
        %v3485 = vsel %vm3226, %v3384, 0.0
        %v3486 = vrot.slane %v3485, 4
        %v3487 = vadd.f32 %v3485, %v3486
        %v3488 = vrot.slane %v3487, 2
        %v3489 = vadd.f32 %v3487, %v3488
        %v3490 = vrot.slane %v3489, 1
        %v3491 = vadd.f32 %v3489, %v3490
        %v3492 = vsel %vm3226, %v3386, 0.0
        %v3493 = vrot.slane %v3492, 4
        %v3494 = vadd.f32 %v3492, %v3493
        %v3495 = vrot.slane %v3494, 2
        %v3496 = vadd.f32 %v3494, %v3495
        %v3497 = vrot.slane %v3496, 1
        %v3498 = vadd.f32 %v3496, %v3497
        %v3499 = vlog2.pop %v3393
        %v3500 = vmul.f32 %v3499, 0.6931472
        %v3501 = vlog2.pop %v3400
        %v3502 = vmul.f32 %v3501, 0.6931472
        %v3503 = vlog2.pop %v3407
        %v3504 = vmul.f32 %v3503, 0.6931472
        %v3505 = vlog2.pop %v3414
        %v3506 = vmul.f32 %v3505, 0.6931472
        %v3507 = vlog2.pop %v3421
        %v3508 = vmul.f32 %v3507, 0.6931472
        %v3509 = vlog2.pop %v3428
        %v3510 = vmul.f32 %v3509, 0.6931472
        %v3511 = vlog2.pop %v3435
        %v3512 = vmul.f32 %v3511, 0.6931472
        %v3513 = vlog2.pop %v3442
        %v3514 = vmul.f32 %v3513, 0.6931472
        %v3515 = vlog2.pop %v3449
        %v3516 = vmul.f32 %v3515, 0.6931472
        %v3517 = vlog2.pop %v3456
        %v3518 = vmul.f32 %v3517, 0.6931472
        %v3519 = vlog2.pop %v3463
        %v3520 = vmul.f32 %v3519, 0.6931472
        %v3521 = vlog2.pop %v3470
        %v3522 = vmul.f32 %v3521, 0.6931472
        %v3523 = vlog2.pop %v3477
        %v3524 = vmul.f32 %v3523, 0.6931472
        %v3525 = vlog2.pop %v3484
        %v3526 = vmul.f32 %v3525, 0.6931472
        %v3527 = vlog2.pop %v3491
        %v3528 = vmul.f32 %v3527, 0.6931472
        %v3529 = vlog2.pop %v3498
        %v3530 = vmul.f32 %v3529, 0.6931472
        %v3531 = vadd.f32 %v3233, %v3500
        %v3532 = vadd.f32 %v3240, %v3502
        %v3533 = vadd.f32 %v3247, %v3504
        %v3534 = vadd.f32 %v3254, %v3506
        %v3535 = vadd.f32 %v3261, %v3508
        %v3536 = vadd.f32 %v3268, %v3510
        %v3537 = vadd.f32 %v3275, %v3512
        %v3538 = vadd.f32 %v3282, %v3514
        %v3539 = vadd.f32 %v3289, %v3516
        %v3540 = vadd.f32 %v3296, %v3518
        %v3541 = vadd.f32 %v3303, %v3520
        %v3542 = vadd.f32 %v3310, %v3522
        %v3543 = vadd.f32 %v3317, %v3524
        %v3544 = vadd.f32 %v3324, %v3526
        %v3545 = vadd.f32 %v3331, %v3528
        %v3546 = vadd.f32 %v3338, %v3530
        %v3563 = vcombine.low %v3531, %v3532
        %v3564 = vcombine.low %v3533, %v3534
        %v3565 = vcombine.low %v3535, %v3536
        %v3566 = vcombine.low %v3537, %v3538
        %v3568 = vunpack.c.l.s4 1966171168
        %v3569 = vunpack.c.0.s8 %v3568
        %v3570 = vlaneseq
        %v3571 = vshrl.u32 %v3570, 7
        %v3572 = vsub.s32 %v3569, %v3571
        %v3573 = vrot.slane %v3563, %v3572
        %v3575 = vunpack.c.l.s4 1966171168
        %v3576 = vunpack.c.0.s8 %v3575
        %v3577 = vlaneseq
        %v3578 = vshrl.u32 %v3577, 7
        %v3579 = vsub.s32 %v3576, %v3578
        %v3580 = vrot.slane %v3564, %v3579
        %v3582 = vunpack.c.l.s4 1966171168
        %v3583 = vunpack.c.0.s8 %v3582
        %v3584 = vlaneseq
        %v3585 = vshrl.u32 %v3584, 7
        %v3586 = vsub.s32 %v3583, %v3585
        %v3587 = vrot.slane %v3565, %v3586
        %v3589 = vunpack.c.l.s4 1966171168
        %v3590 = vunpack.c.0.s8 %v3589
        %v3591 = vlaneseq
        %v3592 = vshrl.u32 %v3591, 7
        %v3593 = vsub.s32 %v3590, %v3592
        %v3594 = vrot.slane %v3566, %v3593
        %v3595 = vcombine.low %v3573, %v3580
        %v3596 = vcombine.low %v3587, %v3594
        %v3598 = vunpack.c.l.s4 1966171168
        %v3599 = vunpack.c.0.s8 %v3598
        %v3600 = vlaneseq
        %v3601 = vshrl.u32 %v3600, 7
        %v3602 = vsub.s32 %v3599, %v3601
        %v3603 = vrot.slane %v3595, %v3602
        %v3605 = vunpack.c.l.s4 1966171168
        %v3606 = vunpack.c.0.s8 %v3605
        %v3607 = vlaneseq
        %v3608 = vshrl.u32 %v3607, 7
        %v3609 = vsub.s32 %v3606, %v3608
        %v3610 = vrot.slane %v3596, %v3609
        %v3611 = vcombine.low %v3603, %v3610
        %v3612 = vcombine.low %v3539, %v3540
        %v3613 = vcombine.low %v3541, %v3542
        %v3614 = vcombine.low %v3543, %v3544
        %v3615 = vcombine.low %v3545, %v3546
        %v3617 = vunpack.c.l.s4 1966171168
        %v3618 = vunpack.c.0.s8 %v3617
        %v3619 = vlaneseq
        %v3620 = vshrl.u32 %v3619, 7
        %v3621 = vsub.s32 %v3618, %v3620
        %v3622 = vrot.slane %v3612, %v3621
        %v3624 = vunpack.c.l.s4 1966171168
        %v3625 = vunpack.c.0.s8 %v3624
        %v3626 = vlaneseq
        %v3627 = vshrl.u32 %v3626, 7
        %v3628 = vsub.s32 %v3625, %v3627
        %v3629 = vrot.slane %v3613, %v3628
        %v3631 = vunpack.c.l.s4 1966171168
        %v3632 = vunpack.c.0.s8 %v3631
        %v3633 = vlaneseq
        %v3634 = vshrl.u32 %v3633, 7
        %v3635 = vsub.s32 %v3632, %v3634
        %v3636 = vrot.slane %v3614, %v3635
        %v3638 = vunpack.c.l.s4 1966171168
        %v3639 = vunpack.c.0.s8 %v3638
        %v3640 = vlaneseq
        %v3641 = vshrl.u32 %v3640, 7
        %v3642 = vsub.s32 %v3639, %v3641
        %v3643 = vrot.slane %v3615, %v3642
        %v3644 = vcombine.low %v3622, %v3629
        %v3645 = vcombine.low %v3636, %v3643
        %v3647 = vunpack.c.l.s4 1966171168
        %v3648 = vunpack.c.0.s8 %v3647
        %v3649 = vlaneseq
        %v3650 = vshrl.u32 %v3649, 7
        %v3651 = vsub.s32 %v3648, %v3650
        %v3652 = vrot.slane %v3644, %v3651
        %v3654 = vunpack.c.l.s4 1966171168
        %v3655 = vunpack.c.0.s8 %v3654
        %v3656 = vlaneseq
        %v3657 = vshrl.u32 %v3656, 7
        %v3658 = vsub.s32 %v3655, %v3657
        %v3659 = vrot.slane %v3645, %v3658
        %v3660 = vcombine.low %v3652, %v3659
        %3663 = vst [vmem:[%s218] sm:$0xff] %v3611
        %3664 = vst [vmem:[%s218 + $0x8] sm:$0xff] %v3660
        %s3665 = sand.u32 %s137, 1
        %s3666 = scalar_lea.sflag [#allocation3], %s3665
        %s3667 = sand.u32 %s137, 1
        %s3668 = smul.addr %s3667, 16
        %s3669 = scalar_lea.vmem [#allocation2], %s3668
        // Predicated region
        $region41: #{sgd_gmm_forward.1} parent=39 // pred_check
          %p3670 = pneg %p147
        $region42: #{sgd_gmm_forward.1} parent=39 // pred_check_branch
          %3672 = sbr.rel (%p3670) target = $region44
        $region43: #{sgd_gmm_forward.1} parent=39 // pred_region
          %s3673 = smul.u32 16, %s19
          %s3675 = ssub.s32 256, 256
          %3676 = vsyncadd %s3666, %s3675
          %s3677 = smul.addr %s3673, 16
          %s3678 = scalar_lea.hbm %s5, %s3677
          %s3680 = sshll.u32 %s3669, 4
          %s3681 = int_to_ptr.vmem [resolvable:$true] %s3680
          %3683 = dma.vmem_to_hbm [thread:$0]  %s3681, 256, %s3678, %s3666
        $region44: #{sgd_gmm_forward.1} parent=39 // pred_fallthru
          _
      $region40: #{sgd_gmm_forward.1} parent=5 // pred_fallthru
        _
      %p3684 = scmp.le.s32.totalorder 2, %s14
      // Predicated region
      $region45: #{sgd_gmm_forward.1} parent=5 // pred_check
        %p3685 = pneg %p3684
      $region46: #{sgd_gmm_forward.1} parent=5 // pred_check_branch
        %3687 = sbr.rel (%p3685) target = $region48
      $region47: #{sgd_gmm_forward.1} parent=5 // pred_region
        %s3688 = ssub.s32 %s14, 2
        // Predicated region
        $region49: #{sgd_gmm_forward.1} parent=47 // pred_check
          %p3689 = pneg %p153
        $region50: #{sgd_gmm_forward.1} parent=47 // pred_check_branch
          %3691 = sbr.rel (%p3689) target = $region52
        $region51: #{sgd_gmm_forward.1} parent=47 // pred_region
          %s3692 = sand.u32 %s138, 1
          %s3693 = scalar_lea.sflag [#allocation3], %s3692
          %s3694 = sand.u32 %s138, 1
          %s3695 = smul.addr %s3694, 16
          %s3696 = scalar_lea.vmem [#allocation2], %s3695
          %3697 = dma.done %s3693, 256
        $region52: #{sgd_gmm_forward.1} parent=47 // pred_fallthru
          _
      $region48: #{sgd_gmm_forward.1} parent=5 // pred_fallthru
        _
    $region6: #{sgd_gmm_forward.1} parent=1 // loop_footer
      %s18 = sadd.s32 1, %s14
    $region7: #{sgd_gmm_forward.1} parent=1 // loop_footer_branch
      %13 = sbr.rel target = $region3
    $region8: #{sgd_gmm_forward.1} parent=1 // loop_exit
      _
    %3698 = vsyncpa [#allocation3], 1
    %s3699 = scalar_lea.sflag [#allocation3], 1
    %3700 = vsyncpa %s3699, 1

</llo_original>
